<compile_context>
chip_gen: v7x
topology: tpu7x:2x2x1
jax: 0.10.0
libtpu: 0.0.40
codegen_flags: <defaults>
</compile_context>

<pallas_src>
import jax
import jax.numpy as jnp
from jax.experimental import pallas as pl
from jax.experimental.pallas import tpu as pltpu

GROUPS = 64  # SpatialGroupEnhance(groups=64) is hard-coded in sge_module


def sge_kernel(wb_ref, x_ref, o_ref):
    """wb_ref: (g_blk, 2) f32, columns = [weight, bias] per (batch, group) row.
       x_ref, o_ref: (g_blk, cg, hw) in the input dtype."""
    hw = x_ref.shape[-1]

    # Pass 1: adaptive avg pool over spatial positions, per channel.
    mean_c = jnp.mean(x_ref[...].astype(jnp.float32), axis=-1, keepdims=True)

    # Pass 2: per-group spatial saliency  xn = sum_c (x * avg_pool(x)).
    xn = jnp.sum(x_ref[...].astype(jnp.float32) * mean_c, axis=1)  # (g_blk, hw)

    # Normalize over spatial positions.  torch.std is unbiased (ddof=1); eps
    # is added to std (not var), exactly as in the reference module.
    mu = jnp.mean(xn, axis=-1, keepdims=True)
    t = xn - mu
    # hw == 1 guard: torch's ddof=1 std would be NaN for a single element.
    denom = jnp.float32(hw - 1 if hw > 1 else 1)
    var = jnp.sum(t * t, axis=-1, keepdims=True) / denom
    t = t / (jnp.sqrt(var) + jnp.float32(1e-5))

    # Per-(batch, group) affine + sigmoid gate, broadcast over channels.
    wb = wb_ref[...]
    gate = jax.nn.sigmoid(t * wb[:, 0:1] + wb[:, 1:2])  # (g_blk, hw) f32

    # Pass 3: gate in the input dtype (halves vld/vst + VALU traffic for bf16).
    o_ref[...] = x_ref[...] * gate[:, None, :].astype(o_ref.dtype)


def _pick_block_rows(bg, row_bytes, max_block_bytes,
                     min_block_bytes=512 * 1024, min_steps=8):
    """Pick g_blk (rows per block).  Candidates are divisors of bg that are
    multiples of 8 (keeps the (g_blk, 2) param BlockSpec tileable).
    Preference (lexicographic): fits byte budget > multi-step grid > even step
    count (v7x dual TC) > >=min_steps steps unless blocks would drop below
    min_block_bytes > largest block (amortizes ~0.35us/step grid overhead)."""
    if bg % 8 == 0:
        cands = [d for d in range(8, bg + 1, 8) if bg % d == 0]
    else:  # safety net; groups=64 makes bg a multiple of 64 in practice
        cands = [d for d in range(1, bg + 1) if bg % d == 0]

    fitting = [d for d in cands if d * row_bytes <= max_block_bytes]
    if not fitting:
        # Even the smallest block exceeds the budget; return the smallest and
        # let the caller's explicit VMEM check decide whether it is usable.
        return min(cands)

    def score(d):
        blk = d * row_bytes
        steps = bg // d
        return (
            steps >= 2,                                    # never a 1-step grid
            steps % 2 == 0,                                # even steps (v7x, 2 TCs)
            steps >= min_steps or blk <= min_block_bytes,  # >=8 steps unless blocks get tiny
            blk,                                           # then largest block wins
        )

    return max(fitting, key=score)


def sge_forward(x, weight, bias, groups=GROUPS,
                max_block_bytes=2 * 1024 * 1024):
    """x: (b, c, h, w) NCHW; weight/bias: (1, groups, 1, 1).
    max_block_bytes=2 MiB is safe everywhere; on v6e (128 MiB VMEM) it can be
    raised to 4-8 MiB when bg is large enough to keep a multi-step grid."""
    b, c, h, w = x.shape
    assert c % groups == 0, "channels must be divisible by groups"
    cg = c // groups
    hw = h * w
    bg = b * groups

    # Pure reshape, no data movement (NCHW is contiguous over (cg, h, w)).
    xg = x.reshape(bg, cg, hw)

    # Merged per-(batch, group) affine params: one tiny (bg, 2) f32 DMA/step.
    wb = jnp.stack(
        [jnp.broadcast_to(weight.reshape(1, groups).astype(jnp.float32), (b, groups)),
         jnp.broadcast_to(bias.reshape(1, groups).astype(jnp.float32), (b, groups))],
        axis=-1,
    ).reshape(bg, 2)

    row_bytes = cg * hw * x.dtype.itemsize
    g_blk = _pick_block_rows(bg, row_bytes, max_block_bytes)
    grid = (bg // g_blk,)

    # Explicit VMEM budget: double-buffered in+out blocks, double-buffered
    # (lane-padded) param block, plus ~3 block-sized f32 temporaries for the
    # in-kernel math (f32 upcast, x*mean product, gated output).
    io_block = g_blk * cg * hw * x.dtype.itemsize
    f32_block = g_blk * cg * hw * 4
    param_block = 2 * g_blk * 128 * 4
    vmem_needed = 2 * 2 * io_block + 3 * f32_block + param_block
    hard_cap = 56 * 1024 * 1024  # headroom under v7x's 64 MiB physical VMEM
    # TODO(synk): very large cg*h*w rows would need a second ("arbitrary") grid
    # axis over hw with scratch accumulators for the stats; bail loudly instead
    # of silently overflowing VMEM.
    assert vmem_needed <= hard_cap, (
        f"SGE block of {g_blk} rows needs ~{vmem_needed >> 20} MiB VMEM "
        f"(cg={cg}, hw={hw}); tile the spatial axis instead.")
    vmem_limit = min(hard_cap, max(int(1.5 * vmem_needed), 32 * 1024 * 1024))

    # TODO(synk): for cg < 8 or hw % 128 != 0 (e.g. 7x7/14x14 feature maps), a
    # lane-dense (g_blk, cg*hw) block layout would avoid sublane/lane padding
    # and masked partial stores on the output block.
    out = pl.pallas_call(
        sge_kernel,
        out_shape=jax.ShapeDtypeStruct((bg, cg, hw), x.dtype),
        grid=grid,
        in_specs=[
            pl.BlockSpec((g_blk, 2), lambda i: (i, 0)),          # [weight|bias]
            pl.BlockSpec((g_blk, cg, hw), lambda i: (i, 0, 0)),  # x
        ],
        out_specs=pl.BlockSpec((g_blk, cg, hw), lambda i: (i, 0, 0)),
        compiler_params=pltpu.CompilerParams(
            dimension_semantics=("parallel",),  # rows independent -> both TCs
            vmem_limit_bytes=vmem_limit,
        ),
    )(wb, xg)

    return out.reshape(b, c, h, w)


def sge_reference(x, weight, bias, groups=GROUPS):
    """Pure-JAX reference mirroring the PyTorch forward (for validation)."""
    b, c, h, w = x.shape
    cg = c // groups
    xg = x.reshape(b * groups, cg, h * w).astype(jnp.float32)
    avg = jnp.mean(xg, axis=-1, keepdims=True)
    xn = jnp.sum(xg * avg, axis=1)                        # (bg, hw)
    t = xn - jnp.mean(xn, axis=1, keepdims=True)
    std = jnp.std(t, axis=1, keepdims=True, ddof=1) + 1e-5
    t = t / std
    t = t.reshape(b, groups, h * w)
    t = t * weight.reshape(1, groups, 1) + bias.reshape(1, groups, 1)
    gate = jax.nn.sigmoid(t.reshape(b * groups, 1, h * w))
    out = xg * gate
    return out.reshape(b, c, h, w).astype(x.dtype)


if __name__ == "__main__":
    key = jax.random.PRNGKey(0)
    kx1, kx2, kx3, kw, kb = jax.random.split(key, 5)

    w_init = jnp.zeros((1, GROUPS, 1, 1), jnp.float32)   # module default init
    b_init = jnp.ones((1, GROUPS, 1, 1), jnp.float32)
    w_rand = jax.random.normal(kw, (1, GROUPS, 1, 1), jnp.float32)
    b_rand = jax.random.normal(kb, (1, GROUPS, 1, 1), jnp.float32)

    # (shape, dtype, weight, bias, atol, rtol, input key)
    cases = [
        # lane/sublane-dense shape (cg=8, hw=256), default init (gate = sigmoid(1))
        ((2, 512, 16, 16), jnp.float32, w_init, b_init, 1e-4, 1e-4, kx1),
        # same shape, random affine: exercises the full normalization path
        ((2, 512, 16, 16), jnp.float32, w_rand, b_rand, 1e-4, 1e-4, kx1),
        # ragged small shape (cg=4, hw=49): full-dim block path correctness
        ((2, 256, 7, 7), jnp.float32, w_rand, b_rand, 1e-4, 1e-4, kx2),
        # bf16 HBM path (half the HBM traffic); looser tolerances for bf16 gating
        ((2, 512, 16, 16), jnp.bfloat16, w_rand, b_rand, 1e-1, 5e-2, kx3),
    ]
    for shape, dtype, wt, bs, atol, rtol, kk in cases:
        x = jax.random.normal(kk, shape, jnp.float32).astype(dtype)
        y = jax.block_until_ready(sge_forward(x, wt, bs))
        y_ref = sge_reference(x, wt, bs)
        assert y.shape == shape and y.dtype == dtype
        assert jnp.allclose(y.astype(jnp.float32), y_ref.astype(jnp.float32),
                            atol=atol, rtol=rtol), f"mismatch for {shape} {dtype}"

    print("KERNEL_OK")
</pallas_src>

<mosaic_0001>
module attributes {stable_mosaic.version = 11 : i64} {
  func.func @sge_kernel(%arg0: i32, %arg1: memref<64x2xf32, #tpu.memory_space<vmem>>, %arg2: memref<64x8x256xf32, #tpu.memory_space<vmem>>, %arg3: memref<64x8x256xf32, #tpu.memory_space<vmem>>) attributes {dimension_semantics = [#tpu.dimension_semantics<parallel>], iteration_bounds = array<i64: 2>, scalar_prefetch = 0 : i64, scratch_operands = 0 : i64, tpu.core_type = #tpu.core_type<tc>, window_params = [{transform_indices = @transform_0, window_bounds = array<i64: 64, 2>}, {transform_indices = @transform_1, window_bounds = array<i64: 64, 8, 256>}, {transform_indices = @transform_2, window_bounds = array<i64: 64, 8, 256>}]} {
    %c0 = arith.constant 0 : index
    %c0_0 = arith.constant 0 : index
    %c0_1 = arith.constant 0 : index
    %0 = vector.load %arg2[%c0, %c0_0, %c0_1] : memref<64x8x256xf32, #tpu.memory_space<vmem>>, vector<64x8x256xf32>
    %cst = arith.constant dense<0.000000e+00> : vector<64x8xf32>
    %1 = vector.multi_reduction <add>, %0, %cst [2] : vector<64x8x256xf32> to vector<64x8xf32>
    %2 = vector.shape_cast %1 : vector<64x8xf32> to vector<64x8x1xf32>
    %cst_2 = arith.constant 2.560000e+02 : f32
    %3 = vector.broadcast %cst_2 : f32 to vector<64x8x1xf32>
    %4 = arith.divf %2, %3 : vector<64x8x1xf32>
    %c0_3 = arith.constant 0 : index
    %c0_4 = arith.constant 0 : index
    %c0_5 = arith.constant 0 : index
    %5 = vector.load %arg2[%c0_3, %c0_4, %c0_5] : memref<64x8x256xf32, #tpu.memory_space<vmem>>, vector<64x8x256xf32>
    %6 = vector.broadcast %4 : vector<64x8x1xf32> to vector<64x8x256xf32>
    %7 = arith.mulf %5, %6 : vector<64x8x256xf32>
    %cst_6 = arith.constant dense<0.000000e+00> : vector<64x256xf32>
    %8 = vector.multi_reduction <add>, %7, %cst_6 [1] : vector<64x8x256xf32> to vector<64x256xf32>
    %cst_7 = arith.constant dense<0.000000e+00> : vector<64xf32>
    %9 = vector.multi_reduction <add>, %8, %cst_7 [1] : vector<64x256xf32> to vector<64xf32>
    %10 = vector.shape_cast %9 : vector<64xf32> to vector<64x1xf32>
    %cst_8 = arith.constant 2.560000e+02 : f32
    %11 = vector.broadcast %cst_8 : f32 to vector<64x1xf32>
    %12 = arith.divf %10, %11 : vector<64x1xf32>
    %13 = vector.broadcast %12 : vector<64x1xf32> to vector<64x256xf32>
    %14 = arith.subf %8, %13 : vector<64x256xf32>
    %15 = arith.mulf %14, %14 : vector<64x256xf32>
    %cst_9 = arith.constant dense<0.000000e+00> : vector<64xf32>
    %16 = vector.multi_reduction <add>, %15, %cst_9 [1] : vector<64x256xf32> to vector<64xf32>
    %17 = vector.shape_cast %16 : vector<64xf32> to vector<64x1xf32>
    %cst_10 = arith.constant 2.550000e+02 : f32
    %18 = vector.broadcast %cst_10 : f32 to vector<64x1xf32>
    %19 = arith.divf %17, %18 : vector<64x1xf32>
    %20 = math.sqrt %19 : vector<64x1xf32>
    %cst_11 = arith.constant 9.99999974E-6 : f32
    %21 = vector.broadcast %cst_11 : f32 to vector<64x1xf32>
    %22 = arith.addf %20, %21 : vector<64x1xf32>
    %23 = vector.broadcast %22 : vector<64x1xf32> to vector<64x256xf32>
    %24 = arith.divf %14, %23 : vector<64x256xf32>
    %c0_12 = arith.constant 0 : index
    %c0_13 = arith.constant 0 : index
    %25 = vector.load %arg1[%c0_12, %c0_13] : memref<64x2xf32, #tpu.memory_space<vmem>>, vector<64x2xf32>
    %26 = vector.extract_strided_slice %25 {offsets = [0, 0], sizes = [64, 1], strides = [1, 1]} : vector<64x2xf32> to vector<64x1xf32>
    %27 = vector.broadcast %26 : vector<64x1xf32> to vector<64x256xf32>
    %28 = arith.mulf %24, %27 : vector<64x256xf32>
    %29 = vector.extract_strided_slice %25 {offsets = [0, 1], sizes = [64, 1], strides = [1, 1]} : vector<64x2xf32> to vector<64x1xf32>
    %30 = vector.broadcast %29 : vector<64x1xf32> to vector<64x256xf32>
    %31 = arith.addf %28, %30 : vector<64x256xf32>
    %32 = arith.negf %31 : vector<64x256xf32>
    %33 = math.exp %32 : vector<64x256xf32>
    %cst_14 = arith.constant 1.000000e+00 : f32
    %34 = vector.broadcast %cst_14 : f32 to vector<64x256xf32>
    %35 = arith.addf %34, %33 : vector<64x256xf32>
    %36 = arith.divf %34, %35 : vector<64x256xf32>
    %c0_15 = arith.constant 0 : index
    %c0_16 = arith.constant 0 : index
    %c0_17 = arith.constant 0 : index
    %37 = vector.load %arg2[%c0_15, %c0_16, %c0_17] : memref<64x8x256xf32, #tpu.memory_space<vmem>>, vector<64x8x256xf32>
    %38 = vector.shape_cast %36 : vector<64x256xf32> to vector<64x1x256xf32>
    %39 = vector.broadcast %38 : vector<64x1x256xf32> to vector<64x8x256xf32>
    %40 = arith.mulf %37, %39 : vector<64x8x256xf32>
    %c0_18 = arith.constant 0 : index
    %c0_19 = arith.constant 0 : index
    %c0_20 = arith.constant 0 : index
    %41 = vector.load %arg3[%c0_18, %c0_19, %c0_20] : memref<64x8x256xf32, #tpu.memory_space<vmem>>, vector<64x8x256xf32>
    tpu.vector_store %arg3[%c0_18, %c0_19, %c0_20], %40 {strides = array<i32>} : memref<64x8x256xf32, #tpu.memory_space<vmem>>, vector<64x8x256xf32>,
    return
  }
  func.func @transform_0(%arg0: i32) -> (i32, i32) {
    %c0_i32 = arith.constant 0 : i32
    %c0_i32_0 = arith.constant 0 : i32
    return %arg0, %c0_i32 : i32, i32
  }
  func.func @transform_1(%arg0: i32) -> (i32, i32, i32) {
    %c0_i32 = arith.constant 0 : i32
    %c0_i32_0 = arith.constant 0 : i32
    %c0_i32_1 = arith.constant 0 : i32
    return %arg0, %c0_i32, %c0_i32_0 : i32, i32, i32
  }
  func.func @transform_2(%arg0: i32) -> (i32, i32, i32) {
    %c0_i32 = arith.constant 0 : i32
    %c0_i32_0 = arith.constant 0 : i32
    %c0_i32_1 = arith.constant 0 : i32
    return %arg0, %c0_i32, %c0_i32_0 : i32, i32, i32
  }
}

</mosaic_0001>

<llo_original>
// kernel: tpu_custom_call.1
$region0: #{tpu_custom_call.1}
  #allocation0 [shape = 'u32[]', space=smem, size = 0x4, offset = 0x4, fixed_abs, tag = 'smem constant byte address 0x4 - core index']
  #allocation1 [shape = 'u32[144,128]{1,0:T(1,128)}', space=vmem, size = 0x12000, scoped, tag = 'internal scratch']
  %s0 = inlined_call_operand.vmem [shape: f32[128,2], index: 0, kind: input, shape index: {}]
  %s1 = inlined_call_operand.hbm [shape: f32[128,8,256], index: 1, kind: input, shape index: {}]
  %s2 = inlined_call_operand.hbm [shape: f32[128,8,256], index: 2, kind: output, shape index: {}]
  %s3 = sld [smem:[#allocation0]]
  $region45: #{tpu_custom_call.1} parent=0
    _
  %s5 = ssub.s32 1, %s3
  %s6 = scalar_select 0, %s5, %s3
  $region1: #{tpu_custom_call.1} parent=0
    #allocation2 [shape = 'u8[1048576]{0}', space=vmem, size = 0x100000, scoped, tag = 'input window, operand 1']
    #allocation3 [shape = 's32[2]{0}', space=sflag, size = 0x8, scoped, tag = 'scoped memory for tpu_custom_call.1']
    #allocation4 [shape = 's32[2]{0}', space=sflag, size = 0x8, scoped, tag = 'scoped memory for tpu_custom_call.1']
    #allocation5 [shape = 'u8[1048576]{0}', space=vmem, size = 0x100000, scoped, tag = 'output window, operand 0']
    %7 = vsyncpa [#allocation3], 0
    %s8 = scalar_lea.sflag [#allocation3], 1
    %9 = vsyncpa %s8, 0
    %10 = vsyncpa [#allocation4], 0
    %s11 = scalar_lea.sflag [#allocation4], 1
    %12 = vsyncpa %s11, 0
    loop: start=0, step=1, limit=4
    $region2: #{tpu_custom_call.1} parent=1 // loop_pre_header
      _
    $region3: #{tpu_custom_call.1} parent=1 // loop_header
      %s14 = sphi 0, %s18
      %p15 = scmp.ge.s32.totalorder %s14, 4
      %s24 = sphi 0, %s26
      %s27 = sphi 0, %s24
      %s28 = sphi 0, %s27
      %s44 = sphi 0, %s28
      %s50 = sphi 0, %s52
      %s53 = sphi 0, %s50
      %s54 = sphi 0, %s53
      %s70 = sphi 0, %s54
      %s76 = sphi 0, %s78
      %s79 = sphi 0, %s76
      %s80 = sphi 0, %s79
      %s96 = sphi 0, %s80
    $region4: #{tpu_custom_call.1} parent=1 // loop_header_branch
      %17 = sbr.rel (%p15) target = $region8
    $region5: #{tpu_custom_call.1} parent=1 // loop_body
      %s19 = ssub.s32 %s14, 1
      %s20 = ssub.s32 %s14, 2
      %s21 = sadd.s32 %s14, 1
      %s22 = ssub.s32 %s14, %s21
      %p23 = scmp.eq.s32.totalorder %s22, 0
      %s25 = sadd.s32 %s24, 1
      %s26 = scalar_select %p23, %s24, %s25
      %p29 = pneg %p23
      %p30 = scmp.eq.s32.totalorder %s14, 1
      %p31 = por %p29, %p30
      %p32 = scmp.ne.s32.totalorder %s24, %s27
      %p33 = scmp.eq.s32.totalorder %s14, 0
      %p34 = por %p32, %p33
      %p35 = scmp.ne.s32.totalorder %s24, %s27
      %p36 = scmp.eq.s32.totalorder %s19, 1
      %p37 = por %p35, %p36
      %p38 = scmp.ne.s32.totalorder %s27, %s28
      %p39 = scmp.eq.s32.totalorder %s19, 0
      %p40 = por %p38, %p39
      %p41 = scmp.ne.s32.totalorder %s27, %s28
      %p42 = scmp.eq.s32.totalorder %s20, 1
      %p43 = por %p41, %p42
      %p45 = scmp.ne.s32.totalorder %s28, %s44
      %p46 = scmp.eq.s32.totalorder %s20, 0
      %p47 = por %p45, %p46
      %s48 = ssub.s32 %s14, %s21
      %p49 = scmp.eq.s32.totalorder %s48, 0
      %s51 = sadd.s32 %s50, 1
      %s52 = scalar_select %p49, %s50, %s51
      %p55 = pneg %p49
      %p56 = scmp.eq.s32.totalorder %s14, 1
      %p57 = por %p55, %p56
      %p58 = scmp.ne.s32.totalorder %s50, %s53
      %p59 = scmp.eq.s32.totalorder %s14, 0
      %p60 = por %p58, %p59
      %p61 = scmp.ne.s32.totalorder %s50, %s53
      %p62 = scmp.eq.s32.totalorder %s19, 1
      %p63 = por %p61, %p62
      %p64 = scmp.ne.s32.totalorder %s53, %s54
      %p65 = scmp.eq.s32.totalorder %s19, 0
      %p66 = por %p64, %p65
      %p67 = scmp.ne.s32.totalorder %s53, %s54
      %p68 = scmp.eq.s32.totalorder %s20, 1
      %p69 = por %p67, %p68
      %p71 = scmp.ne.s32.totalorder %s54, %s70
      %p72 = scmp.eq.s32.totalorder %s20, 0
      %p73 = por %p71, %p72
      %s74 = ssub.s32 %s14, %s21
      %p75 = scmp.eq.s32.totalorder %s74, 0
      %s77 = sadd.s32 %s76, 1
      %s78 = scalar_select %p75, %s76, %s77
      %p81 = pneg %p75
      %p82 = scmp.eq.s32.totalorder %s14, 1
      %p83 = por %p81, %p82
      %p84 = scmp.ne.s32.totalorder %s76, %s79
      %p85 = scmp.eq.s32.totalorder %s14, 0
      %p86 = por %p84, %p85
      %p87 = scmp.ne.s32.totalorder %s76, %s79
      %p88 = scmp.eq.s32.totalorder %s19, 1
      %p89 = por %p87, %p88
      %p90 = scmp.ne.s32.totalorder %s79, %s80
      %p91 = scmp.eq.s32.totalorder %s19, 0
      %p92 = por %p90, %p91
      %p93 = scmp.ne.s32.totalorder %s79, %s80
      %p94 = scmp.eq.s32.totalorder %s20, 1
      %p95 = por %p93, %p94
      %p97 = scmp.ne.s32.totalorder %s80, %s96
      %p98 = scmp.eq.s32.totalorder %s20, 0
      %p99 = por %p97, %p98
      %p100 = scmp.le.s32.totalorder 1, %s14
      %p101 = scmp.lt.s32.totalorder %s14, 3
      %p102 = pnand %p100, %p101
      %p103 = pneg %p102
      // Predicated region
      $region9: #{tpu_custom_call.1} parent=5 // pred_check
        _
      $region10: #{tpu_custom_call.1} parent=5 // pred_check_branch
        %105 = sbr.rel (%p102) target = $region12
      $region11: #{tpu_custom_call.1} parent=5 // pred_region
        %s106 = ssub.s32 %s14, 1
      $region12: #{tpu_custom_call.1} parent=5 // pred_fallthru
        _
      %p107 = scmp.lt.s32.totalorder %s14, 2
      // Predicated region
      $region13: #{tpu_custom_call.1} parent=5 // pred_check
        %p108 = pneg %p107
      $region14: #{tpu_custom_call.1} parent=5 // pred_check_branch
        %110 = sbr.rel (%p108) target = $region16
      $region15: #{tpu_custom_call.1} parent=5 // pred_region
        // Predicated region
        $region17: #{tpu_custom_call.1} parent=15 // pred_check
          %p111 = pneg %p34
        $region18: #{tpu_custom_call.1} parent=15 // pred_check_branch
          %113 = sbr.rel (%p111) target = $region20
        $region19: #{tpu_custom_call.1} parent=15 // pred_region
          %s114 = smul.u32 8, %s14
          %p115 = scmp.lt.s32.totalorder %s114, 15
          %s116 = scalar_select %p115, %s114, 15
          %s117 = smul.addr %s116, 8
          %s118 = scalar_lea.vmem %s0, %s117
          %s119 = smul.u32 8, %s14
        $region20: #{tpu_custom_call.1} parent=15 // pred_fallthru
          _
        // Predicated region
        $region21: #{tpu_custom_call.1} parent=15 // pred_check
          %p120 = pneg %p60
        $region22: #{tpu_custom_call.1} parent=15 // pred_check_branch
          %122 = sbr.rel (%p120) target = $region24
        $region23: #{tpu_custom_call.1} parent=15 // pred_region
          %s123 = sand.u32 %s50, 1
          %s124 = scalar_lea.sflag [#allocation3], %s123
          %s125 = sand.u32 %s50, 1
          %s126 = smul.addr %s125, 1024
          %s127 = scalar_lea.vmem [#allocation2], %s126
          %s128 = smul.u32 64, %s14
          %s130 = ssub.s32 16384, 16384
          %131 = vsyncadd %s124, %s130
          %s132 = smul.addr %s128, 2
          %s133 = smul.addr %s132, 128
          %s134 = scalar_lea.hbm %s1, %s133
          %s135 = sshll.u32 %s127, 4
          %s136 = int_to_ptr.vmem [resolvable:$true] %s135
          %141 = dma.hbm_to_vmem [thread:$0]  %s134, 16384, %s136, %s124, 256, 256, 16
        $region24: #{tpu_custom_call.1} parent=15 // pred_fallthru
          _
      $region16: #{tpu_custom_call.1} parent=5 // pred_fallthru
        _
      %p142 = scmp.le.s32.totalorder 1, %s14
      %p143 = scmp.lt.s32.totalorder %s14, 3
      %p144 = pnand %p142, %p143
      %p145 = pneg %p144
      // Predicated region
      $region25: #{tpu_custom_call.1} parent=5 // pred_check
        _
      $region26: #{tpu_custom_call.1} parent=5 // pred_check_branch
        %147 = sbr.rel (%p144) target = $region28
      $region27: #{tpu_custom_call.1} parent=5 // pred_region
        %s148 = ssub.s32 %s14, 1
        %s149 = sand.u32 %s53, 1
        %s150 = scalar_lea.sflag [#allocation3], %s149
        %s151 = sand.u32 %s53, 1
        %s152 = smul.addr %s151, 1024
        %s153 = scalar_lea.vmem [#allocation2], %s152
        // Predicated region
        $region29: #{tpu_custom_call.1} parent=27 // pred_check
          %p154 = pneg %p66
        $region30: #{tpu_custom_call.1} parent=27 // pred_check_branch
          %156 = sbr.rel (%p154) target = $region32
        $region31: #{tpu_custom_call.1} parent=27 // pred_region
          %157 = dma.done %s150, 16384
        $region32: #{tpu_custom_call.1} parent=27 // pred_fallthru
          _
        %s158 = smul.u32 8, %s19
        %p159 = scmp.lt.s32.totalorder %s158, 15
        %s160 = scalar_select %p159, %s158, 15
        %s161 = smul.addr %s160, 8
        %s162 = scalar_lea.vmem %s0, %s161
        %p163 = pneg %p40
        %p164 = pneg %p37
        %s165 = sand.u32 %s53, 1
        %s166 = scalar_lea.sflag [#allocation3], %s165
        %s167 = sand.u32 %s53, 1
        %s168 = smul.addr %s167, 1024
        %s169 = scalar_lea.vmem [#allocation2], %s168
        %p170 = pneg %p66
        %p171 = pneg %p63
        %p172 = pneg %p92
        %p173 = pneg %p89
        %s174 = sand.u32 %s79, 1
        %s175 = scalar_lea.sflag [#allocation4], %s174
        %s176 = sand.u32 %s79, 1
        %s177 = smul.addr %s176, 1024
        %s178 = scalar_lea.vmem [#allocation5], %s177
        %s179 = smul.u32 8, %s19
        %p180 = scmp.lt.s32.totalorder %s179, 15
        %s181 = scalar_select %p180, %s179, 15
        %s182 = smul.addr %s181, 8
        %s183 = scalar_lea.vmem %s0, %s182
        %s184 = smul.u32 8, %s19
        %s185 = smul.u32 64, %s19
        %s186 = smul.u32 64, %s19
        %v187 = vld [vmem:[%s153] sm:$0xff]
        %v188 = vld [vmem:[%s153 + $0x8] sm:$0xff]
        %v189 = vld [vmem:[%s153 + $0x10] sm:$0xff]
        %v190 = vld [vmem:[%s153 + $0x18] sm:$0xff]
        %v191 = vld [vmem:[%s153 + $0x20] sm:$0xff]
        %v192 = vld [vmem:[%s153 + $0x28] sm:$0xff]
        %v193 = vld [vmem:[%s153 + $0x30] sm:$0xff]
        %v194 = vld [vmem:[%s153 + $0x38] sm:$0xff]
        %v195 = vld [vmem:[%s153 + $0x40] sm:$0xff]
        %v196 = vld [vmem:[%s153 + $0x48] sm:$0xff]
        %v197 = vld [vmem:[%s153 + $0x50] sm:$0xff]
        %v198 = vld [vmem:[%s153 + $0x58] sm:$0xff]
        %v199 = vld [vmem:[%s153 + $0x60] sm:$0xff]
        %v200 = vld [vmem:[%s153 + $0x68] sm:$0xff]
        %v201 = vld [vmem:[%s153 + $0x70] sm:$0xff]
        %v202 = vld [vmem:[%s153 + $0x78] sm:$0xff]
        %v203 = vld [vmem:[%s153 + $0x80] sm:$0xff]
        %v204 = vld [vmem:[%s153 + $0x88] sm:$0xff]
        %v205 = vld [vmem:[%s153 + $0x90] sm:$0xff]
        %v206 = vld [vmem:[%s153 + $0x98] sm:$0xff]
        %v207 = vld [vmem:[%s153 + $0xa0] sm:$0xff]
        %v208 = vld [vmem:[%s153 + $0xa8] sm:$0xff]
        %v209 = vld [vmem:[%s153 + $0xb0] sm:$0xff]
        %v210 = vld [vmem:[%s153 + $0xb8] sm:$0xff]
        %v211 = vld [vmem:[%s153 + $0xc0] sm:$0xff]
        %v212 = vld [vmem:[%s153 + $0xc8] sm:$0xff]
        %v213 = vld [vmem:[%s153 + $0xd0] sm:$0xff]
        %v214 = vld [vmem:[%s153 + $0xd8] sm:$0xff]
        %v215 = vld [vmem:[%s153 + $0xe0] sm:$0xff]
        %v216 = vld [vmem:[%s153 + $0xe8] sm:$0xff]
        %v217 = vld [vmem:[%s153 + $0xf0] sm:$0xff]
        %v218 = vld [vmem:[%s153 + $0xf8] sm:$0xff]
        %v219 = vld [vmem:[%s153 + $0x100] sm:$0xff]
        %v220 = vld [vmem:[%s153 + $0x108] sm:$0xff]
        %v221 = vld [vmem:[%s153 + $0x110] sm:$0xff]
        %v222 = vld [vmem:[%s153 + $0x118] sm:$0xff]
        %v223 = vld [vmem:[%s153 + $0x120] sm:$0xff]
        %v224 = vld [vmem:[%s153 + $0x128] sm:$0xff]
        %v225 = vld [vmem:[%s153 + $0x130] sm:$0xff]
        %v226 = vld [vmem:[%s153 + $0x138] sm:$0xff]
        %v227 = vld [vmem:[%s153 + $0x140] sm:$0xff]
        %v228 = vld [vmem:[%s153 + $0x148] sm:$0xff]
        %v229 = vld [vmem:[%s153 + $0x150] sm:$0xff]
        %v230 = vld [vmem:[%s153 + $0x158] sm:$0xff]
        %v231 = vld [vmem:[%s153 + $0x160] sm:$0xff]
        %v232 = vld [vmem:[%s153 + $0x168] sm:$0xff]
        %v233 = vld [vmem:[%s153 + $0x170] sm:$0xff]
        %v234 = vld [vmem:[%s153 + $0x178] sm:$0xff]
        %v235 = vld [vmem:[%s153 + $0x180] sm:$0xff]
        %v236 = vld [vmem:[%s153 + $0x188] sm:$0xff]
        %v237 = vld [vmem:[%s153 + $0x190] sm:$0xff]
        %v238 = vld [vmem:[%s153 + $0x198] sm:$0xff]
        %v239 = vld [vmem:[%s153 + $0x1a0] sm:$0xff]
        %v240 = vld [vmem:[%s153 + $0x1a8] sm:$0xff]
        %v241 = vld [vmem:[%s153 + $0x1b0] sm:$0xff]
        %v242 = vld [vmem:[%s153 + $0x1b8] sm:$0xff]
        %v243 = vld [vmem:[%s153 + $0x1c0] sm:$0xff]
        %v244 = vld [vmem:[%s153 + $0x1c8] sm:$0xff]
        %v245 = vld [vmem:[%s153 + $0x1d0] sm:$0xff]
        %v246 = vld [vmem:[%s153 + $0x1d8] sm:$0xff]
        %v247 = vld [vmem:[%s153 + $0x1e0] sm:$0xff]
        %v248 = vld [vmem:[%s153 + $0x1e8] sm:$0xff]
        %v249 = vld [vmem:[%s153 + $0x1f0] sm:$0xff]
        %v250 = vld [vmem:[%s153 + $0x1f8] sm:$0xff]
        %v251 = vld [vmem:[%s153 + $0x200] sm:$0xff]
        %v252 = vld [vmem:[%s153 + $0x208] sm:$0xff]
        %v253 = vld [vmem:[%s153 + $0x210] sm:$0xff]
        %v254 = vld [vmem:[%s153 + $0x218] sm:$0xff]
        %v255 = vld [vmem:[%s153 + $0x220] sm:$0xff]
        %v256 = vld [vmem:[%s153 + $0x228] sm:$0xff]
        %v257 = vld [vmem:[%s153 + $0x230] sm:$0xff]
        %v258 = vld [vmem:[%s153 + $0x238] sm:$0xff]
        %v259 = vld [vmem:[%s153 + $0x240] sm:$0xff]
        %v260 = vld [vmem:[%s153 + $0x248] sm:$0xff]
        %v261 = vld [vmem:[%s153 + $0x250] sm:$0xff]
        %v262 = vld [vmem:[%s153 + $0x258] sm:$0xff]
        %v263 = vld [vmem:[%s153 + $0x260] sm:$0xff]
        %v264 = vld [vmem:[%s153 + $0x268] sm:$0xff]
        %v265 = vld [vmem:[%s153 + $0x270] sm:$0xff]
        %v266 = vld [vmem:[%s153 + $0x278] sm:$0xff]
        %v267 = vld [vmem:[%s153 + $0x280] sm:$0xff]
        %v268 = vld [vmem:[%s153 + $0x288] sm:$0xff]
        %v269 = vld [vmem:[%s153 + $0x290] sm:$0xff]
        %v270 = vld [vmem:[%s153 + $0x298] sm:$0xff]
        %v271 = vld [vmem:[%s153 + $0x2a0] sm:$0xff]
        %v272 = vld [vmem:[%s153 + $0x2a8] sm:$0xff]
        %v273 = vld [vmem:[%s153 + $0x2b0] sm:$0xff]
        %v274 = vld [vmem:[%s153 + $0x2b8] sm:$0xff]
        %v275 = vld [vmem:[%s153 + $0x2c0] sm:$0xff]
        %v276 = vld [vmem:[%s153 + $0x2c8] sm:$0xff]
        %v277 = vld [vmem:[%s153 + $0x2d0] sm:$0xff]
        %v278 = vld [vmem:[%s153 + $0x2d8] sm:$0xff]
        %v279 = vld [vmem:[%s153 + $0x2e0] sm:$0xff]
        %v280 = vld [vmem:[%s153 + $0x2e8] sm:$0xff]
        %v281 = vld [vmem:[%s153 + $0x2f0] sm:$0xff]
        %v282 = vld [vmem:[%s153 + $0x2f8] sm:$0xff]
        %v283 = vld [vmem:[%s153 + $0x300] sm:$0xff]
        %v284 = vld [vmem:[%s153 + $0x308] sm:$0xff]
        %v285 = vld [vmem:[%s153 + $0x310] sm:$0xff]
        %v286 = vld [vmem:[%s153 + $0x318] sm:$0xff]
        %v287 = vld [vmem:[%s153 + $0x320] sm:$0xff]
        %v288 = vld [vmem:[%s153 + $0x328] sm:$0xff]
        %v289 = vld [vmem:[%s153 + $0x330] sm:$0xff]
        %v290 = vld [vmem:[%s153 + $0x338] sm:$0xff]
        %v291 = vld [vmem:[%s153 + $0x340] sm:$0xff]
        %v292 = vld [vmem:[%s153 + $0x348] sm:$0xff]
        %v293 = vld [vmem:[%s153 + $0x350] sm:$0xff]
        %v294 = vld [vmem:[%s153 + $0x358] sm:$0xff]
        %v295 = vld [vmem:[%s153 + $0x360] sm:$0xff]
        %v296 = vld [vmem:[%s153 + $0x368] sm:$0xff]
        %v297 = vld [vmem:[%s153 + $0x370] sm:$0xff]
        %v298 = vld [vmem:[%s153 + $0x378] sm:$0xff]
        %v299 = vld [vmem:[%s153 + $0x380] sm:$0xff]
        %v300 = vld [vmem:[%s153 + $0x388] sm:$0xff]
        %v301 = vld [vmem:[%s153 + $0x390] sm:$0xff]
        %v302 = vld [vmem:[%s153 + $0x398] sm:$0xff]
        %v303 = vld [vmem:[%s153 + $0x3a0] sm:$0xff]
        %v304 = vld [vmem:[%s153 + $0x3a8] sm:$0xff]
        %v305 = vld [vmem:[%s153 + $0x3b0] sm:$0xff]
        %v306 = vld [vmem:[%s153 + $0x3b8] sm:$0xff]
        %v307 = vld [vmem:[%s153 + $0x3c0] sm:$0xff]
        %v308 = vld [vmem:[%s153 + $0x3c8] sm:$0xff]
        %v309 = vld [vmem:[%s153 + $0x3d0] sm:$0xff]
        %v310 = vld [vmem:[%s153 + $0x3d8] sm:$0xff]
        %v311 = vld [vmem:[%s153 + $0x3e0] sm:$0xff]
        %v312 = vld [vmem:[%s153 + $0x3e8] sm:$0xff]
        %v313 = vld [vmem:[%s153 + $0x3f0] sm:$0xff]
        %v314 = vld [vmem:[%s153 + $0x3f8] sm:$0xff]
        %v315 = vadd.f32 %v187, %v188
        %316 = vadd.xlane.f32.xlu0 %v315
        %v317 = vpop.xlane.xlu0 %316
        %v318 = vadd.f32 %v189, %v190
        %319 = vadd.xlane.f32.xlu0 %v318
        %v320 = vpop.xlane.xlu0 %319
        %v321 = vadd.f32 %v191, %v192
        %322 = vadd.xlane.f32.xlu0 %v321
        %v323 = vpop.xlane.xlu0 %322
        %v324 = vadd.f32 %v193, %v194
        %325 = vadd.xlane.f32.xlu0 %v324
        %v326 = vpop.xlane.xlu0 %325
        %v327 = vadd.f32 %v195, %v196
        %328 = vadd.xlane.f32.xlu0 %v327
        %v329 = vpop.xlane.xlu0 %328
        %v330 = vadd.f32 %v197, %v198
        %331 = vadd.xlane.f32.xlu0 %v330
        %v332 = vpop.xlane.xlu0 %331
        %v333 = vadd.f32 %v199, %v200
        %334 = vadd.xlane.f32.xlu0 %v333
        %v335 = vpop.xlane.xlu0 %334
        %v336 = vadd.f32 %v201, %v202
        %337 = vadd.xlane.f32.xlu0 %v336
        %v338 = vpop.xlane.xlu0 %337
        %v339 = vadd.f32 %v203, %v204
        %340 = vadd.xlane.f32.xlu0 %v339
        %v341 = vpop.xlane.xlu0 %340
        %v342 = vadd.f32 %v205, %v206
        %343 = vadd.xlane.f32.xlu0 %v342
        %v344 = vpop.xlane.xlu0 %343
        %v345 = vadd.f32 %v207, %v208
        %346 = vadd.xlane.f32.xlu0 %v345
        %v347 = vpop.xlane.xlu0 %346
        %v348 = vadd.f32 %v209, %v210
        %349 = vadd.xlane.f32.xlu0 %v348
        %v350 = vpop.xlane.xlu0 %349
        %v351 = vadd.f32 %v211, %v212
        %352 = vadd.xlane.f32.xlu0 %v351
        %v353 = vpop.xlane.xlu0 %352
        %v354 = vadd.f32 %v213, %v214
        %355 = vadd.xlane.f32.xlu0 %v354
        %v356 = vpop.xlane.xlu0 %355
        %v357 = vadd.f32 %v215, %v216
        %358 = vadd.xlane.f32.xlu0 %v357
        %v359 = vpop.xlane.xlu0 %358
        %v360 = vadd.f32 %v217, %v218
        %361 = vadd.xlane.f32.xlu0 %v360
        %v362 = vpop.xlane.xlu0 %361
        %v363 = vadd.f32 %v219, %v220
        %364 = vadd.xlane.f32.xlu0 %v363
        %v365 = vpop.xlane.xlu0 %364
        %v366 = vadd.f32 %v221, %v222
        %367 = vadd.xlane.f32.xlu0 %v366
        %v368 = vpop.xlane.xlu0 %367
        %v369 = vadd.f32 %v223, %v224
        %370 = vadd.xlane.f32.xlu0 %v369
        %v371 = vpop.xlane.xlu0 %370
        %v372 = vadd.f32 %v225, %v226
        %373 = vadd.xlane.f32.xlu0 %v372
        %v374 = vpop.xlane.xlu0 %373
        %v375 = vadd.f32 %v227, %v228
        %376 = vadd.xlane.f32.xlu0 %v375
        %v377 = vpop.xlane.xlu0 %376
        %v378 = vadd.f32 %v229, %v230
        %379 = vadd.xlane.f32.xlu0 %v378
        %v380 = vpop.xlane.xlu0 %379
        %v381 = vadd.f32 %v231, %v232
        %382 = vadd.xlane.f32.xlu0 %v381
        %v383 = vpop.xlane.xlu0 %382
        %v384 = vadd.f32 %v233, %v234
        %385 = vadd.xlane.f32.xlu0 %v384
        %v386 = vpop.xlane.xlu0 %385
        %v387 = vadd.f32 %v235, %v236
        %388 = vadd.xlane.f32.xlu0 %v387
        %v389 = vpop.xlane.xlu0 %388
        %v390 = vadd.f32 %v237, %v238
        %391 = vadd.xlane.f32.xlu0 %v390
        %v392 = vpop.xlane.xlu0 %391
        %v393 = vadd.f32 %v239, %v240
        %394 = vadd.xlane.f32.xlu0 %v393
        %v395 = vpop.xlane.xlu0 %394
        %v396 = vadd.f32 %v241, %v242
        %397 = vadd.xlane.f32.xlu0 %v396
        %v398 = vpop.xlane.xlu0 %397
        %v399 = vadd.f32 %v243, %v244
        %400 = vadd.xlane.f32.xlu0 %v399
        %v401 = vpop.xlane.xlu0 %400
        %v402 = vadd.f32 %v245, %v246
        %403 = vadd.xlane.f32.xlu0 %v402
        %v404 = vpop.xlane.xlu0 %403
        %v405 = vadd.f32 %v247, %v248
        %406 = vadd.xlane.f32.xlu0 %v405
        %v407 = vpop.xlane.xlu0 %406
        %v408 = vadd.f32 %v249, %v250
        %409 = vadd.xlane.f32.xlu0 %v408
        %v410 = vpop.xlane.xlu0 %409
        %v411 = vadd.f32 %v251, %v252
        %412 = vadd.xlane.f32.xlu0 %v411
        %v413 = vpop.xlane.xlu0 %412
        %v414 = vadd.f32 %v253, %v254
        %415 = vadd.xlane.f32.xlu0 %v414
        %v416 = vpop.xlane.xlu0 %415
        %v417 = vadd.f32 %v255, %v256
        %418 = vadd.xlane.f32.xlu0 %v417
        %v419 = vpop.xlane.xlu0 %418
        %v420 = vadd.f32 %v257, %v258
        %421 = vadd.xlane.f32.xlu0 %v420
        %v422 = vpop.xlane.xlu0 %421
        %v423 = vadd.f32 %v259, %v260
        %424 = vadd.xlane.f32.xlu0 %v423
        %v425 = vpop.xlane.xlu0 %424
        %v426 = vadd.f32 %v261, %v262
        %427 = vadd.xlane.f32.xlu0 %v426
        %v428 = vpop.xlane.xlu0 %427
        %v429 = vadd.f32 %v263, %v264
        %430 = vadd.xlane.f32.xlu0 %v429
        %v431 = vpop.xlane.xlu0 %430
        %v432 = vadd.f32 %v265, %v266
        %433 = vadd.xlane.f32.xlu0 %v432
        %v434 = vpop.xlane.xlu0 %433
        %v435 = vadd.f32 %v267, %v268
        %436 = vadd.xlane.f32.xlu0 %v435
        %v437 = vpop.xlane.xlu0 %436
        %v438 = vadd.f32 %v269, %v270
        %439 = vadd.xlane.f32.xlu0 %v438
        %v440 = vpop.xlane.xlu0 %439
        %v441 = vadd.f32 %v271, %v272
        %442 = vadd.xlane.f32.xlu0 %v441
        %v443 = vpop.xlane.xlu0 %442
        %v444 = vadd.f32 %v273, %v274
        %445 = vadd.xlane.f32.xlu0 %v444
        %v446 = vpop.xlane.xlu0 %445
        %v447 = vadd.f32 %v275, %v276
        %448 = vadd.xlane.f32.xlu0 %v447
        %v449 = vpop.xlane.xlu0 %448
        %v450 = vadd.f32 %v277, %v278
        %451 = vadd.xlane.f32.xlu0 %v450
        %v452 = vpop.xlane.xlu0 %451
        %v453 = vadd.f32 %v279, %v280
        %454 = vadd.xlane.f32.xlu0 %v453
        %v455 = vpop.xlane.xlu0 %454
        %v456 = vadd.f32 %v281, %v282
        %457 = vadd.xlane.f32.xlu0 %v456
        %v458 = vpop.xlane.xlu0 %457
        %v459 = vadd.f32 %v283, %v284
        %460 = vadd.xlane.f32.xlu0 %v459
        %v461 = vpop.xlane.xlu0 %460
        %v462 = vadd.f32 %v285, %v286
        %463 = vadd.xlane.f32.xlu0 %v462
        %v464 = vpop.xlane.xlu0 %463
        %v465 = vadd.f32 %v287, %v288
        %466 = vadd.xlane.f32.xlu0 %v465
        %v467 = vpop.xlane.xlu0 %466
        %v468 = vadd.f32 %v289, %v290
        %469 = vadd.xlane.f32.xlu0 %v468
        %v470 = vpop.xlane.xlu0 %469
        %v471 = vadd.f32 %v291, %v292
        %472 = vadd.xlane.f32.xlu0 %v471
        %v473 = vpop.xlane.xlu0 %472
        %v474 = vadd.f32 %v293, %v294
        %475 = vadd.xlane.f32.xlu0 %v474
        %v476 = vpop.xlane.xlu0 %475
        %v477 = vadd.f32 %v295, %v296
        %478 = vadd.xlane.f32.xlu0 %v477
        %v479 = vpop.xlane.xlu0 %478
        %v480 = vadd.f32 %v297, %v298
        %481 = vadd.xlane.f32.xlu0 %v480
        %v482 = vpop.xlane.xlu0 %481
        %v483 = vadd.f32 %v299, %v300
        %484 = vadd.xlane.f32.xlu0 %v483
        %v485 = vpop.xlane.xlu0 %484
        %v486 = vadd.f32 %v301, %v302
        %487 = vadd.xlane.f32.xlu0 %v486
        %v488 = vpop.xlane.xlu0 %487
        %v489 = vadd.f32 %v303, %v304
        %490 = vadd.xlane.f32.xlu0 %v489
        %v491 = vpop.xlane.xlu0 %490
        %v492 = vadd.f32 %v305, %v306
        %493 = vadd.xlane.f32.xlu0 %v492
        %v494 = vpop.xlane.xlu0 %493
        %v495 = vadd.f32 %v307, %v308
        %496 = vadd.xlane.f32.xlu0 %v495
        %v497 = vpop.xlane.xlu0 %496
        %v498 = vadd.f32 %v309, %v310
        %499 = vadd.xlane.f32.xlu0 %v498
        %v500 = vpop.xlane.xlu0 %499
        %v501 = vadd.f32 %v311, %v312
        %502 = vadd.xlane.f32.xlu0 %v501
        %v503 = vpop.xlane.xlu0 %502
        %v504 = vadd.f32 %v313, %v314
        %505 = vadd.xlane.f32.xlu0 %v504
        %v506 = vpop.xlane.xlu0 %505
        %v507 = vrcp.pop 256.0
        %v508 = vmul.f32 %v317, %v507
        %v509 = vmul.f32 %v320, %v507
        %v510 = vmul.f32 %v323, %v507
        %v511 = vmul.f32 %v326, %v507
        %v512 = vmul.f32 %v329, %v507
        %v513 = vmul.f32 %v332, %v507
        %v514 = vmul.f32 %v335, %v507
        %v515 = vmul.f32 %v338, %v507
        %v516 = vmul.f32 %v341, %v507
        %v517 = vmul.f32 %v344, %v507
        %v518 = vmul.f32 %v347, %v507
        %v519 = vmul.f32 %v350, %v507
        %v520 = vmul.f32 %v353, %v507
        %v521 = vmul.f32 %v356, %v507
        %v522 = vmul.f32 %v359, %v507
        %v523 = vmul.f32 %v362, %v507
        %v524 = vmul.f32 %v365, %v507
        %v525 = vmul.f32 %v368, %v507
        %v526 = vmul.f32 %v371, %v507
        %v527 = vmul.f32 %v374, %v507
        %v528 = vmul.f32 %v377, %v507
        %v529 = vmul.f32 %v380, %v507
        %v530 = vmul.f32 %v383, %v507
        %v531 = vmul.f32 %v386, %v507
        %v532 = vmul.f32 %v389, %v507
        %v533 = vmul.f32 %v392, %v507
        %v534 = vmul.f32 %v395, %v507
        %v535 = vmul.f32 %v398, %v507
        %v536 = vmul.f32 %v401, %v507
        %v537 = vmul.f32 %v404, %v507
        %v538 = vmul.f32 %v407, %v507
        %v539 = vmul.f32 %v410, %v507
        %v540 = vmul.f32 %v413, %v507
        %v541 = vmul.f32 %v416, %v507
        %v542 = vmul.f32 %v419, %v507
        %v543 = vmul.f32 %v422, %v507
        %v544 = vmul.f32 %v425, %v507
        %v545 = vmul.f32 %v428, %v507
        %v546 = vmul.f32 %v431, %v507
        %v547 = vmul.f32 %v434, %v507
        %v548 = vmul.f32 %v437, %v507
        %v549 = vmul.f32 %v440, %v507
        %v550 = vmul.f32 %v443, %v507
        %v551 = vmul.f32 %v446, %v507
        %v552 = vmul.f32 %v449, %v507
        %v553 = vmul.f32 %v452, %v507
        %v554 = vmul.f32 %v455, %v507
        %v555 = vmul.f32 %v458, %v507
        %v556 = vmul.f32 %v461, %v507
        %v557 = vmul.f32 %v464, %v507
        %v558 = vmul.f32 %v467, %v507
        %v559 = vmul.f32 %v470, %v507
        %v560 = vmul.f32 %v473, %v507
        %v561 = vmul.f32 %v476, %v507
        %v562 = vmul.f32 %v479, %v507
        %v563 = vmul.f32 %v482, %v507
        %v564 = vmul.f32 %v485, %v507
        %v565 = vmul.f32 %v488, %v507
        %v566 = vmul.f32 %v491, %v507
        %v567 = vmul.f32 %v494, %v507
        %v568 = vmul.f32 %v497, %v507
        %v569 = vmul.f32 %v500, %v507
        %v570 = vmul.f32 %v503, %v507
        %v571 = vmul.f32 %v506, %v507
        %v572 = vmul.f32 %v187, %v508
        %v573 = vmul.f32 %v188, %v508
        %v574 = vmul.f32 %v189, %v509
        %v575 = vmul.f32 %v190, %v509
        %v576 = vmul.f32 %v191, %v510
        %v577 = vmul.f32 %v192, %v510
        %v578 = vmul.f32 %v193, %v511
        %v579 = vmul.f32 %v194, %v511
        %v580 = vmul.f32 %v195, %v512
        %v581 = vmul.f32 %v196, %v512
        %v582 = vmul.f32 %v197, %v513
        %v583 = vmul.f32 %v198, %v513
        %v584 = vmul.f32 %v199, %v514
        %v585 = vmul.f32 %v200, %v514
        %v586 = vmul.f32 %v201, %v515
        %v587 = vmul.f32 %v202, %v515
        %v588 = vmul.f32 %v203, %v516
        %v589 = vmul.f32 %v204, %v516
        %v590 = vmul.f32 %v205, %v517
        %v591 = vmul.f32 %v206, %v517
        %v592 = vmul.f32 %v207, %v518
        %v593 = vmul.f32 %v208, %v518
        %v594 = vmul.f32 %v209, %v519
        %v595 = vmul.f32 %v210, %v519
        %v596 = vmul.f32 %v211, %v520
        %v597 = vmul.f32 %v212, %v520
        %v598 = vmul.f32 %v213, %v521
        %v599 = vmul.f32 %v214, %v521
        %v600 = vmul.f32 %v215, %v522
        %v601 = vmul.f32 %v216, %v522
        %v602 = vmul.f32 %v217, %v523
        %v603 = vmul.f32 %v218, %v523
        %v604 = vmul.f32 %v219, %v524
        %v605 = vmul.f32 %v220, %v524
        %v606 = vmul.f32 %v221, %v525
        %v607 = vmul.f32 %v222, %v525
        %v608 = vmul.f32 %v223, %v526
        %v609 = vmul.f32 %v224, %v526
        %v610 = vmul.f32 %v225, %v527
        %v611 = vmul.f32 %v226, %v527
        %v612 = vmul.f32 %v227, %v528
        %v613 = vmul.f32 %v228, %v528
        %v614 = vmul.f32 %v229, %v529
        %v615 = vmul.f32 %v230, %v529
        %v616 = vmul.f32 %v231, %v530
        %v617 = vmul.f32 %v232, %v530
        %v618 = vmul.f32 %v233, %v531
        %v619 = vmul.f32 %v234, %v531
        %v620 = vmul.f32 %v235, %v532
        %v621 = vmul.f32 %v236, %v532
        %v622 = vmul.f32 %v237, %v533
        %v623 = vmul.f32 %v238, %v533
        %v624 = vmul.f32 %v239, %v534
        %v625 = vmul.f32 %v240, %v534
        %v626 = vmul.f32 %v241, %v535
        %v627 = vmul.f32 %v242, %v535
        %v628 = vmul.f32 %v243, %v536
        %v629 = vmul.f32 %v244, %v536
        %v630 = vmul.f32 %v245, %v537
        %v631 = vmul.f32 %v246, %v537
        %v632 = vmul.f32 %v247, %v538
        %v633 = vmul.f32 %v248, %v538
        %v634 = vmul.f32 %v249, %v539
        %v635 = vmul.f32 %v250, %v539
        %v636 = vmul.f32 %v251, %v540
        %v637 = vmul.f32 %v252, %v540
        %v638 = vmul.f32 %v253, %v541
        %v639 = vmul.f32 %v254, %v541
        %v640 = vmul.f32 %v255, %v542
        %v641 = vmul.f32 %v256, %v542
        %v642 = vmul.f32 %v257, %v543
        %v643 = vmul.f32 %v258, %v543
        %v644 = vmul.f32 %v259, %v544
        %v645 = vmul.f32 %v260, %v544
        %v646 = vmul.f32 %v261, %v545
        %v647 = vmul.f32 %v262, %v545
        %v648 = vmul.f32 %v263, %v546
        %v649 = vmul.f32 %v264, %v546
        %v650 = vmul.f32 %v265, %v547
        %v651 = vmul.f32 %v266, %v547
        %v652 = vmul.f32 %v267, %v548
        %v653 = vmul.f32 %v268, %v548
        %v654 = vmul.f32 %v269, %v549
        %v655 = vmul.f32 %v270, %v549
        %v656 = vmul.f32 %v271, %v550
        %v657 = vmul.f32 %v272, %v550
        %v658 = vmul.f32 %v273, %v551
        %v659 = vmul.f32 %v274, %v551
        %v660 = vmul.f32 %v275, %v552
        %v661 = vmul.f32 %v276, %v552
        %v662 = vmul.f32 %v277, %v553
        %v663 = vmul.f32 %v278, %v553
        %v664 = vmul.f32 %v279, %v554
        %v665 = vmul.f32 %v280, %v554
        %v666 = vmul.f32 %v281, %v555
        %v667 = vmul.f32 %v282, %v555
        %v668 = vmul.f32 %v283, %v556
        %v669 = vmul.f32 %v284, %v556
        %v670 = vmul.f32 %v285, %v557
        %v671 = vmul.f32 %v286, %v557
        %v672 = vmul.f32 %v287, %v558
        %v673 = vmul.f32 %v288, %v558
        %v674 = vmul.f32 %v289, %v559
        %v675 = vmul.f32 %v290, %v559
        %v676 = vmul.f32 %v291, %v560
        %v677 = vmul.f32 %v292, %v560
        %v678 = vmul.f32 %v293, %v561
        %v679 = vmul.f32 %v294, %v561
        %v680 = vmul.f32 %v295, %v562
        %v681 = vmul.f32 %v296, %v562
        %v682 = vmul.f32 %v297, %v563
        %v683 = vmul.f32 %v298, %v563
        %v684 = vmul.f32 %v299, %v564
        %v685 = vmul.f32 %v300, %v564
        %v686 = vmul.f32 %v301, %v565
        %v687 = vmul.f32 %v302, %v565
        %v688 = vmul.f32 %v303, %v566
        %v689 = vmul.f32 %v304, %v566
        %v690 = vmul.f32 %v305, %v567
        %v691 = vmul.f32 %v306, %v567
        %v692 = vmul.f32 %v307, %v568
        %v693 = vmul.f32 %v308, %v568
        %v694 = vmul.f32 %v309, %v569
        %v695 = vmul.f32 %v310, %v569
        %v696 = vmul.f32 %v311, %v570
        %v697 = vmul.f32 %v312, %v570
        %v698 = vmul.f32 %v313, %v571
        %v699 = vmul.f32 %v314, %v571
        %v700 = vrot.slane %v572, 4
        %v701 = vadd.f32 %v572, %v700
        %v702 = vrot.slane %v701, 2
        %v703 = vadd.f32 %v701, %v702
        %v704 = vrot.slane %v703, 1
        %v705 = vadd.f32 %v703, %v704
        %v706 = vrot.slane %v573, 4
        %v707 = vadd.f32 %v573, %v706
        %v708 = vrot.slane %v707, 2
        %v709 = vadd.f32 %v707, %v708
        %v710 = vrot.slane %v709, 1
        %v711 = vadd.f32 %v709, %v710
        %v712 = vrot.slane %v574, 4
        %v713 = vadd.f32 %v574, %v712
        %v714 = vrot.slane %v713, 2
        %v715 = vadd.f32 %v713, %v714
        %v716 = vrot.slane %v715, 1
        %v717 = vadd.f32 %v715, %v716
        %v718 = vrot.slane %v575, 4
        %v719 = vadd.f32 %v575, %v718
        %v720 = vrot.slane %v719, 2
        %v721 = vadd.f32 %v719, %v720
        %v722 = vrot.slane %v721, 1
        %v723 = vadd.f32 %v721, %v722
        %v724 = vrot.slane %v576, 4
        %v725 = vadd.f32 %v576, %v724
        %v726 = vrot.slane %v725, 2
        %v727 = vadd.f32 %v725, %v726
        %v728 = vrot.slane %v727, 1
        %v729 = vadd.f32 %v727, %v728
        %v730 = vrot.slane %v577, 4
        %v731 = vadd.f32 %v577, %v730
        %v732 = vrot.slane %v731, 2
        %v733 = vadd.f32 %v731, %v732
        %v734 = vrot.slane %v733, 1
        %v735 = vadd.f32 %v733, %v734
        %v736 = vrot.slane %v578, 4
        %v737 = vadd.f32 %v578, %v736
        %v738 = vrot.slane %v737, 2
        %v739 = vadd.f32 %v737, %v738
        %v740 = vrot.slane %v739, 1
        %v741 = vadd.f32 %v739, %v740
        %v742 = vrot.slane %v579, 4
        %v743 = vadd.f32 %v579, %v742
        %v744 = vrot.slane %v743, 2
        %v745 = vadd.f32 %v743, %v744
        %v746 = vrot.slane %v745, 1
        %v747 = vadd.f32 %v745, %v746
        %v748 = vrot.slane %v580, 4
        %v749 = vadd.f32 %v580, %v748
        %v750 = vrot.slane %v749, 2
        %v751 = vadd.f32 %v749, %v750
        %v752 = vrot.slane %v751, 1
        %v753 = vadd.f32 %v751, %v752
        %v754 = vrot.slane %v581, 4
        %v755 = vadd.f32 %v581, %v754
        %v756 = vrot.slane %v755, 2
        %v757 = vadd.f32 %v755, %v756
        %v758 = vrot.slane %v757, 1
        %v759 = vadd.f32 %v757, %v758
        %v760 = vrot.slane %v582, 4
        %v761 = vadd.f32 %v582, %v760
        %v762 = vrot.slane %v761, 2
        %v763 = vadd.f32 %v761, %v762
        %v764 = vrot.slane %v763, 1
        %v765 = vadd.f32 %v763, %v764
        %v766 = vrot.slane %v583, 4
        %v767 = vadd.f32 %v583, %v766
        %v768 = vrot.slane %v767, 2
        %v769 = vadd.f32 %v767, %v768
        %v770 = vrot.slane %v769, 1
        %v771 = vadd.f32 %v769, %v770
        %v772 = vrot.slane %v584, 4
        %v773 = vadd.f32 %v584, %v772
        %v774 = vrot.slane %v773, 2
        %v775 = vadd.f32 %v773, %v774
        %v776 = vrot.slane %v775, 1
        %v777 = vadd.f32 %v775, %v776
        %v778 = vrot.slane %v585, 4
        %v779 = vadd.f32 %v585, %v778
        %v780 = vrot.slane %v779, 2
        %v781 = vadd.f32 %v779, %v780
        %v782 = vrot.slane %v781, 1
        %v783 = vadd.f32 %v781, %v782
        %v784 = vrot.slane %v586, 4
        %v785 = vadd.f32 %v586, %v784
        %v786 = vrot.slane %v785, 2
        %v787 = vadd.f32 %v785, %v786
        %v788 = vrot.slane %v787, 1
        %v789 = vadd.f32 %v787, %v788
        %v790 = vrot.slane %v587, 4
        %v791 = vadd.f32 %v587, %v790
        %v792 = vrot.slane %v791, 2
        %v793 = vadd.f32 %v791, %v792
        %v794 = vrot.slane %v793, 1
        %v795 = vadd.f32 %v793, %v794
        %v796 = vrot.slane %v588, 4
        %v797 = vadd.f32 %v588, %v796
        %v798 = vrot.slane %v797, 2
        %v799 = vadd.f32 %v797, %v798
        %v800 = vrot.slane %v799, 1
        %v801 = vadd.f32 %v799, %v800
        %v802 = vrot.slane %v589, 4
        %v803 = vadd.f32 %v589, %v802
        %v804 = vrot.slane %v803, 2
        %v805 = vadd.f32 %v803, %v804
        %v806 = vrot.slane %v805, 1
        %v807 = vadd.f32 %v805, %v806
        %v808 = vrot.slane %v590, 4
        %v809 = vadd.f32 %v590, %v808
        %v810 = vrot.slane %v809, 2
        %v811 = vadd.f32 %v809, %v810
        %v812 = vrot.slane %v811, 1
        %v813 = vadd.f32 %v811, %v812
        %v814 = vrot.slane %v591, 4
        %v815 = vadd.f32 %v591, %v814
        %v816 = vrot.slane %v815, 2
        %v817 = vadd.f32 %v815, %v816
        %v818 = vrot.slane %v817, 1
        %v819 = vadd.f32 %v817, %v818
        %v820 = vrot.slane %v592, 4
        %v821 = vadd.f32 %v592, %v820
        %v822 = vrot.slane %v821, 2
        %v823 = vadd.f32 %v821, %v822
        %v824 = vrot.slane %v823, 1
        %v825 = vadd.f32 %v823, %v824
        %v826 = vrot.slane %v593, 4
        %v827 = vadd.f32 %v593, %v826
        %v828 = vrot.slane %v827, 2
        %v829 = vadd.f32 %v827, %v828
        %v830 = vrot.slane %v829, 1
        %v831 = vadd.f32 %v829, %v830
        %v832 = vrot.slane %v594, 4
        %v833 = vadd.f32 %v594, %v832
        %v834 = vrot.slane %v833, 2
        %v835 = vadd.f32 %v833, %v834
        %v836 = vrot.slane %v835, 1
        %v837 = vadd.f32 %v835, %v836
        %v838 = vrot.slane %v595, 4
        %v839 = vadd.f32 %v595, %v838
        %v840 = vrot.slane %v839, 2
        %v841 = vadd.f32 %v839, %v840
        %v842 = vrot.slane %v841, 1
        %v843 = vadd.f32 %v841, %v842
        %v844 = vrot.slane %v596, 4
        %v845 = vadd.f32 %v596, %v844
        %v846 = vrot.slane %v845, 2
        %v847 = vadd.f32 %v845, %v846
        %v848 = vrot.slane %v847, 1
        %v849 = vadd.f32 %v847, %v848
        %v850 = vrot.slane %v597, 4
        %v851 = vadd.f32 %v597, %v850
        %v852 = vrot.slane %v851, 2
        %v853 = vadd.f32 %v851, %v852
        %v854 = vrot.slane %v853, 1
        %v855 = vadd.f32 %v853, %v854
        %v856 = vrot.slane %v598, 4
        %v857 = vadd.f32 %v598, %v856
        %v858 = vrot.slane %v857, 2
        %v859 = vadd.f32 %v857, %v858
        %v860 = vrot.slane %v859, 1
        %v861 = vadd.f32 %v859, %v860
        %v862 = vrot.slane %v599, 4
        %v863 = vadd.f32 %v599, %v862
        %v864 = vrot.slane %v863, 2
        %v865 = vadd.f32 %v863, %v864
        %v866 = vrot.slane %v865, 1
        %v867 = vadd.f32 %v865, %v866
        %v868 = vrot.slane %v600, 4
        %v869 = vadd.f32 %v600, %v868
        %v870 = vrot.slane %v869, 2
        %v871 = vadd.f32 %v869, %v870
        %v872 = vrot.slane %v871, 1
        %v873 = vadd.f32 %v871, %v872
        %v874 = vrot.slane %v601, 4
        %v875 = vadd.f32 %v601, %v874
        %v876 = vrot.slane %v875, 2
        %v877 = vadd.f32 %v875, %v876
        %v878 = vrot.slane %v877, 1
        %v879 = vadd.f32 %v877, %v878
        %v880 = vrot.slane %v602, 4
        %v881 = vadd.f32 %v602, %v880
        %v882 = vrot.slane %v881, 2
        %v883 = vadd.f32 %v881, %v882
        %v884 = vrot.slane %v883, 1
        %v885 = vadd.f32 %v883, %v884
        %v886 = vrot.slane %v603, 4
        %v887 = vadd.f32 %v603, %v886
        %v888 = vrot.slane %v887, 2
        %v889 = vadd.f32 %v887, %v888
        %v890 = vrot.slane %v889, 1
        %v891 = vadd.f32 %v889, %v890
        %v892 = vrot.slane %v604, 4
        %v893 = vadd.f32 %v604, %v892
        %v894 = vrot.slane %v893, 2
        %v895 = vadd.f32 %v893, %v894
        %v896 = vrot.slane %v895, 1
        %v897 = vadd.f32 %v895, %v896
        %v898 = vrot.slane %v605, 4
        %v899 = vadd.f32 %v605, %v898
        %v900 = vrot.slane %v899, 2
        %v901 = vadd.f32 %v899, %v900
        %v902 = vrot.slane %v901, 1
        %v903 = vadd.f32 %v901, %v902
        %v904 = vrot.slane %v606, 4
        %v905 = vadd.f32 %v606, %v904
        %v906 = vrot.slane %v905, 2
        %v907 = vadd.f32 %v905, %v906
        %v908 = vrot.slane %v907, 1
        %v909 = vadd.f32 %v907, %v908
        %v910 = vrot.slane %v607, 4
        %v911 = vadd.f32 %v607, %v910
        %v912 = vrot.slane %v911, 2
        %v913 = vadd.f32 %v911, %v912
        %v914 = vrot.slane %v913, 1
        %v915 = vadd.f32 %v913, %v914
        %v916 = vrot.slane %v608, 4
        %v917 = vadd.f32 %v608, %v916
        %v918 = vrot.slane %v917, 2
        %v919 = vadd.f32 %v917, %v918
        %v920 = vrot.slane %v919, 1
        %v921 = vadd.f32 %v919, %v920
        %v922 = vrot.slane %v609, 4
        %v923 = vadd.f32 %v609, %v922
        %v924 = vrot.slane %v923, 2
        %v925 = vadd.f32 %v923, %v924
        %v926 = vrot.slane %v925, 1
        %v927 = vadd.f32 %v925, %v926
        %v928 = vrot.slane %v610, 4
        %v929 = vadd.f32 %v610, %v928
        %v930 = vrot.slane %v929, 2
        %v931 = vadd.f32 %v929, %v930
        %v932 = vrot.slane %v931, 1
        %v933 = vadd.f32 %v931, %v932
        %v934 = vrot.slane %v611, 4
        %v935 = vadd.f32 %v611, %v934
        %v936 = vrot.slane %v935, 2
        %v937 = vadd.f32 %v935, %v936
        %v938 = vrot.slane %v937, 1
        %v939 = vadd.f32 %v937, %v938
        %v940 = vrot.slane %v612, 4
        %v941 = vadd.f32 %v612, %v940
        %v942 = vrot.slane %v941, 2
        %v943 = vadd.f32 %v941, %v942
        %v944 = vrot.slane %v943, 1
        %v945 = vadd.f32 %v943, %v944
        %v946 = vrot.slane %v613, 4
        %v947 = vadd.f32 %v613, %v946
        %v948 = vrot.slane %v947, 2
        %v949 = vadd.f32 %v947, %v948
        %v950 = vrot.slane %v949, 1
        %v951 = vadd.f32 %v949, %v950
        %v952 = vrot.slane %v614, 4
        %v953 = vadd.f32 %v614, %v952
        %v954 = vrot.slane %v953, 2
        %v955 = vadd.f32 %v953, %v954
        %v956 = vrot.slane %v955, 1
        %v957 = vadd.f32 %v955, %v956
        %v958 = vrot.slane %v615, 4
        %v959 = vadd.f32 %v615, %v958
        %v960 = vrot.slane %v959, 2
        %v961 = vadd.f32 %v959, %v960
        %v962 = vrot.slane %v961, 1
        %v963 = vadd.f32 %v961, %v962
        %v964 = vrot.slane %v616, 4
        %v965 = vadd.f32 %v616, %v964
        %v966 = vrot.slane %v965, 2
        %v967 = vadd.f32 %v965, %v966
        %v968 = vrot.slane %v967, 1
        %v969 = vadd.f32 %v967, %v968
        %v970 = vrot.slane %v617, 4
        %v971 = vadd.f32 %v617, %v970
        %v972 = vrot.slane %v971, 2
        %v973 = vadd.f32 %v971, %v972
        %v974 = vrot.slane %v973, 1
        %v975 = vadd.f32 %v973, %v974
        %v976 = vrot.slane %v618, 4
        %v977 = vadd.f32 %v618, %v976
        %v978 = vrot.slane %v977, 2
        %v979 = vadd.f32 %v977, %v978
        %v980 = vrot.slane %v979, 1
        %v981 = vadd.f32 %v979, %v980
        %v982 = vrot.slane %v619, 4
        %v983 = vadd.f32 %v619, %v982
        %v984 = vrot.slane %v983, 2
        %v985 = vadd.f32 %v983, %v984
        %v986 = vrot.slane %v985, 1
        %v987 = vadd.f32 %v985, %v986
        %v988 = vrot.slane %v620, 4
        %v989 = vadd.f32 %v620, %v988
        %v990 = vrot.slane %v989, 2
        %v991 = vadd.f32 %v989, %v990
        %v992 = vrot.slane %v991, 1
        %v993 = vadd.f32 %v991, %v992
        %v994 = vrot.slane %v621, 4
        %v995 = vadd.f32 %v621, %v994
        %v996 = vrot.slane %v995, 2
        %v997 = vadd.f32 %v995, %v996
        %v998 = vrot.slane %v997, 1
        %v999 = vadd.f32 %v997, %v998
        %v1000 = vrot.slane %v622, 4
        %v1001 = vadd.f32 %v622, %v1000
        %v1002 = vrot.slane %v1001, 2
        %v1003 = vadd.f32 %v1001, %v1002
        %v1004 = vrot.slane %v1003, 1
        %v1005 = vadd.f32 %v1003, %v1004
        %v1006 = vrot.slane %v623, 4
        %v1007 = vadd.f32 %v623, %v1006
        %v1008 = vrot.slane %v1007, 2
        %v1009 = vadd.f32 %v1007, %v1008
        %v1010 = vrot.slane %v1009, 1
        %v1011 = vadd.f32 %v1009, %v1010
        %v1012 = vrot.slane %v624, 4
        %v1013 = vadd.f32 %v624, %v1012
        %v1014 = vrot.slane %v1013, 2
        %v1015 = vadd.f32 %v1013, %v1014
        %v1016 = vrot.slane %v1015, 1
        %v1017 = vadd.f32 %v1015, %v1016
        %v1018 = vrot.slane %v625, 4
        %v1019 = vadd.f32 %v625, %v1018
        %v1020 = vrot.slane %v1019, 2
        %v1021 = vadd.f32 %v1019, %v1020
        %v1022 = vrot.slane %v1021, 1
        %v1023 = vadd.f32 %v1021, %v1022
        %v1024 = vrot.slane %v626, 4
        %v1025 = vadd.f32 %v626, %v1024
        %v1026 = vrot.slane %v1025, 2
        %v1027 = vadd.f32 %v1025, %v1026
        %v1028 = vrot.slane %v1027, 1
        %v1029 = vadd.f32 %v1027, %v1028
        %v1030 = vrot.slane %v627, 4
        %v1031 = vadd.f32 %v627, %v1030
        %v1032 = vrot.slane %v1031, 2
        %v1033 = vadd.f32 %v1031, %v1032
        %v1034 = vrot.slane %v1033, 1
        %v1035 = vadd.f32 %v1033, %v1034
        %v1036 = vrot.slane %v628, 4
        %v1037 = vadd.f32 %v628, %v1036
        %v1038 = vrot.slane %v1037, 2
        %v1039 = vadd.f32 %v1037, %v1038
        %v1040 = vrot.slane %v1039, 1
        %v1041 = vadd.f32 %v1039, %v1040
        %v1042 = vrot.slane %v629, 4
        %v1043 = vadd.f32 %v629, %v1042
        %v1044 = vrot.slane %v1043, 2
        %v1045 = vadd.f32 %v1043, %v1044
        %v1046 = vrot.slane %v1045, 1
        %v1047 = vadd.f32 %v1045, %v1046
        %v1048 = vrot.slane %v630, 4
        %v1049 = vadd.f32 %v630, %v1048
        %v1050 = vrot.slane %v1049, 2
        %v1051 = vadd.f32 %v1049, %v1050
        %v1052 = vrot.slane %v1051, 1
        %v1053 = vadd.f32 %v1051, %v1052
        %v1054 = vrot.slane %v631, 4
        %v1055 = vadd.f32 %v631, %v1054
        %v1056 = vrot.slane %v1055, 2
        %v1057 = vadd.f32 %v1055, %v1056
        %v1058 = vrot.slane %v1057, 1
        %v1059 = vadd.f32 %v1057, %v1058
        %v1060 = vrot.slane %v632, 4
        %v1061 = vadd.f32 %v632, %v1060
        %v1062 = vrot.slane %v1061, 2
        %v1063 = vadd.f32 %v1061, %v1062
        %v1064 = vrot.slane %v1063, 1
        %v1065 = vadd.f32 %v1063, %v1064
        %v1066 = vrot.slane %v633, 4
        %v1067 = vadd.f32 %v633, %v1066
        %v1068 = vrot.slane %v1067, 2
        %v1069 = vadd.f32 %v1067, %v1068
        %v1070 = vrot.slane %v1069, 1
        %v1071 = vadd.f32 %v1069, %v1070
        %v1072 = vrot.slane %v634, 4
        %v1073 = vadd.f32 %v634, %v1072
        %v1074 = vrot.slane %v1073, 2
        %v1075 = vadd.f32 %v1073, %v1074
        %v1076 = vrot.slane %v1075, 1
        %v1077 = vadd.f32 %v1075, %v1076
        %v1078 = vrot.slane %v635, 4
        %v1079 = vadd.f32 %v635, %v1078
        %v1080 = vrot.slane %v1079, 2
        %v1081 = vadd.f32 %v1079, %v1080
        %v1082 = vrot.slane %v1081, 1
        %v1083 = vadd.f32 %v1081, %v1082
        %v1084 = vrot.slane %v636, 4
        %v1085 = vadd.f32 %v636, %v1084
        %v1086 = vrot.slane %v1085, 2
        %v1087 = vadd.f32 %v1085, %v1086
        %v1088 = vrot.slane %v1087, 1
        %v1089 = vadd.f32 %v1087, %v1088
        %v1090 = vrot.slane %v637, 4
        %v1091 = vadd.f32 %v637, %v1090
        %v1092 = vrot.slane %v1091, 2
        %v1093 = vadd.f32 %v1091, %v1092
        %v1094 = vrot.slane %v1093, 1
        %v1095 = vadd.f32 %v1093, %v1094
        %v1096 = vrot.slane %v638, 4
        %v1097 = vadd.f32 %v638, %v1096
        %v1098 = vrot.slane %v1097, 2
        %v1099 = vadd.f32 %v1097, %v1098
        %v1100 = vrot.slane %v1099, 1
        %v1101 = vadd.f32 %v1099, %v1100
        %v1102 = vrot.slane %v639, 4
        %v1103 = vadd.f32 %v639, %v1102
        %v1104 = vrot.slane %v1103, 2
        %v1105 = vadd.f32 %v1103, %v1104
        %v1106 = vrot.slane %v1105, 1
        %v1107 = vadd.f32 %v1105, %v1106
        %v1108 = vrot.slane %v640, 4
        %v1109 = vadd.f32 %v640, %v1108
        %v1110 = vrot.slane %v1109, 2
        %v1111 = vadd.f32 %v1109, %v1110
        %v1112 = vrot.slane %v1111, 1
        %v1113 = vadd.f32 %v1111, %v1112
        %v1114 = vrot.slane %v641, 4
        %v1115 = vadd.f32 %v641, %v1114
        %v1116 = vrot.slane %v1115, 2
        %v1117 = vadd.f32 %v1115, %v1116
        %v1118 = vrot.slane %v1117, 1
        %v1119 = vadd.f32 %v1117, %v1118
        %v1120 = vrot.slane %v642, 4
        %v1121 = vadd.f32 %v642, %v1120
        %v1122 = vrot.slane %v1121, 2
        %v1123 = vadd.f32 %v1121, %v1122
        %v1124 = vrot.slane %v1123, 1
        %v1125 = vadd.f32 %v1123, %v1124
        %v1126 = vrot.slane %v643, 4
        %v1127 = vadd.f32 %v643, %v1126
        %v1128 = vrot.slane %v1127, 2
        %v1129 = vadd.f32 %v1127, %v1128
        %v1130 = vrot.slane %v1129, 1
        %v1131 = vadd.f32 %v1129, %v1130
        %v1132 = vrot.slane %v644, 4
        %v1133 = vadd.f32 %v644, %v1132
        %v1134 = vrot.slane %v1133, 2
        %v1135 = vadd.f32 %v1133, %v1134
        %v1136 = vrot.slane %v1135, 1
        %v1137 = vadd.f32 %v1135, %v1136
        %v1138 = vrot.slane %v645, 4
        %v1139 = vadd.f32 %v645, %v1138
        %v1140 = vrot.slane %v1139, 2
        %v1141 = vadd.f32 %v1139, %v1140
        %v1142 = vrot.slane %v1141, 1
        %v1143 = vadd.f32 %v1141, %v1142
        %v1144 = vrot.slane %v646, 4
        %v1145 = vadd.f32 %v646, %v1144
        %v1146 = vrot.slane %v1145, 2
        %v1147 = vadd.f32 %v1145, %v1146
        %v1148 = vrot.slane %v1147, 1
        %v1149 = vadd.f32 %v1147, %v1148
        %v1150 = vrot.slane %v647, 4
        %v1151 = vadd.f32 %v647, %v1150
        %v1152 = vrot.slane %v1151, 2
        %v1153 = vadd.f32 %v1151, %v1152
        %v1154 = vrot.slane %v1153, 1
        %v1155 = vadd.f32 %v1153, %v1154
        %v1156 = vrot.slane %v648, 4
        %v1157 = vadd.f32 %v648, %v1156
        %v1158 = vrot.slane %v1157, 2
        %v1159 = vadd.f32 %v1157, %v1158
        %v1160 = vrot.slane %v1159, 1
        %v1161 = vadd.f32 %v1159, %v1160
        %v1162 = vrot.slane %v649, 4
        %v1163 = vadd.f32 %v649, %v1162
        %v1164 = vrot.slane %v1163, 2
        %v1165 = vadd.f32 %v1163, %v1164
        %v1166 = vrot.slane %v1165, 1
        %v1167 = vadd.f32 %v1165, %v1166
        %v1168 = vrot.slane %v650, 4
        %v1169 = vadd.f32 %v650, %v1168
        %v1170 = vrot.slane %v1169, 2
        %v1171 = vadd.f32 %v1169, %v1170
        %v1172 = vrot.slane %v1171, 1
        %v1173 = vadd.f32 %v1171, %v1172
        %v1174 = vrot.slane %v651, 4
        %v1175 = vadd.f32 %v651, %v1174
        %v1176 = vrot.slane %v1175, 2
        %v1177 = vadd.f32 %v1175, %v1176
        %v1178 = vrot.slane %v1177, 1
        %v1179 = vadd.f32 %v1177, %v1178
        %v1180 = vrot.slane %v652, 4
        %v1181 = vadd.f32 %v652, %v1180
        %v1182 = vrot.slane %v1181, 2
        %v1183 = vadd.f32 %v1181, %v1182
        %v1184 = vrot.slane %v1183, 1
        %v1185 = vadd.f32 %v1183, %v1184
        %v1186 = vrot.slane %v653, 4
        %v1187 = vadd.f32 %v653, %v1186
        %v1188 = vrot.slane %v1187, 2
        %v1189 = vadd.f32 %v1187, %v1188
        %v1190 = vrot.slane %v1189, 1
        %v1191 = vadd.f32 %v1189, %v1190
        %v1192 = vrot.slane %v654, 4
        %v1193 = vadd.f32 %v654, %v1192
        %v1194 = vrot.slane %v1193, 2
        %v1195 = vadd.f32 %v1193, %v1194
        %v1196 = vrot.slane %v1195, 1
        %v1197 = vadd.f32 %v1195, %v1196
        %v1198 = vrot.slane %v655, 4
        %v1199 = vadd.f32 %v655, %v1198
        %v1200 = vrot.slane %v1199, 2
        %v1201 = vadd.f32 %v1199, %v1200
        %v1202 = vrot.slane %v1201, 1
        %v1203 = vadd.f32 %v1201, %v1202
        %v1204 = vrot.slane %v656, 4
        %v1205 = vadd.f32 %v656, %v1204
        %v1206 = vrot.slane %v1205, 2
        %v1207 = vadd.f32 %v1205, %v1206
        %v1208 = vrot.slane %v1207, 1
        %v1209 = vadd.f32 %v1207, %v1208
        %v1210 = vrot.slane %v657, 4
        %v1211 = vadd.f32 %v657, %v1210
        %v1212 = vrot.slane %v1211, 2
        %v1213 = vadd.f32 %v1211, %v1212
        %v1214 = vrot.slane %v1213, 1
        %v1215 = vadd.f32 %v1213, %v1214
        %v1216 = vrot.slane %v658, 4
        %v1217 = vadd.f32 %v658, %v1216
        %v1218 = vrot.slane %v1217, 2
        %v1219 = vadd.f32 %v1217, %v1218
        %v1220 = vrot.slane %v1219, 1
        %v1221 = vadd.f32 %v1219, %v1220
        %v1222 = vrot.slane %v659, 4
        %v1223 = vadd.f32 %v659, %v1222
        %v1224 = vrot.slane %v1223, 2
        %v1225 = vadd.f32 %v1223, %v1224
        %v1226 = vrot.slane %v1225, 1
        %v1227 = vadd.f32 %v1225, %v1226
        %v1228 = vrot.slane %v660, 4
        %v1229 = vadd.f32 %v660, %v1228
        %v1230 = vrot.slane %v1229, 2
        %v1231 = vadd.f32 %v1229, %v1230
        %v1232 = vrot.slane %v1231, 1
        %v1233 = vadd.f32 %v1231, %v1232
        %v1234 = vrot.slane %v661, 4
        %v1235 = vadd.f32 %v661, %v1234
        %v1236 = vrot.slane %v1235, 2
        %v1237 = vadd.f32 %v1235, %v1236
        %v1238 = vrot.slane %v1237, 1
        %v1239 = vadd.f32 %v1237, %v1238
        %v1240 = vrot.slane %v662, 4
        %v1241 = vadd.f32 %v662, %v1240
        %v1242 = vrot.slane %v1241, 2
        %v1243 = vadd.f32 %v1241, %v1242
        %v1244 = vrot.slane %v1243, 1
        %v1245 = vadd.f32 %v1243, %v1244
        %v1246 = vrot.slane %v663, 4
        %v1247 = vadd.f32 %v663, %v1246
        %v1248 = vrot.slane %v1247, 2
        %v1249 = vadd.f32 %v1247, %v1248
        %v1250 = vrot.slane %v1249, 1
        %v1251 = vadd.f32 %v1249, %v1250
        %v1252 = vrot.slane %v664, 4
        %v1253 = vadd.f32 %v664, %v1252
        %v1254 = vrot.slane %v1253, 2
        %v1255 = vadd.f32 %v1253, %v1254
        %v1256 = vrot.slane %v1255, 1
        %v1257 = vadd.f32 %v1255, %v1256
        %v1258 = vrot.slane %v665, 4
        %v1259 = vadd.f32 %v665, %v1258
        %v1260 = vrot.slane %v1259, 2
        %v1261 = vadd.f32 %v1259, %v1260
        %v1262 = vrot.slane %v1261, 1
        %v1263 = vadd.f32 %v1261, %v1262
        %v1264 = vrot.slane %v666, 4
        %v1265 = vadd.f32 %v666, %v1264
        %v1266 = vrot.slane %v1265, 2
        %v1267 = vadd.f32 %v1265, %v1266
        %v1268 = vrot.slane %v1267, 1
        %v1269 = vadd.f32 %v1267, %v1268
        %v1270 = vrot.slane %v667, 4
        %v1271 = vadd.f32 %v667, %v1270
        %v1272 = vrot.slane %v1271, 2
        %v1273 = vadd.f32 %v1271, %v1272
        %v1274 = vrot.slane %v1273, 1
        %v1275 = vadd.f32 %v1273, %v1274
        %v1276 = vrot.slane %v668, 4
        %v1277 = vadd.f32 %v668, %v1276
        %v1278 = vrot.slane %v1277, 2
        %v1279 = vadd.f32 %v1277, %v1278
        %v1280 = vrot.slane %v1279, 1
        %v1281 = vadd.f32 %v1279, %v1280
        %v1282 = vrot.slane %v669, 4
        %v1283 = vadd.f32 %v669, %v1282
        %v1284 = vrot.slane %v1283, 2
        %v1285 = vadd.f32 %v1283, %v1284
        %v1286 = vrot.slane %v1285, 1
        %v1287 = vadd.f32 %v1285, %v1286
        %v1288 = vrot.slane %v670, 4
        %v1289 = vadd.f32 %v670, %v1288
        %v1290 = vrot.slane %v1289, 2
        %v1291 = vadd.f32 %v1289, %v1290
        %v1292 = vrot.slane %v1291, 1
        %v1293 = vadd.f32 %v1291, %v1292
        %v1294 = vrot.slane %v671, 4
        %v1295 = vadd.f32 %v671, %v1294
        %v1296 = vrot.slane %v1295, 2
        %v1297 = vadd.f32 %v1295, %v1296
        %v1298 = vrot.slane %v1297, 1
        %v1299 = vadd.f32 %v1297, %v1298
        %v1300 = vrot.slane %v672, 4
        %v1301 = vadd.f32 %v672, %v1300
        %v1302 = vrot.slane %v1301, 2
        %v1303 = vadd.f32 %v1301, %v1302
        %v1304 = vrot.slane %v1303, 1
        %v1305 = vadd.f32 %v1303, %v1304
        %v1306 = vrot.slane %v673, 4
        %v1307 = vadd.f32 %v673, %v1306
        %v1308 = vrot.slane %v1307, 2
        %v1309 = vadd.f32 %v1307, %v1308
        %v1310 = vrot.slane %v1309, 1
        %v1311 = vadd.f32 %v1309, %v1310
        %v1312 = vrot.slane %v674, 4
        %v1313 = vadd.f32 %v674, %v1312
        %v1314 = vrot.slane %v1313, 2
        %v1315 = vadd.f32 %v1313, %v1314
        %v1316 = vrot.slane %v1315, 1
        %v1317 = vadd.f32 %v1315, %v1316
        %v1318 = vrot.slane %v675, 4
        %v1319 = vadd.f32 %v675, %v1318
        %v1320 = vrot.slane %v1319, 2
        %v1321 = vadd.f32 %v1319, %v1320
        %v1322 = vrot.slane %v1321, 1
        %v1323 = vadd.f32 %v1321, %v1322
        %v1324 = vrot.slane %v676, 4
        %v1325 = vadd.f32 %v676, %v1324
        %v1326 = vrot.slane %v1325, 2
        %v1327 = vadd.f32 %v1325, %v1326
        %v1328 = vrot.slane %v1327, 1
        %v1329 = vadd.f32 %v1327, %v1328
        %v1330 = vrot.slane %v677, 4
        %v1331 = vadd.f32 %v677, %v1330
        %v1332 = vrot.slane %v1331, 2
        %v1333 = vadd.f32 %v1331, %v1332
        %v1334 = vrot.slane %v1333, 1
        %v1335 = vadd.f32 %v1333, %v1334
        %v1336 = vrot.slane %v678, 4
        %v1337 = vadd.f32 %v678, %v1336
        %v1338 = vrot.slane %v1337, 2
        %v1339 = vadd.f32 %v1337, %v1338
        %v1340 = vrot.slane %v1339, 1
        %v1341 = vadd.f32 %v1339, %v1340
        %v1342 = vrot.slane %v679, 4
        %v1343 = vadd.f32 %v679, %v1342
        %v1344 = vrot.slane %v1343, 2
        %v1345 = vadd.f32 %v1343, %v1344
        %v1346 = vrot.slane %v1345, 1
        %v1347 = vadd.f32 %v1345, %v1346
        %v1348 = vrot.slane %v680, 4
        %v1349 = vadd.f32 %v680, %v1348
        %v1350 = vrot.slane %v1349, 2
        %v1351 = vadd.f32 %v1349, %v1350
        %v1352 = vrot.slane %v1351, 1
        %v1353 = vadd.f32 %v1351, %v1352
        %v1354 = vrot.slane %v681, 4
        %v1355 = vadd.f32 %v681, %v1354
        %v1356 = vrot.slane %v1355, 2
        %v1357 = vadd.f32 %v1355, %v1356
        %v1358 = vrot.slane %v1357, 1
        %v1359 = vadd.f32 %v1357, %v1358
        %v1360 = vrot.slane %v682, 4
        %v1361 = vadd.f32 %v682, %v1360
        %v1362 = vrot.slane %v1361, 2
        %v1363 = vadd.f32 %v1361, %v1362
        %v1364 = vrot.slane %v1363, 1
        %v1365 = vadd.f32 %v1363, %v1364
        %v1366 = vrot.slane %v683, 4
        %v1367 = vadd.f32 %v683, %v1366
        %v1368 = vrot.slane %v1367, 2
        %v1369 = vadd.f32 %v1367, %v1368
        %v1370 = vrot.slane %v1369, 1
        %v1371 = vadd.f32 %v1369, %v1370
        %v1372 = vrot.slane %v684, 4
        %v1373 = vadd.f32 %v684, %v1372
        %v1374 = vrot.slane %v1373, 2
        %v1375 = vadd.f32 %v1373, %v1374
        %v1376 = vrot.slane %v1375, 1
        %v1377 = vadd.f32 %v1375, %v1376
        %v1378 = vrot.slane %v685, 4
        %v1379 = vadd.f32 %v685, %v1378
        %v1380 = vrot.slane %v1379, 2
        %v1381 = vadd.f32 %v1379, %v1380
        %v1382 = vrot.slane %v1381, 1
        %v1383 = vadd.f32 %v1381, %v1382
        %v1384 = vrot.slane %v686, 4
        %v1385 = vadd.f32 %v686, %v1384
        %v1386 = vrot.slane %v1385, 2
        %v1387 = vadd.f32 %v1385, %v1386
        %v1388 = vrot.slane %v1387, 1
        %v1389 = vadd.f32 %v1387, %v1388
        %v1390 = vrot.slane %v687, 4
        %v1391 = vadd.f32 %v687, %v1390
        %v1392 = vrot.slane %v1391, 2
        %v1393 = vadd.f32 %v1391, %v1392
        %v1394 = vrot.slane %v1393, 1
        %v1395 = vadd.f32 %v1393, %v1394
        %v1396 = vrot.slane %v688, 4
        %v1397 = vadd.f32 %v688, %v1396
        %v1398 = vrot.slane %v1397, 2
        %v1399 = vadd.f32 %v1397, %v1398
        %v1400 = vrot.slane %v1399, 1
        %v1401 = vadd.f32 %v1399, %v1400
        %v1402 = vrot.slane %v689, 4
        %v1403 = vadd.f32 %v689, %v1402
        %v1404 = vrot.slane %v1403, 2
        %v1405 = vadd.f32 %v1403, %v1404
        %v1406 = vrot.slane %v1405, 1
        %v1407 = vadd.f32 %v1405, %v1406
        %v1408 = vrot.slane %v690, 4
        %v1409 = vadd.f32 %v690, %v1408
        %v1410 = vrot.slane %v1409, 2
        %v1411 = vadd.f32 %v1409, %v1410
        %v1412 = vrot.slane %v1411, 1
        %v1413 = vadd.f32 %v1411, %v1412
        %v1414 = vrot.slane %v691, 4
        %v1415 = vadd.f32 %v691, %v1414
        %v1416 = vrot.slane %v1415, 2
        %v1417 = vadd.f32 %v1415, %v1416
        %v1418 = vrot.slane %v1417, 1
        %v1419 = vadd.f32 %v1417, %v1418
        %v1420 = vrot.slane %v692, 4
        %v1421 = vadd.f32 %v692, %v1420
        %v1422 = vrot.slane %v1421, 2
        %v1423 = vadd.f32 %v1421, %v1422
        %v1424 = vrot.slane %v1423, 1
        %v1425 = vadd.f32 %v1423, %v1424
        %v1426 = vrot.slane %v693, 4
        %v1427 = vadd.f32 %v693, %v1426
        %v1428 = vrot.slane %v1427, 2
        %v1429 = vadd.f32 %v1427, %v1428
        %v1430 = vrot.slane %v1429, 1
        %v1431 = vadd.f32 %v1429, %v1430
        %v1432 = vrot.slane %v694, 4
        %v1433 = vadd.f32 %v694, %v1432
        %v1434 = vrot.slane %v1433, 2
        %v1435 = vadd.f32 %v1433, %v1434
        %v1436 = vrot.slane %v1435, 1
        %v1437 = vadd.f32 %v1435, %v1436
        %v1438 = vrot.slane %v695, 4
        %v1439 = vadd.f32 %v695, %v1438
        %v1440 = vrot.slane %v1439, 2
        %v1441 = vadd.f32 %v1439, %v1440
        %v1442 = vrot.slane %v1441, 1
        %v1443 = vadd.f32 %v1441, %v1442
        %v1444 = vrot.slane %v696, 4
        %v1445 = vadd.f32 %v696, %v1444
        %v1446 = vrot.slane %v1445, 2
        %v1447 = vadd.f32 %v1445, %v1446
        %v1448 = vrot.slane %v1447, 1
        %v1449 = vadd.f32 %v1447, %v1448
        %v1450 = vrot.slane %v697, 4
        %v1451 = vadd.f32 %v697, %v1450
        %v1452 = vrot.slane %v1451, 2
        %v1453 = vadd.f32 %v1451, %v1452
        %v1454 = vrot.slane %v1453, 1
        %v1455 = vadd.f32 %v1453, %v1454
        %v1456 = vrot.slane %v698, 4
        %v1457 = vadd.f32 %v698, %v1456
        %v1458 = vrot.slane %v1457, 2
        %v1459 = vadd.f32 %v1457, %v1458
        %v1460 = vrot.slane %v1459, 1
        %v1461 = vadd.f32 %v1459, %v1460
        %v1462 = vrot.slane %v699, 4
        %v1463 = vadd.f32 %v699, %v1462
        %v1464 = vrot.slane %v1463, 2
        %v1465 = vadd.f32 %v1463, %v1464
        %v1466 = vrot.slane %v1465, 1
        %v1467 = vadd.f32 %v1465, %v1466
        %vm1596 = vcmask 1041409
        %v1597 = vsel %vm1596, %v717, %v705
        %vm1598 = vcmask 1042434
        %v1599 = vsel %vm1598, %v729, %v1597
        %vm1600 = vcmask 1043459
        %v1601 = vsel %vm1600, %v741, %v1599
        %vm1602 = vcmask 1044484
        %v1603 = vsel %vm1602, %v753, %v1601
        %vm1604 = vcmask 1045509
        %v1605 = vsel %vm1604, %v765, %v1603
        %vm1606 = vcmask 1046534
        %v1607 = vsel %vm1606, %v777, %v1605
        %vm1608 = vcmask 1047559
        %v1609 = vsel %vm1608, %v789, %v1607
        %v1610 = vsel %vm1596, %v723, %v711
        %v1611 = vsel %vm1598, %v735, %v1610
        %v1612 = vsel %vm1600, %v747, %v1611
        %v1613 = vsel %vm1602, %v759, %v1612
        %v1614 = vsel %vm1604, %v771, %v1613
        %v1615 = vsel %vm1606, %v783, %v1614
        %v1616 = vsel %vm1608, %v795, %v1615
        %v1617 = vsel %vm1596, %v813, %v801
        %v1618 = vsel %vm1598, %v825, %v1617
        %v1619 = vsel %vm1600, %v837, %v1618
        %v1620 = vsel %vm1602, %v849, %v1619
        %v1621 = vsel %vm1604, %v861, %v1620
        %v1622 = vsel %vm1606, %v873, %v1621
        %v1623 = vsel %vm1608, %v885, %v1622
        %v1624 = vsel %vm1596, %v819, %v807
        %v1625 = vsel %vm1598, %v831, %v1624
        %v1626 = vsel %vm1600, %v843, %v1625
        %v1627 = vsel %vm1602, %v855, %v1626
        %v1628 = vsel %vm1604, %v867, %v1627
        %v1629 = vsel %vm1606, %v879, %v1628
        %v1630 = vsel %vm1608, %v891, %v1629
        %v1631 = vsel %vm1596, %v909, %v897
        %v1632 = vsel %vm1598, %v921, %v1631
        %v1633 = vsel %vm1600, %v933, %v1632
        %v1634 = vsel %vm1602, %v945, %v1633
        %v1635 = vsel %vm1604, %v957, %v1634
        %v1636 = vsel %vm1606, %v969, %v1635
        %v1637 = vsel %vm1608, %v981, %v1636
        %v1638 = vsel %vm1596, %v915, %v903
        %v1639 = vsel %vm1598, %v927, %v1638
        %v1640 = vsel %vm1600, %v939, %v1639
        %v1641 = vsel %vm1602, %v951, %v1640
        %v1642 = vsel %vm1604, %v963, %v1641
        %v1643 = vsel %vm1606, %v975, %v1642
        %v1644 = vsel %vm1608, %v987, %v1643
        %v1645 = vsel %vm1596, %v1005, %v993
        %v1646 = vsel %vm1598, %v1017, %v1645
        %v1647 = vsel %vm1600, %v1029, %v1646
        %v1648 = vsel %vm1602, %v1041, %v1647
        %v1649 = vsel %vm1604, %v1053, %v1648
        %v1650 = vsel %vm1606, %v1065, %v1649
        %v1651 = vsel %vm1608, %v1077, %v1650
        %v1652 = vsel %vm1596, %v1011, %v999
        %v1653 = vsel %vm1598, %v1023, %v1652
        %v1654 = vsel %vm1600, %v1035, %v1653
        %v1655 = vsel %vm1602, %v1047, %v1654
        %v1656 = vsel %vm1604, %v1059, %v1655
        %v1657 = vsel %vm1606, %v1071, %v1656
        %v1658 = vsel %vm1608, %v1083, %v1657
        %v1659 = vsel %vm1596, %v1101, %v1089
        %v1660 = vsel %vm1598, %v1113, %v1659
        %v1661 = vsel %vm1600, %v1125, %v1660
        %v1662 = vsel %vm1602, %v1137, %v1661
        %v1663 = vsel %vm1604, %v1149, %v1662
        %v1664 = vsel %vm1606, %v1161, %v1663
        %v1665 = vsel %vm1608, %v1173, %v1664
        %v1666 = vsel %vm1596, %v1107, %v1095
        %v1667 = vsel %vm1598, %v1119, %v1666
        %v1668 = vsel %vm1600, %v1131, %v1667
        %v1669 = vsel %vm1602, %v1143, %v1668
        %v1670 = vsel %vm1604, %v1155, %v1669
        %v1671 = vsel %vm1606, %v1167, %v1670
        %v1672 = vsel %vm1608, %v1179, %v1671
        %v1673 = vsel %vm1596, %v1197, %v1185
        %v1674 = vsel %vm1598, %v1209, %v1673
        %v1675 = vsel %vm1600, %v1221, %v1674
        %v1676 = vsel %vm1602, %v1233, %v1675
        %v1677 = vsel %vm1604, %v1245, %v1676
        %v1678 = vsel %vm1606, %v1257, %v1677
        %v1679 = vsel %vm1608, %v1269, %v1678
        %v1680 = vsel %vm1596, %v1203, %v1191
        %v1681 = vsel %vm1598, %v1215, %v1680
        %v1682 = vsel %vm1600, %v1227, %v1681
        %v1683 = vsel %vm1602, %v1239, %v1682
        %v1684 = vsel %vm1604, %v1251, %v1683
        %v1685 = vsel %vm1606, %v1263, %v1684
        %v1686 = vsel %vm1608, %v1275, %v1685
        %v1687 = vsel %vm1596, %v1293, %v1281
        %v1688 = vsel %vm1598, %v1305, %v1687
        %v1689 = vsel %vm1600, %v1317, %v1688
        %v1690 = vsel %vm1602, %v1329, %v1689
        %v1691 = vsel %vm1604, %v1341, %v1690
        %v1692 = vsel %vm1606, %v1353, %v1691
        %v1693 = vsel %vm1608, %v1365, %v1692
        %v1694 = vsel %vm1596, %v1299, %v1287
        %v1695 = vsel %vm1598, %v1311, %v1694
        %v1696 = vsel %vm1600, %v1323, %v1695
        %v1697 = vsel %vm1602, %v1335, %v1696
        %v1698 = vsel %vm1604, %v1347, %v1697
        %v1699 = vsel %vm1606, %v1359, %v1698
        %v1700 = vsel %vm1608, %v1371, %v1699
        %v1701 = vsel %vm1596, %v1389, %v1377
        %v1702 = vsel %vm1598, %v1401, %v1701
        %v1703 = vsel %vm1600, %v1413, %v1702
        %v1704 = vsel %vm1602, %v1425, %v1703
        %v1705 = vsel %vm1604, %v1437, %v1704
        %v1706 = vsel %vm1606, %v1449, %v1705
        %v1707 = vsel %vm1608, %v1461, %v1706
        %v1708 = vsel %vm1596, %v1395, %v1383
        %v1709 = vsel %vm1598, %v1407, %v1708
        %v1710 = vsel %vm1600, %v1419, %v1709
        %v1711 = vsel %vm1602, %v1431, %v1710
        %v1712 = vsel %vm1604, %v1443, %v1711
        %v1713 = vsel %vm1606, %v1455, %v1712
        %v1714 = vsel %vm1608, %v1467, %v1713
        %v1731 = vadd.f32 %v1609, %v1616
        %1732 = vadd.xlane.f32.xlu0 %v1731
        %v1733 = vpop.xlane.xlu0 %1732
        %v1734 = vadd.f32 %v1623, %v1630
        %1735 = vadd.xlane.f32.xlu0 %v1734
        %v1736 = vpop.xlane.xlu0 %1735
        %v1737 = vadd.f32 %v1637, %v1644
        %1738 = vadd.xlane.f32.xlu0 %v1737
        %v1739 = vpop.xlane.xlu0 %1738
        %v1740 = vadd.f32 %v1651, %v1658
        %1741 = vadd.xlane.f32.xlu0 %v1740
        %v1742 = vpop.xlane.xlu0 %1741
        %v1743 = vadd.f32 %v1665, %v1672
        %1744 = vadd.xlane.f32.xlu0 %v1743
        %v1745 = vpop.xlane.xlu0 %1744
        %v1746 = vadd.f32 %v1679, %v1686
        %1747 = vadd.xlane.f32.xlu0 %v1746
        %v1748 = vpop.xlane.xlu0 %1747
        %v1749 = vadd.f32 %v1693, %v1700
        %1750 = vadd.xlane.f32.xlu0 %v1749
        %v1751 = vpop.xlane.xlu0 %1750
        %v1752 = vadd.f32 %v1707, %v1714
        %1753 = vadd.xlane.f32.xlu0 %v1752
        %v1754 = vpop.xlane.xlu0 %1753
        %v1755 = vmul.f32 %v1733, %v507
        %v1756 = vmul.f32 %v1736, %v507
        %v1757 = vmul.f32 %v1739, %v507
        %v1758 = vmul.f32 %v1742, %v507
        %v1759 = vmul.f32 %v1745, %v507
        %v1760 = vmul.f32 %v1748, %v507
        %v1761 = vmul.f32 %v1751, %v507
        %v1762 = vmul.f32 %v1754, %v507
        %v1771 = vrot.slane %v1755, 1
        %v1772 = vrot.slane %v1755, 2
        %v1773 = vrot.slane %v1755, 3
        %v1774 = vrot.slane %v1755, 4
        %v1775 = vrot.slane %v1755, 5
        %v1776 = vrot.slane %v1755, 6
        %v1777 = vrot.slane %v1755, 7
        %v1778 = vrot.slane %v1756, 1
        %v1779 = vrot.slane %v1756, 2
        %v1780 = vrot.slane %v1756, 3
        %v1781 = vrot.slane %v1756, 4
        %v1782 = vrot.slane %v1756, 5
        %v1783 = vrot.slane %v1756, 6
        %v1784 = vrot.slane %v1756, 7
        %v1785 = vrot.slane %v1757, 1
        %v1786 = vrot.slane %v1757, 2
        %v1787 = vrot.slane %v1757, 3
        %v1788 = vrot.slane %v1757, 4
        %v1789 = vrot.slane %v1757, 5
        %v1790 = vrot.slane %v1757, 6
        %v1791 = vrot.slane %v1757, 7
        %v1792 = vrot.slane %v1758, 1
        %v1793 = vrot.slane %v1758, 2
        %v1794 = vrot.slane %v1758, 3
        %v1795 = vrot.slane %v1758, 4
        %v1796 = vrot.slane %v1758, 5
        %v1797 = vrot.slane %v1758, 6
        %v1798 = vrot.slane %v1758, 7
        %v1799 = vrot.slane %v1759, 1
        %v1800 = vrot.slane %v1759, 2
        %v1801 = vrot.slane %v1759, 3
        %v1802 = vrot.slane %v1759, 4
        %v1803 = vrot.slane %v1759, 5
        %v1804 = vrot.slane %v1759, 6
        %v1805 = vrot.slane %v1759, 7
        %v1806 = vrot.slane %v1760, 1
        %v1807 = vrot.slane %v1760, 2
        %v1808 = vrot.slane %v1760, 3
        %v1809 = vrot.slane %v1760, 4
        %v1810 = vrot.slane %v1760, 5
        %v1811 = vrot.slane %v1760, 6
        %v1812 = vrot.slane %v1760, 7
        %v1813 = vrot.slane %v1761, 1
        %v1814 = vrot.slane %v1761, 2
        %v1815 = vrot.slane %v1761, 3
        %v1816 = vrot.slane %v1761, 4
        %v1817 = vrot.slane %v1761, 5
        %v1818 = vrot.slane %v1761, 6
        %v1819 = vrot.slane %v1761, 7
        %v1820 = vrot.slane %v1762, 1
        %v1821 = vrot.slane %v1762, 2
        %v1822 = vrot.slane %v1762, 3
        %v1823 = vrot.slane %v1762, 4
        %v1824 = vrot.slane %v1762, 5
        %v1825 = vrot.slane %v1762, 6
        %v1826 = vrot.slane %v1762, 7
        %v1891 = vsub.f32 %v705, %v1755
        %v1892 = vsub.f32 %v711, %v1755
        %v1893 = vsub.f32 %v717, %v1771
        %v1894 = vsub.f32 %v723, %v1771
        %v1895 = vsub.f32 %v729, %v1772
        %v1896 = vsub.f32 %v735, %v1772
        %v1897 = vsub.f32 %v741, %v1773
        %v1898 = vsub.f32 %v747, %v1773
        %v1899 = vsub.f32 %v753, %v1774
        %v1900 = vsub.f32 %v759, %v1774
        %v1901 = vsub.f32 %v765, %v1775
        %v1902 = vsub.f32 %v771, %v1775
        %v1903 = vsub.f32 %v777, %v1776
        %v1904 = vsub.f32 %v783, %v1776
        %v1905 = vsub.f32 %v789, %v1777
        %v1906 = vsub.f32 %v795, %v1777
        %v1907 = vsub.f32 %v801, %v1756
        %v1908 = vsub.f32 %v807, %v1756
        %v1909 = vsub.f32 %v813, %v1778
        %v1910 = vsub.f32 %v819, %v1778
        %v1911 = vsub.f32 %v825, %v1779
        %v1912 = vsub.f32 %v831, %v1779
        %v1913 = vsub.f32 %v837, %v1780
        %v1914 = vsub.f32 %v843, %v1780
        %v1915 = vsub.f32 %v849, %v1781
        %v1916 = vsub.f32 %v855, %v1781
        %v1917 = vsub.f32 %v861, %v1782
        %v1918 = vsub.f32 %v867, %v1782
        %v1919 = vsub.f32 %v873, %v1783
        %v1920 = vsub.f32 %v879, %v1783
        %v1921 = vsub.f32 %v885, %v1784
        %v1922 = vsub.f32 %v891, %v1784
        %v1923 = vsub.f32 %v897, %v1757
        %v1924 = vsub.f32 %v903, %v1757
        %v1925 = vsub.f32 %v909, %v1785
        %v1926 = vsub.f32 %v915, %v1785
        %v1927 = vsub.f32 %v921, %v1786
        %v1928 = vsub.f32 %v927, %v1786
        %v1929 = vsub.f32 %v933, %v1787
        %v1930 = vsub.f32 %v939, %v1787
        %v1931 = vsub.f32 %v945, %v1788
        %v1932 = vsub.f32 %v951, %v1788
        %v1933 = vsub.f32 %v957, %v1789
        %v1934 = vsub.f32 %v963, %v1789
        %v1935 = vsub.f32 %v969, %v1790
        %v1936 = vsub.f32 %v975, %v1790
        %v1937 = vsub.f32 %v981, %v1791
        %v1938 = vsub.f32 %v987, %v1791
        %v1939 = vsub.f32 %v993, %v1758
        %v1940 = vsub.f32 %v999, %v1758
        %v1941 = vsub.f32 %v1005, %v1792
        %v1942 = vsub.f32 %v1011, %v1792
        %v1943 = vsub.f32 %v1017, %v1793
        %v1944 = vsub.f32 %v1023, %v1793
        %v1945 = vsub.f32 %v1029, %v1794
        %v1946 = vsub.f32 %v1035, %v1794
        %v1947 = vsub.f32 %v1041, %v1795
        %v1948 = vsub.f32 %v1047, %v1795
        %v1949 = vsub.f32 %v1053, %v1796
        %v1950 = vsub.f32 %v1059, %v1796
        %v1951 = vsub.f32 %v1065, %v1797
        %v1952 = vsub.f32 %v1071, %v1797
        %v1953 = vsub.f32 %v1077, %v1798
        %v1954 = vsub.f32 %v1083, %v1798
        %v1955 = vsub.f32 %v1089, %v1759
        %v1956 = vsub.f32 %v1095, %v1759
        %v1957 = vsub.f32 %v1101, %v1799
        %v1958 = vsub.f32 %v1107, %v1799
        %v1959 = vsub.f32 %v1113, %v1800
        %v1960 = vsub.f32 %v1119, %v1800
        %v1961 = vsub.f32 %v1125, %v1801
        %v1962 = vsub.f32 %v1131, %v1801
        %v1963 = vsub.f32 %v1137, %v1802
        %v1964 = vsub.f32 %v1143, %v1802
        %v1965 = vsub.f32 %v1149, %v1803
        %v1966 = vsub.f32 %v1155, %v1803
        %v1967 = vsub.f32 %v1161, %v1804
        %v1968 = vsub.f32 %v1167, %v1804
        %v1969 = vsub.f32 %v1173, %v1805
        %v1970 = vsub.f32 %v1179, %v1805
        %v1971 = vsub.f32 %v1185, %v1760
        %v1972 = vsub.f32 %v1191, %v1760
        %v1973 = vsub.f32 %v1197, %v1806
        %v1974 = vsub.f32 %v1203, %v1806
        %v1975 = vsub.f32 %v1209, %v1807
        %v1976 = vsub.f32 %v1215, %v1807
        %v1977 = vsub.f32 %v1221, %v1808
        %v1978 = vsub.f32 %v1227, %v1808
        %v1979 = vsub.f32 %v1233, %v1809
        %v1980 = vsub.f32 %v1239, %v1809
        %v1981 = vsub.f32 %v1245, %v1810
        %v1982 = vsub.f32 %v1251, %v1810
        %v1983 = vsub.f32 %v1257, %v1811
        %v1984 = vsub.f32 %v1263, %v1811
        %v1985 = vsub.f32 %v1269, %v1812
        %v1986 = vsub.f32 %v1275, %v1812
        %v1987 = vsub.f32 %v1281, %v1761
        %v1988 = vsub.f32 %v1287, %v1761
        %v1989 = vsub.f32 %v1293, %v1813
        %v1990 = vsub.f32 %v1299, %v1813
        %v1991 = vsub.f32 %v1305, %v1814
        %v1992 = vsub.f32 %v1311, %v1814
        %v1993 = vsub.f32 %v1317, %v1815
        %v1994 = vsub.f32 %v1323, %v1815
        %v1995 = vsub.f32 %v1329, %v1816
        %v1996 = vsub.f32 %v1335, %v1816
        %v1997 = vsub.f32 %v1341, %v1817
        %v1998 = vsub.f32 %v1347, %v1817
        %v1999 = vsub.f32 %v1353, %v1818
        %v2000 = vsub.f32 %v1359, %v1818
        %v2001 = vsub.f32 %v1365, %v1819
        %v2002 = vsub.f32 %v1371, %v1819
        %v2003 = vsub.f32 %v1377, %v1762
        %v2004 = vsub.f32 %v1383, %v1762
        %v2005 = vsub.f32 %v1389, %v1820
        %v2006 = vsub.f32 %v1395, %v1820
        %v2007 = vsub.f32 %v1401, %v1821
        %v2008 = vsub.f32 %v1407, %v1821
        %v2009 = vsub.f32 %v1413, %v1822
        %v2010 = vsub.f32 %v1419, %v1822
        %v2011 = vsub.f32 %v1425, %v1823
        %v2012 = vsub.f32 %v1431, %v1823
        %v2013 = vsub.f32 %v1437, %v1824
        %v2014 = vsub.f32 %v1443, %v1824
        %v2015 = vsub.f32 %v1449, %v1825
        %v2016 = vsub.f32 %v1455, %v1825
        %v2017 = vsub.f32 %v1461, %v1826
        %v2018 = vsub.f32 %v1467, %v1826
        %v2019 = vmul.f32 %v1891, %v1891
        %v2020 = vmul.f32 %v1892, %v1892
        %v2021 = vmul.f32 %v1893, %v1893
        %v2022 = vmul.f32 %v1894, %v1894
        %v2023 = vmul.f32 %v1895, %v1895
        %v2024 = vmul.f32 %v1896, %v1896
        %v2025 = vmul.f32 %v1897, %v1897
        %v2026 = vmul.f32 %v1898, %v1898
        %v2027 = vmul.f32 %v1899, %v1899
        %v2028 = vmul.f32 %v1900, %v1900
        %v2029 = vmul.f32 %v1901, %v1901
        %v2030 = vmul.f32 %v1902, %v1902
        %v2031 = vmul.f32 %v1903, %v1903
        %v2032 = vmul.f32 %v1904, %v1904
        %v2033 = vmul.f32 %v1905, %v1905
        %v2034 = vmul.f32 %v1906, %v1906
        %v2035 = vmul.f32 %v1907, %v1907
        %v2036 = vmul.f32 %v1908, %v1908
        %v2037 = vmul.f32 %v1909, %v1909
        %v2038 = vmul.f32 %v1910, %v1910
        %v2039 = vmul.f32 %v1911, %v1911
        %v2040 = vmul.f32 %v1912, %v1912
        %v2041 = vmul.f32 %v1913, %v1913
        %v2042 = vmul.f32 %v1914, %v1914
        %v2043 = vmul.f32 %v1915, %v1915
        %v2044 = vmul.f32 %v1916, %v1916
        %v2045 = vmul.f32 %v1917, %v1917
        %v2046 = vmul.f32 %v1918, %v1918
        %v2047 = vmul.f32 %v1919, %v1919
        %v2048 = vmul.f32 %v1920, %v1920
        %v2049 = vmul.f32 %v1921, %v1921
        %v2050 = vmul.f32 %v1922, %v1922
        %v2051 = vmul.f32 %v1923, %v1923
        %v2052 = vmul.f32 %v1924, %v1924
        %v2053 = vmul.f32 %v1925, %v1925
        %v2054 = vmul.f32 %v1926, %v1926
        %v2055 = vmul.f32 %v1927, %v1927
        %v2056 = vmul.f32 %v1928, %v1928
        %v2057 = vmul.f32 %v1929, %v1929
        %v2058 = vmul.f32 %v1930, %v1930
        %v2059 = vmul.f32 %v1931, %v1931
        %v2060 = vmul.f32 %v1932, %v1932
        %v2061 = vmul.f32 %v1933, %v1933
        %v2062 = vmul.f32 %v1934, %v1934
        %v2063 = vmul.f32 %v1935, %v1935
        %v2064 = vmul.f32 %v1936, %v1936
        %v2065 = vmul.f32 %v1937, %v1937
        %v2066 = vmul.f32 %v1938, %v1938
        %v2067 = vmul.f32 %v1939, %v1939
        %v2068 = vmul.f32 %v1940, %v1940
        %v2069 = vmul.f32 %v1941, %v1941
        %v2070 = vmul.f32 %v1942, %v1942
        %v2071 = vmul.f32 %v1943, %v1943
        %v2072 = vmul.f32 %v1944, %v1944
        %v2073 = vmul.f32 %v1945, %v1945
        %v2074 = vmul.f32 %v1946, %v1946
        %v2075 = vmul.f32 %v1947, %v1947
        %v2076 = vmul.f32 %v1948, %v1948
        %v2077 = vmul.f32 %v1949, %v1949
        %v2078 = vmul.f32 %v1950, %v1950
        %v2079 = vmul.f32 %v1951, %v1951
        %v2080 = vmul.f32 %v1952, %v1952
        %v2081 = vmul.f32 %v1953, %v1953
        %v2082 = vmul.f32 %v1954, %v1954
        %v2083 = vmul.f32 %v1955, %v1955
        %v2084 = vmul.f32 %v1956, %v1956
        %v2085 = vmul.f32 %v1957, %v1957
        %v2086 = vmul.f32 %v1958, %v1958
        %v2087 = vmul.f32 %v1959, %v1959
        %v2088 = vmul.f32 %v1960, %v1960
        %v2089 = vmul.f32 %v1961, %v1961
        %v2090 = vmul.f32 %v1962, %v1962
        %v2091 = vmul.f32 %v1963, %v1963
        %v2092 = vmul.f32 %v1964, %v1964
        %v2093 = vmul.f32 %v1965, %v1965
        %v2094 = vmul.f32 %v1966, %v1966
        %v2095 = vmul.f32 %v1967, %v1967
        %v2096 = vmul.f32 %v1968, %v1968
        %v2097 = vmul.f32 %v1969, %v1969
        %v2098 = vmul.f32 %v1970, %v1970
        %v2099 = vmul.f32 %v1971, %v1971
        %v2100 = vmul.f32 %v1972, %v1972
        %v2101 = vmul.f32 %v1973, %v1973
        %v2102 = vmul.f32 %v1974, %v1974
        %v2103 = vmul.f32 %v1975, %v1975
        %v2104 = vmul.f32 %v1976, %v1976
        %v2105 = vmul.f32 %v1977, %v1977
        %v2106 = vmul.f32 %v1978, %v1978
        %v2107 = vmul.f32 %v1979, %v1979
        %v2108 = vmul.f32 %v1980, %v1980
        %v2109 = vmul.f32 %v1981, %v1981
        %v2110 = vmul.f32 %v1982, %v1982
        %v2111 = vmul.f32 %v1983, %v1983
        %v2112 = vmul.f32 %v1984, %v1984
        %v2113 = vmul.f32 %v1985, %v1985
        %v2114 = vmul.f32 %v1986, %v1986
        %v2115 = vmul.f32 %v1987, %v1987
        %v2116 = vmul.f32 %v1988, %v1988
        %v2117 = vmul.f32 %v1989, %v1989
        %v2118 = vmul.f32 %v1990, %v1990
        %v2119 = vmul.f32 %v1991, %v1991
        %v2120 = vmul.f32 %v1992, %v1992
        %v2121 = vmul.f32 %v1993, %v1993
        %v2122 = vmul.f32 %v1994, %v1994
        %v2123 = vmul.f32 %v1995, %v1995
        %v2124 = vmul.f32 %v1996, %v1996
        %v2125 = vmul.f32 %v1997, %v1997
        %v2126 = vmul.f32 %v1998, %v1998
        %v2127 = vmul.f32 %v1999, %v1999
        %v2128 = vmul.f32 %v2000, %v2000
        %v2129 = vmul.f32 %v2001, %v2001
        %v2130 = vmul.f32 %v2002, %v2002
        %v2131 = vmul.f32 %v2003, %v2003
        %v2132 = vmul.f32 %v2004, %v2004
        %v2133 = vmul.f32 %v2005, %v2005
        %v2134 = vmul.f32 %v2006, %v2006
        %v2135 = vmul.f32 %v2007, %v2007
        %v2136 = vmul.f32 %v2008, %v2008
        %v2137 = vmul.f32 %v2009, %v2009
        %v2138 = vmul.f32 %v2010, %v2010
        %v2139 = vmul.f32 %v2011, %v2011
        %v2140 = vmul.f32 %v2012, %v2012
        %v2141 = vmul.f32 %v2013, %v2013
        %v2142 = vmul.f32 %v2014, %v2014
        %v2143 = vmul.f32 %v2015, %v2015
        %v2144 = vmul.f32 %v2016, %v2016
        %v2145 = vmul.f32 %v2017, %v2017
        %v2146 = vmul.f32 %v2018, %v2018
        %v2275 = vrot.slane %v2021, 7
        %v2276 = vsel %vm1596, %v2275, %v2019
        %v2277 = vrot.slane %v2023, 6
        %v2278 = vsel %vm1598, %v2277, %v2276
        %v2279 = vrot.slane %v2025, 5
        %v2280 = vsel %vm1600, %v2279, %v2278
        %v2281 = vrot.slane %v2027, 4
        %v2282 = vsel %vm1602, %v2281, %v2280
        %v2283 = vrot.slane %v2029, 3
        %v2284 = vsel %vm1604, %v2283, %v2282
        %v2285 = vrot.slane %v2031, 2
        %v2286 = vsel %vm1606, %v2285, %v2284
        %v2287 = vrot.slane %v2033, 1
        %v2288 = vsel %vm1608, %v2287, %v2286
        %v2289 = vrot.slane %v2022, 7
        %v2290 = vsel %vm1596, %v2289, %v2020
        %v2291 = vrot.slane %v2024, 6
        %v2292 = vsel %vm1598, %v2291, %v2290
        %v2293 = vrot.slane %v2026, 5
        %v2294 = vsel %vm1600, %v2293, %v2292
        %v2295 = vrot.slane %v2028, 4
        %v2296 = vsel %vm1602, %v2295, %v2294
        %v2297 = vrot.slane %v2030, 3
        %v2298 = vsel %vm1604, %v2297, %v2296
        %v2299 = vrot.slane %v2032, 2
        %v2300 = vsel %vm1606, %v2299, %v2298
        %v2301 = vrot.slane %v2034, 1
        %v2302 = vsel %vm1608, %v2301, %v2300
        %v2303 = vrot.slane %v2037, 7
        %v2304 = vsel %vm1596, %v2303, %v2035
        %v2305 = vrot.slane %v2039, 6
        %v2306 = vsel %vm1598, %v2305, %v2304
        %v2307 = vrot.slane %v2041, 5
        %v2308 = vsel %vm1600, %v2307, %v2306
        %v2309 = vrot.slane %v2043, 4
        %v2310 = vsel %vm1602, %v2309, %v2308
        %v2311 = vrot.slane %v2045, 3
        %v2312 = vsel %vm1604, %v2311, %v2310
        %v2313 = vrot.slane %v2047, 2
        %v2314 = vsel %vm1606, %v2313, %v2312
        %v2315 = vrot.slane %v2049, 1
        %v2316 = vsel %vm1608, %v2315, %v2314
        %v2317 = vrot.slane %v2038, 7
        %v2318 = vsel %vm1596, %v2317, %v2036
        %v2319 = vrot.slane %v2040, 6
        %v2320 = vsel %vm1598, %v2319, %v2318
        %v2321 = vrot.slane %v2042, 5
        %v2322 = vsel %vm1600, %v2321, %v2320
        %v2323 = vrot.slane %v2044, 4
        %v2324 = vsel %vm1602, %v2323, %v2322
        %v2325 = vrot.slane %v2046, 3
        %v2326 = vsel %vm1604, %v2325, %v2324
        %v2327 = vrot.slane %v2048, 2
        %v2328 = vsel %vm1606, %v2327, %v2326
        %v2329 = vrot.slane %v2050, 1
        %v2330 = vsel %vm1608, %v2329, %v2328
        %v2331 = vrot.slane %v2053, 7
        %v2332 = vsel %vm1596, %v2331, %v2051
        %v2333 = vrot.slane %v2055, 6
        %v2334 = vsel %vm1598, %v2333, %v2332
        %v2335 = vrot.slane %v2057, 5
        %v2336 = vsel %vm1600, %v2335, %v2334
        %v2337 = vrot.slane %v2059, 4
        %v2338 = vsel %vm1602, %v2337, %v2336
        %v2339 = vrot.slane %v2061, 3
        %v2340 = vsel %vm1604, %v2339, %v2338
        %v2341 = vrot.slane %v2063, 2
        %v2342 = vsel %vm1606, %v2341, %v2340
        %v2343 = vrot.slane %v2065, 1
        %v2344 = vsel %vm1608, %v2343, %v2342
        %v2345 = vrot.slane %v2054, 7
        %v2346 = vsel %vm1596, %v2345, %v2052
        %v2347 = vrot.slane %v2056, 6
        %v2348 = vsel %vm1598, %v2347, %v2346
        %v2349 = vrot.slane %v2058, 5
        %v2350 = vsel %vm1600, %v2349, %v2348
        %v2351 = vrot.slane %v2060, 4
        %v2352 = vsel %vm1602, %v2351, %v2350
        %v2353 = vrot.slane %v2062, 3
        %v2354 = vsel %vm1604, %v2353, %v2352
        %v2355 = vrot.slane %v2064, 2
        %v2356 = vsel %vm1606, %v2355, %v2354
        %v2357 = vrot.slane %v2066, 1
        %v2358 = vsel %vm1608, %v2357, %v2356
        %v2359 = vrot.slane %v2069, 7
        %v2360 = vsel %vm1596, %v2359, %v2067
        %v2361 = vrot.slane %v2071, 6
        %v2362 = vsel %vm1598, %v2361, %v2360
        %v2363 = vrot.slane %v2073, 5
        %v2364 = vsel %vm1600, %v2363, %v2362
        %v2365 = vrot.slane %v2075, 4
        %v2366 = vsel %vm1602, %v2365, %v2364
        %v2367 = vrot.slane %v2077, 3
        %v2368 = vsel %vm1604, %v2367, %v2366
        %v2369 = vrot.slane %v2079, 2
        %v2370 = vsel %vm1606, %v2369, %v2368
        %v2371 = vrot.slane %v2081, 1
        %v2372 = vsel %vm1608, %v2371, %v2370
        %v2373 = vrot.slane %v2070, 7
        %v2374 = vsel %vm1596, %v2373, %v2068
        %v2375 = vrot.slane %v2072, 6
        %v2376 = vsel %vm1598, %v2375, %v2374
        %v2377 = vrot.slane %v2074, 5
        %v2378 = vsel %vm1600, %v2377, %v2376
        %v2379 = vrot.slane %v2076, 4
        %v2380 = vsel %vm1602, %v2379, %v2378
        %v2381 = vrot.slane %v2078, 3
        %v2382 = vsel %vm1604, %v2381, %v2380
        %v2383 = vrot.slane %v2080, 2
        %v2384 = vsel %vm1606, %v2383, %v2382
        %v2385 = vrot.slane %v2082, 1
        %v2386 = vsel %vm1608, %v2385, %v2384
        %v2387 = vrot.slane %v2085, 7
        %v2388 = vsel %vm1596, %v2387, %v2083
        %v2389 = vrot.slane %v2087, 6
        %v2390 = vsel %vm1598, %v2389, %v2388
        %v2391 = vrot.slane %v2089, 5
        %v2392 = vsel %vm1600, %v2391, %v2390
        %v2393 = vrot.slane %v2091, 4
        %v2394 = vsel %vm1602, %v2393, %v2392
        %v2395 = vrot.slane %v2093, 3
        %v2396 = vsel %vm1604, %v2395, %v2394
        %v2397 = vrot.slane %v2095, 2
        %v2398 = vsel %vm1606, %v2397, %v2396
        %v2399 = vrot.slane %v2097, 1
        %v2400 = vsel %vm1608, %v2399, %v2398
        %v2401 = vrot.slane %v2086, 7
        %v2402 = vsel %vm1596, %v2401, %v2084
        %v2403 = vrot.slane %v2088, 6
        %v2404 = vsel %vm1598, %v2403, %v2402
        %v2405 = vrot.slane %v2090, 5
        %v2406 = vsel %vm1600, %v2405, %v2404
        %v2407 = vrot.slane %v2092, 4
        %v2408 = vsel %vm1602, %v2407, %v2406
        %v2409 = vrot.slane %v2094, 3
        %v2410 = vsel %vm1604, %v2409, %v2408
        %v2411 = vrot.slane %v2096, 2
        %v2412 = vsel %vm1606, %v2411, %v2410
        %v2413 = vrot.slane %v2098, 1
        %v2414 = vsel %vm1608, %v2413, %v2412
        %v2415 = vrot.slane %v2101, 7
        %v2416 = vsel %vm1596, %v2415, %v2099
        %v2417 = vrot.slane %v2103, 6
        %v2418 = vsel %vm1598, %v2417, %v2416
        %v2419 = vrot.slane %v2105, 5
        %v2420 = vsel %vm1600, %v2419, %v2418
        %v2421 = vrot.slane %v2107, 4
        %v2422 = vsel %vm1602, %v2421, %v2420
        %v2423 = vrot.slane %v2109, 3
        %v2424 = vsel %vm1604, %v2423, %v2422
        %v2425 = vrot.slane %v2111, 2
        %v2426 = vsel %vm1606, %v2425, %v2424
        %v2427 = vrot.slane %v2113, 1
        %v2428 = vsel %vm1608, %v2427, %v2426
        %v2429 = vrot.slane %v2102, 7
        %v2430 = vsel %vm1596, %v2429, %v2100
        %v2431 = vrot.slane %v2104, 6
        %v2432 = vsel %vm1598, %v2431, %v2430
        %v2433 = vrot.slane %v2106, 5
        %v2434 = vsel %vm1600, %v2433, %v2432
        %v2435 = vrot.slane %v2108, 4
        %v2436 = vsel %vm1602, %v2435, %v2434
        %v2437 = vrot.slane %v2110, 3
        %v2438 = vsel %vm1604, %v2437, %v2436
        %v2439 = vrot.slane %v2112, 2
        %v2440 = vsel %vm1606, %v2439, %v2438
        %v2441 = vrot.slane %v2114, 1
        %v2442 = vsel %vm1608, %v2441, %v2440
        %v2443 = vrot.slane %v2117, 7
        %v2444 = vsel %vm1596, %v2443, %v2115
        %v2445 = vrot.slane %v2119, 6
        %v2446 = vsel %vm1598, %v2445, %v2444
        %v2447 = vrot.slane %v2121, 5
        %v2448 = vsel %vm1600, %v2447, %v2446
        %v2449 = vrot.slane %v2123, 4
        %v2450 = vsel %vm1602, %v2449, %v2448
        %v2451 = vrot.slane %v2125, 3
        %v2452 = vsel %vm1604, %v2451, %v2450
        %v2453 = vrot.slane %v2127, 2
        %v2454 = vsel %vm1606, %v2453, %v2452
        %v2455 = vrot.slane %v2129, 1
        %v2456 = vsel %vm1608, %v2455, %v2454
        %v2457 = vrot.slane %v2118, 7
        %v2458 = vsel %vm1596, %v2457, %v2116
        %v2459 = vrot.slane %v2120, 6
        %v2460 = vsel %vm1598, %v2459, %v2458
        %v2461 = vrot.slane %v2122, 5
        %v2462 = vsel %vm1600, %v2461, %v2460
        %v2463 = vrot.slane %v2124, 4
        %v2464 = vsel %vm1602, %v2463, %v2462
        %v2465 = vrot.slane %v2126, 3
        %v2466 = vsel %vm1604, %v2465, %v2464
        %v2467 = vrot.slane %v2128, 2
        %v2468 = vsel %vm1606, %v2467, %v2466
        %v2469 = vrot.slane %v2130, 1
        %v2470 = vsel %vm1608, %v2469, %v2468
        %v2471 = vrot.slane %v2133, 7
        %v2472 = vsel %vm1596, %v2471, %v2131
        %v2473 = vrot.slane %v2135, 6
        %v2474 = vsel %vm1598, %v2473, %v2472
        %v2475 = vrot.slane %v2137, 5
        %v2476 = vsel %vm1600, %v2475, %v2474
        %v2477 = vrot.slane %v2139, 4
        %v2478 = vsel %vm1602, %v2477, %v2476
        %v2479 = vrot.slane %v2141, 3
        %v2480 = vsel %vm1604, %v2479, %v2478
        %v2481 = vrot.slane %v2143, 2
        %v2482 = vsel %vm1606, %v2481, %v2480
        %v2483 = vrot.slane %v2145, 1
        %v2484 = vsel %vm1608, %v2483, %v2482
        %v2485 = vrot.slane %v2134, 7
        %v2486 = vsel %vm1596, %v2485, %v2132
        %v2487 = vrot.slane %v2136, 6
        %v2488 = vsel %vm1598, %v2487, %v2486
        %v2489 = vrot.slane %v2138, 5
        %v2490 = vsel %vm1600, %v2489, %v2488
        %v2491 = vrot.slane %v2140, 4
        %v2492 = vsel %vm1602, %v2491, %v2490
        %v2493 = vrot.slane %v2142, 3
        %v2494 = vsel %vm1604, %v2493, %v2492
        %v2495 = vrot.slane %v2144, 2
        %v2496 = vsel %vm1606, %v2495, %v2494
        %v2497 = vrot.slane %v2146, 1
        %v2498 = vsel %vm1608, %v2497, %v2496
        %v2515 = vadd.f32 %v2288, %v2302
        %2516 = vadd.xlane.f32.xlu0 %v2515
        %v2517 = vpop.xlane.xlu0 %2516
        %v2518 = vadd.f32 %v2316, %v2330
        %2519 = vadd.xlane.f32.xlu0 %v2518
        %v2520 = vpop.xlane.xlu0 %2519
        %v2521 = vadd.f32 %v2344, %v2358
        %2522 = vadd.xlane.f32.xlu0 %v2521
        %v2523 = vpop.xlane.xlu0 %2522
        %v2524 = vadd.f32 %v2372, %v2386
        %2525 = vadd.xlane.f32.xlu0 %v2524
        %v2526 = vpop.xlane.xlu0 %2525
        %v2527 = vadd.f32 %v2400, %v2414
        %2528 = vadd.xlane.f32.xlu0 %v2527
        %v2529 = vpop.xlane.xlu0 %2528
        %v2530 = vadd.f32 %v2428, %v2442
        %2531 = vadd.xlane.f32.xlu0 %v2530
        %v2532 = vpop.xlane.xlu0 %2531
        %v2533 = vadd.f32 %v2456, %v2470
        %2534 = vadd.xlane.f32.xlu0 %v2533
        %v2535 = vpop.xlane.xlu0 %2534
        %v2536 = vadd.f32 %v2484, %v2498
        %2537 = vadd.xlane.f32.xlu0 %v2536
        %v2538 = vpop.xlane.xlu0 %2537
        %v2539 = vrcp.pop 255.0
        %v2540 = vmul.f32 %v2517, %v2539
        %v2541 = vmul.f32 %v2520, %v2539
        %v2542 = vmul.f32 %v2523, %v2539
        %v2543 = vmul.f32 %v2526, %v2539
        %v2544 = vmul.f32 %v2529, %v2539
        %v2545 = vmul.f32 %v2532, %v2539
        %v2546 = vmul.f32 %v2535, %v2539
        %v2547 = vmul.f32 %v2538, %v2539
        %v2548 = vrsqrt.pop %v2540
        %v2549 = vmul.f32 %v2540, %v2548
        %vm2550 = vcmp.eq.f32.partialorder %v2540, inf
        %v2551 = vsel %vm2550, %v2540, %v2549
        %vm2552 = vcmp.eq.f32.partialorder %v2540, 0.0
        %v2553 = vand.u32 %v2540, 2147483648
        %v2554 = vsel %vm2552, %v2553, %v2551
        %v2555 = vrsqrt.pop %v2541
        %v2556 = vmul.f32 %v2541, %v2555
        %vm2557 = vcmp.eq.f32.partialorder %v2541, inf
        %v2558 = vsel %vm2557, %v2541, %v2556
        %vm2559 = vcmp.eq.f32.partialorder %v2541, 0.0
        %v2560 = vand.u32 %v2541, 2147483648
        %v2561 = vsel %vm2559, %v2560, %v2558
        %v2562 = vrsqrt.pop %v2542
        %v2563 = vmul.f32 %v2542, %v2562
        %vm2564 = vcmp.eq.f32.partialorder %v2542, inf
        %v2565 = vsel %vm2564, %v2542, %v2563
        %vm2566 = vcmp.eq.f32.partialorder %v2542, 0.0
        %v2567 = vand.u32 %v2542, 2147483648
        %v2568 = vsel %vm2566, %v2567, %v2565
        %v2569 = vrsqrt.pop %v2543
        %v2570 = vmul.f32 %v2543, %v2569
        %vm2571 = vcmp.eq.f32.partialorder %v2543, inf
        %v2572 = vsel %vm2571, %v2543, %v2570
        %vm2573 = vcmp.eq.f32.partialorder %v2543, 0.0
        %v2574 = vand.u32 %v2543, 2147483648
        %v2575 = vsel %vm2573, %v2574, %v2572
        %v2576 = vrsqrt.pop %v2544
        %v2577 = vmul.f32 %v2544, %v2576
        %vm2578 = vcmp.eq.f32.partialorder %v2544, inf
        %v2579 = vsel %vm2578, %v2544, %v2577
        %vm2580 = vcmp.eq.f32.partialorder %v2544, 0.0
        %v2581 = vand.u32 %v2544, 2147483648
        %v2582 = vsel %vm2580, %v2581, %v2579
        %v2583 = vrsqrt.pop %v2545
        %v2584 = vmul.f32 %v2545, %v2583
        %vm2585 = vcmp.eq.f32.partialorder %v2545, inf
        %v2586 = vsel %vm2585, %v2545, %v2584
        %vm2587 = vcmp.eq.f32.partialorder %v2545, 0.0
        %v2588 = vand.u32 %v2545, 2147483648
        %v2589 = vsel %vm2587, %v2588, %v2586
        %v2590 = vrsqrt.pop %v2546
        %v2591 = vmul.f32 %v2546, %v2590
        %vm2592 = vcmp.eq.f32.partialorder %v2546, inf
        %v2593 = vsel %vm2592, %v2546, %v2591
        %vm2594 = vcmp.eq.f32.partialorder %v2546, 0.0
        %v2595 = vand.u32 %v2546, 2147483648
        %v2596 = vsel %vm2594, %v2595, %v2593
        %v2597 = vrsqrt.pop %v2547
        %v2598 = vmul.f32 %v2547, %v2597
        %vm2599 = vcmp.eq.f32.partialorder %v2547, inf
        %v2600 = vsel %vm2599, %v2547, %v2598
        %vm2601 = vcmp.eq.f32.partialorder %v2547, 0.0
        %v2602 = vand.u32 %v2547, 2147483648
        %v2603 = vsel %vm2601, %v2602, %v2600
        %v2604 = vadd.f32 %v2554, 1e-05
        %v2605 = vadd.f32 %v2561, 1e-05
        %v2606 = vadd.f32 %v2568, 1e-05
        %v2607 = vadd.f32 %v2575, 1e-05
        %v2608 = vadd.f32 %v2582, 1e-05
        %v2609 = vadd.f32 %v2589, 1e-05
        %v2610 = vadd.f32 %v2596, 1e-05
        %v2611 = vadd.f32 %v2603, 1e-05
        %v2620 = vrot.slane %v2604, 1
        %v2621 = vrot.slane %v2604, 2
        %v2622 = vrot.slane %v2604, 3
        %v2623 = vrot.slane %v2604, 4
        %v2624 = vrot.slane %v2604, 5
        %v2625 = vrot.slane %v2604, 6
        %v2626 = vrot.slane %v2604, 7
        %v2627 = vrot.slane %v2605, 1
        %v2628 = vrot.slane %v2605, 2
        %v2629 = vrot.slane %v2605, 3
        %v2630 = vrot.slane %v2605, 4
        %v2631 = vrot.slane %v2605, 5
        %v2632 = vrot.slane %v2605, 6
        %v2633 = vrot.slane %v2605, 7
        %v2634 = vrot.slane %v2606, 1
        %v2635 = vrot.slane %v2606, 2
        %v2636 = vrot.slane %v2606, 3
        %v2637 = vrot.slane %v2606, 4
        %v2638 = vrot.slane %v2606, 5
        %v2639 = vrot.slane %v2606, 6
        %v2640 = vrot.slane %v2606, 7
        %v2641 = vrot.slane %v2607, 1
        %v2642 = vrot.slane %v2607, 2
        %v2643 = vrot.slane %v2607, 3
        %v2644 = vrot.slane %v2607, 4
        %v2645 = vrot.slane %v2607, 5
        %v2646 = vrot.slane %v2607, 6
        %v2647 = vrot.slane %v2607, 7
        %v2648 = vrot.slane %v2608, 1
        %v2649 = vrot.slane %v2608, 2
        %v2650 = vrot.slane %v2608, 3
        %v2651 = vrot.slane %v2608, 4
        %v2652 = vrot.slane %v2608, 5
        %v2653 = vrot.slane %v2608, 6
        %v2654 = vrot.slane %v2608, 7
        %v2655 = vrot.slane %v2609, 1
        %v2656 = vrot.slane %v2609, 2
        %v2657 = vrot.slane %v2609, 3
        %v2658 = vrot.slane %v2609, 4
        %v2659 = vrot.slane %v2609, 5
        %v2660 = vrot.slane %v2609, 6
        %v2661 = vrot.slane %v2609, 7
        %v2662 = vrot.slane %v2610, 1
        %v2663 = vrot.slane %v2610, 2
        %v2664 = vrot.slane %v2610, 3
        %v2665 = vrot.slane %v2610, 4
        %v2666 = vrot.slane %v2610, 5
        %v2667 = vrot.slane %v2610, 6
        %v2668 = vrot.slane %v2610, 7
        %v2669 = vrot.slane %v2611, 1
        %v2670 = vrot.slane %v2611, 2
        %v2671 = vrot.slane %v2611, 3
        %v2672 = vrot.slane %v2611, 4
        %v2673 = vrot.slane %v2611, 5
        %v2674 = vrot.slane %v2611, 6
        %v2675 = vrot.slane %v2611, 7
        %v2740 = vrcp.pop %v2604
        %v2741 = vmul.f32 %v1891, %v2740
        %v2742 = vmul.f32 %v1892, %v2740
        %v2743 = vrcp.pop %v2620
        %v2744 = vmul.f32 %v1893, %v2743
        %v2745 = vmul.f32 %v1894, %v2743
        %v2746 = vrcp.pop %v2621
        %v2747 = vmul.f32 %v1895, %v2746
        %v2748 = vmul.f32 %v1896, %v2746
        %v2749 = vrcp.pop %v2622
        %v2750 = vmul.f32 %v1897, %v2749
        %v2751 = vmul.f32 %v1898, %v2749
        %v2752 = vrcp.pop %v2623
        %v2753 = vmul.f32 %v1899, %v2752
        %v2754 = vmul.f32 %v1900, %v2752
        %v2755 = vrcp.pop %v2624
        %v2756 = vmul.f32 %v1901, %v2755
        %v2757 = vmul.f32 %v1902, %v2755
        %v2758 = vrcp.pop %v2625
        %v2759 = vmul.f32 %v1903, %v2758
        %v2760 = vmul.f32 %v1904, %v2758
        %v2761 = vrcp.pop %v2626
        %v2762 = vmul.f32 %v1905, %v2761
        %v2763 = vmul.f32 %v1906, %v2761
        %v2764 = vrcp.pop %v2605
        %v2765 = vmul.f32 %v1907, %v2764
        %v2766 = vmul.f32 %v1908, %v2764
        %v2767 = vrcp.pop %v2627
        %v2768 = vmul.f32 %v1909, %v2767
        %v2769 = vmul.f32 %v1910, %v2767
        %v2770 = vrcp.pop %v2628
        %v2771 = vmul.f32 %v1911, %v2770
        %v2772 = vmul.f32 %v1912, %v2770
        %v2773 = vrcp.pop %v2629
        %v2774 = vmul.f32 %v1913, %v2773
        %v2775 = vmul.f32 %v1914, %v2773
        %v2776 = vrcp.pop %v2630
        %v2777 = vmul.f32 %v1915, %v2776
        %v2778 = vmul.f32 %v1916, %v2776
        %v2779 = vrcp.pop %v2631
        %v2780 = vmul.f32 %v1917, %v2779
        %v2781 = vmul.f32 %v1918, %v2779
        %v2782 = vrcp.pop %v2632
        %v2783 = vmul.f32 %v1919, %v2782
        %v2784 = vmul.f32 %v1920, %v2782
        %v2785 = vrcp.pop %v2633
        %v2786 = vmul.f32 %v1921, %v2785
        %v2787 = vmul.f32 %v1922, %v2785
        %v2788 = vrcp.pop %v2606
        %v2789 = vmul.f32 %v1923, %v2788
        %v2790 = vmul.f32 %v1924, %v2788
        %v2791 = vrcp.pop %v2634
        %v2792 = vmul.f32 %v1925, %v2791
        %v2793 = vmul.f32 %v1926, %v2791
        %v2794 = vrcp.pop %v2635
        %v2795 = vmul.f32 %v1927, %v2794
        %v2796 = vmul.f32 %v1928, %v2794
        %v2797 = vrcp.pop %v2636
        %v2798 = vmul.f32 %v1929, %v2797
        %v2799 = vmul.f32 %v1930, %v2797
        %v2800 = vrcp.pop %v2637
        %v2801 = vmul.f32 %v1931, %v2800
        %v2802 = vmul.f32 %v1932, %v2800
        %v2803 = vrcp.pop %v2638
        %v2804 = vmul.f32 %v1933, %v2803
        %v2805 = vmul.f32 %v1934, %v2803
        %v2806 = vrcp.pop %v2639
        %v2807 = vmul.f32 %v1935, %v2806
        %v2808 = vmul.f32 %v1936, %v2806
        %v2809 = vrcp.pop %v2640
        %v2810 = vmul.f32 %v1937, %v2809
        %v2811 = vmul.f32 %v1938, %v2809
        %v2812 = vrcp.pop %v2607
        %v2813 = vmul.f32 %v1939, %v2812
        %v2814 = vmul.f32 %v1940, %v2812
        %v2815 = vrcp.pop %v2641
        %v2816 = vmul.f32 %v1941, %v2815
        %v2817 = vmul.f32 %v1942, %v2815
        %v2818 = vrcp.pop %v2642
        %v2819 = vmul.f32 %v1943, %v2818
        %v2820 = vmul.f32 %v1944, %v2818
        %v2821 = vrcp.pop %v2643
        %v2822 = vmul.f32 %v1945, %v2821
        %v2823 = vmul.f32 %v1946, %v2821
        %v2824 = vrcp.pop %v2644
        %v2825 = vmul.f32 %v1947, %v2824
        %v2826 = vmul.f32 %v1948, %v2824
        %v2827 = vrcp.pop %v2645
        %v2828 = vmul.f32 %v1949, %v2827
        %v2829 = vmul.f32 %v1950, %v2827
        %v2830 = vrcp.pop %v2646
        %v2831 = vmul.f32 %v1951, %v2830
        %v2832 = vmul.f32 %v1952, %v2830
        %v2833 = vrcp.pop %v2647
        %v2834 = vmul.f32 %v1953, %v2833
        %v2835 = vmul.f32 %v1954, %v2833
        %v2836 = vrcp.pop %v2608
        %v2837 = vmul.f32 %v1955, %v2836
        %v2838 = vmul.f32 %v1956, %v2836
        %v2839 = vrcp.pop %v2648
        %v2840 = vmul.f32 %v1957, %v2839
        %v2841 = vmul.f32 %v1958, %v2839
        %v2842 = vrcp.pop %v2649
        %v2843 = vmul.f32 %v1959, %v2842
        %v2844 = vmul.f32 %v1960, %v2842
        %v2845 = vrcp.pop %v2650
        %v2846 = vmul.f32 %v1961, %v2845
        %v2847 = vmul.f32 %v1962, %v2845
        %v2848 = vrcp.pop %v2651
        %v2849 = vmul.f32 %v1963, %v2848
        %v2850 = vmul.f32 %v1964, %v2848
        %v2851 = vrcp.pop %v2652
        %v2852 = vmul.f32 %v1965, %v2851
        %v2853 = vmul.f32 %v1966, %v2851
        %v2854 = vrcp.pop %v2653
        %v2855 = vmul.f32 %v1967, %v2854
        %v2856 = vmul.f32 %v1968, %v2854
        %v2857 = vrcp.pop %v2654
        %v2858 = vmul.f32 %v1969, %v2857
        %v2859 = vmul.f32 %v1970, %v2857
        %v2860 = vrcp.pop %v2609
        %v2861 = vmul.f32 %v1971, %v2860
        %v2862 = vmul.f32 %v1972, %v2860
        %v2863 = vrcp.pop %v2655
        %v2864 = vmul.f32 %v1973, %v2863
        %v2865 = vmul.f32 %v1974, %v2863
        %v2866 = vrcp.pop %v2656
        %v2867 = vmul.f32 %v1975, %v2866
        %v2868 = vmul.f32 %v1976, %v2866
        %v2869 = vrcp.pop %v2657
        %v2870 = vmul.f32 %v1977, %v2869
        %v2871 = vmul.f32 %v1978, %v2869
        %v2872 = vrcp.pop %v2658
        %v2873 = vmul.f32 %v1979, %v2872
        %v2874 = vmul.f32 %v1980, %v2872
        %v2875 = vrcp.pop %v2659
        %v2876 = vmul.f32 %v1981, %v2875
        %v2877 = vmul.f32 %v1982, %v2875
        %v2878 = vrcp.pop %v2660
        %v2879 = vmul.f32 %v1983, %v2878
        %v2880 = vmul.f32 %v1984, %v2878
        %v2881 = vrcp.pop %v2661
        %v2882 = vmul.f32 %v1985, %v2881
        %v2883 = vmul.f32 %v1986, %v2881
        %v2884 = vrcp.pop %v2610
        %v2885 = vmul.f32 %v1987, %v2884
        %v2886 = vmul.f32 %v1988, %v2884
        %v2887 = vrcp.pop %v2662
        %v2888 = vmul.f32 %v1989, %v2887
        %v2889 = vmul.f32 %v1990, %v2887
        %v2890 = vrcp.pop %v2663
        %v2891 = vmul.f32 %v1991, %v2890
        %v2892 = vmul.f32 %v1992, %v2890
        %v2893 = vrcp.pop %v2664
        %v2894 = vmul.f32 %v1993, %v2893
        %v2895 = vmul.f32 %v1994, %v2893
        %v2896 = vrcp.pop %v2665
        %v2897 = vmul.f32 %v1995, %v2896
        %v2898 = vmul.f32 %v1996, %v2896
        %v2899 = vrcp.pop %v2666
        %v2900 = vmul.f32 %v1997, %v2899
        %v2901 = vmul.f32 %v1998, %v2899
        %v2902 = vrcp.pop %v2667
        %v2903 = vmul.f32 %v1999, %v2902
        %v2904 = vmul.f32 %v2000, %v2902
        %v2905 = vrcp.pop %v2668
        %v2906 = vmul.f32 %v2001, %v2905
        %v2907 = vmul.f32 %v2002, %v2905
        %v2908 = vrcp.pop %v2611
        %v2909 = vmul.f32 %v2003, %v2908
        %v2910 = vmul.f32 %v2004, %v2908
        %v2911 = vrcp.pop %v2669
        %v2912 = vmul.f32 %v2005, %v2911
        %v2913 = vmul.f32 %v2006, %v2911
        %v2914 = vrcp.pop %v2670
        %v2915 = vmul.f32 %v2007, %v2914
        %v2916 = vmul.f32 %v2008, %v2914
        %v2917 = vrcp.pop %v2671
        %v2918 = vmul.f32 %v2009, %v2917
        %v2919 = vmul.f32 %v2010, %v2917
        %v2920 = vrcp.pop %v2672
        %v2921 = vmul.f32 %v2011, %v2920
        %v2922 = vmul.f32 %v2012, %v2920
        %v2923 = vrcp.pop %v2673
        %v2924 = vmul.f32 %v2013, %v2923
        %v2925 = vmul.f32 %v2014, %v2923
        %v2926 = vrcp.pop %v2674
        %v2927 = vmul.f32 %v2015, %v2926
        %v2928 = vmul.f32 %v2016, %v2926
        %v2929 = vrcp.pop %v2675
        %v2930 = vmul.f32 %v2017, %v2929
        %v2931 = vmul.f32 %v2018, %v2929
        %v2932 = vld [vmem:[%s183] sm:$0xff]
        %v2933 = vld [vmem:[%s183 + $0x8] sm:$0xff]
        %v2934 = vld [vmem:[%s183 + $0x10] sm:$0xff]
        %v2935 = vld [vmem:[%s183 + $0x18] sm:$0xff]
        %v2936 = vld [vmem:[%s183 + $0x20] sm:$0xff]
        %v2937 = vld [vmem:[%s183 + $0x28] sm:$0xff]
        %v2938 = vld [vmem:[%s183 + $0x30] sm:$0xff]
        %v2939 = vld [vmem:[%s183 + $0x38] sm:$0xff]
        %2941 = vset.pattern.permute.xlu0 0
        %2942 = vperm.xlu0 %2941, %v2932
        %v2943 = vpop.permute.xlu0 %2942
        %2945 = vset.pattern.permute.xlu0 0
        %2946 = vperm.xlu0 %2945, %v2933
        %v2947 = vpop.permute.xlu0 %2946
        %2949 = vset.pattern.permute.xlu0 0
        %2950 = vperm.xlu0 %2949, %v2934
        %v2951 = vpop.permute.xlu0 %2950
        %2953 = vset.pattern.permute.xlu0 0
        %2954 = vperm.xlu0 %2953, %v2935
        %v2955 = vpop.permute.xlu0 %2954
        %2957 = vset.pattern.permute.xlu0 0
        %2958 = vperm.xlu0 %2957, %v2936
        %v2959 = vpop.permute.xlu0 %2958
        %2961 = vset.pattern.permute.xlu0 0
        %2962 = vperm.xlu0 %2961, %v2937
        %v2963 = vpop.permute.xlu0 %2962
        %2965 = vset.pattern.permute.xlu0 0
        %2966 = vperm.xlu0 %2965, %v2938
        %v2967 = vpop.permute.xlu0 %2966
        %2969 = vset.pattern.permute.xlu0 0
        %2970 = vperm.xlu0 %2969, %v2939
        %v2971 = vpop.permute.xlu0 %2970
        %v2972 = vrot.slane %v2943, 1
        %v2973 = vrot.slane %v2943, 2
        %v2974 = vrot.slane %v2943, 3
        %v2975 = vrot.slane %v2943, 4
        %v2976 = vrot.slane %v2943, 5
        %v2977 = vrot.slane %v2943, 6
        %v2978 = vrot.slane %v2943, 7
        %v2979 = vrot.slane %v2947, 1
        %v2980 = vrot.slane %v2947, 2
        %v2981 = vrot.slane %v2947, 3
        %v2982 = vrot.slane %v2947, 4
        %v2983 = vrot.slane %v2947, 5
        %v2984 = vrot.slane %v2947, 6
        %v2985 = vrot.slane %v2947, 7
        %v2986 = vrot.slane %v2951, 1
        %v2987 = vrot.slane %v2951, 2
        %v2988 = vrot.slane %v2951, 3
        %v2989 = vrot.slane %v2951, 4
        %v2990 = vrot.slane %v2951, 5
        %v2991 = vrot.slane %v2951, 6
        %v2992 = vrot.slane %v2951, 7
        %v2993 = vrot.slane %v2955, 1
        %v2994 = vrot.slane %v2955, 2
        %v2995 = vrot.slane %v2955, 3
        %v2996 = vrot.slane %v2955, 4
        %v2997 = vrot.slane %v2955, 5
        %v2998 = vrot.slane %v2955, 6
        %v2999 = vrot.slane %v2955, 7
        %v3000 = vrot.slane %v2959, 1
        %v3001 = vrot.slane %v2959, 2
        %v3002 = vrot.slane %v2959, 3
        %v3003 = vrot.slane %v2959, 4
        %v3004 = vrot.slane %v2959, 5
        %v3005 = vrot.slane %v2959, 6
        %v3006 = vrot.slane %v2959, 7
        %v3007 = vrot.slane %v2963, 1
        %v3008 = vrot.slane %v2963, 2
        %v3009 = vrot.slane %v2963, 3
        %v3010 = vrot.slane %v2963, 4
        %v3011 = vrot.slane %v2963, 5
        %v3012 = vrot.slane %v2963, 6
        %v3013 = vrot.slane %v2963, 7
        %v3014 = vrot.slane %v2967, 1
        %v3015 = vrot.slane %v2967, 2
        %v3016 = vrot.slane %v2967, 3
        %v3017 = vrot.slane %v2967, 4
        %v3018 = vrot.slane %v2967, 5
        %v3019 = vrot.slane %v2967, 6
        %v3020 = vrot.slane %v2967, 7
        %v3021 = vrot.slane %v2971, 1
        %v3022 = vrot.slane %v2971, 2
        %v3023 = vrot.slane %v2971, 3
        %v3024 = vrot.slane %v2971, 4
        %v3025 = vrot.slane %v2971, 5
        %v3026 = vrot.slane %v2971, 6
        %v3027 = vrot.slane %v2971, 7
        %v3092 = vmul.f32 %v2741, %v2943
        %v3093 = vmul.f32 %v2742, %v2943
        %v3094 = vmul.f32 %v2744, %v2972
        %v3095 = vmul.f32 %v2745, %v2972
        %v3096 = vmul.f32 %v2747, %v2973
        %v3097 = vmul.f32 %v2748, %v2973
        %v3098 = vmul.f32 %v2750, %v2974
        %v3099 = vmul.f32 %v2751, %v2974
        %v3100 = vmul.f32 %v2753, %v2975
        %v3101 = vmul.f32 %v2754, %v2975
        %v3102 = vmul.f32 %v2756, %v2976
        %v3103 = vmul.f32 %v2757, %v2976
        %v3104 = vmul.f32 %v2759, %v2977
        %v3105 = vmul.f32 %v2760, %v2977
        %v3106 = vmul.f32 %v2762, %v2978
        %v3107 = vmul.f32 %v2763, %v2978
        %v3108 = vmul.f32 %v2765, %v2947
        %v3109 = vmul.f32 %v2766, %v2947
        %v3110 = vmul.f32 %v2768, %v2979
        %v3111 = vmul.f32 %v2769, %v2979
        %v3112 = vmul.f32 %v2771, %v2980
        %v3113 = vmul.f32 %v2772, %v2980
        %v3114 = vmul.f32 %v2774, %v2981
        %v3115 = vmul.f32 %v2775, %v2981
        %v3116 = vmul.f32 %v2777, %v2982
        %v3117 = vmul.f32 %v2778, %v2982
        %v3118 = vmul.f32 %v2780, %v2983
        %v3119 = vmul.f32 %v2781, %v2983
        %v3120 = vmul.f32 %v2783, %v2984
        %v3121 = vmul.f32 %v2784, %v2984
        %v3122 = vmul.f32 %v2786, %v2985
        %v3123 = vmul.f32 %v2787, %v2985
        %v3124 = vmul.f32 %v2789, %v2951
        %v3125 = vmul.f32 %v2790, %v2951
        %v3126 = vmul.f32 %v2792, %v2986
        %v3127 = vmul.f32 %v2793, %v2986
        %v3128 = vmul.f32 %v2795, %v2987
        %v3129 = vmul.f32 %v2796, %v2987
        %v3130 = vmul.f32 %v2798, %v2988
        %v3131 = vmul.f32 %v2799, %v2988
        %v3132 = vmul.f32 %v2801, %v2989
        %v3133 = vmul.f32 %v2802, %v2989
        %v3134 = vmul.f32 %v2804, %v2990
        %v3135 = vmul.f32 %v2805, %v2990
        %v3136 = vmul.f32 %v2807, %v2991
        %v3137 = vmul.f32 %v2808, %v2991
        %v3138 = vmul.f32 %v2810, %v2992
        %v3139 = vmul.f32 %v2811, %v2992
        %v3140 = vmul.f32 %v2813, %v2955
        %v3141 = vmul.f32 %v2814, %v2955
        %v3142 = vmul.f32 %v2816, %v2993
        %v3143 = vmul.f32 %v2817, %v2993
        %v3144 = vmul.f32 %v2819, %v2994
        %v3145 = vmul.f32 %v2820, %v2994
        %v3146 = vmul.f32 %v2822, %v2995
        %v3147 = vmul.f32 %v2823, %v2995
        %v3148 = vmul.f32 %v2825, %v2996
        %v3149 = vmul.f32 %v2826, %v2996
        %v3150 = vmul.f32 %v2828, %v2997
        %v3151 = vmul.f32 %v2829, %v2997
        %v3152 = vmul.f32 %v2831, %v2998
        %v3153 = vmul.f32 %v2832, %v2998
        %v3154 = vmul.f32 %v2834, %v2999
        %v3155 = vmul.f32 %v2835, %v2999
        %v3156 = vmul.f32 %v2837, %v2959
        %v3157 = vmul.f32 %v2838, %v2959
        %v3158 = vmul.f32 %v2840, %v3000
        %v3159 = vmul.f32 %v2841, %v3000
        %v3160 = vmul.f32 %v2843, %v3001
        %v3161 = vmul.f32 %v2844, %v3001
        %v3162 = vmul.f32 %v2846, %v3002
        %v3163 = vmul.f32 %v2847, %v3002
        %v3164 = vmul.f32 %v2849, %v3003
        %v3165 = vmul.f32 %v2850, %v3003
        %v3166 = vmul.f32 %v2852, %v3004
        %v3167 = vmul.f32 %v2853, %v3004
        %v3168 = vmul.f32 %v2855, %v3005
        %v3169 = vmul.f32 %v2856, %v3005
        %v3170 = vmul.f32 %v2858, %v3006
        %v3171 = vmul.f32 %v2859, %v3006
        %v3172 = vmul.f32 %v2861, %v2963
        %v3173 = vmul.f32 %v2862, %v2963
        %v3174 = vmul.f32 %v2864, %v3007
        %v3175 = vmul.f32 %v2865, %v3007
        %v3176 = vmul.f32 %v2867, %v3008
        %v3177 = vmul.f32 %v2868, %v3008
        %v3178 = vmul.f32 %v2870, %v3009
        %v3179 = vmul.f32 %v2871, %v3009
        %v3180 = vmul.f32 %v2873, %v3010
        %v3181 = vmul.f32 %v2874, %v3010
        %v3182 = vmul.f32 %v2876, %v3011
        %v3183 = vmul.f32 %v2877, %v3011
        %v3184 = vmul.f32 %v2879, %v3012
        %v3185 = vmul.f32 %v2880, %v3012
        %v3186 = vmul.f32 %v2882, %v3013
        %v3187 = vmul.f32 %v2883, %v3013
        %v3188 = vmul.f32 %v2885, %v2967
        %v3189 = vmul.f32 %v2886, %v2967
        %v3190 = vmul.f32 %v2888, %v3014
        %v3191 = vmul.f32 %v2889, %v3014
        %v3192 = vmul.f32 %v2891, %v3015
        %v3193 = vmul.f32 %v2892, %v3015
        %v3194 = vmul.f32 %v2894, %v3016
        %v3195 = vmul.f32 %v2895, %v3016
        %v3196 = vmul.f32 %v2897, %v3017
        %v3197 = vmul.f32 %v2898, %v3017
        %v3198 = vmul.f32 %v2900, %v3018
        %v3199 = vmul.f32 %v2901, %v3018
        %v3200 = vmul.f32 %v2903, %v3019
        %v3201 = vmul.f32 %v2904, %v3019
        %v3202 = vmul.f32 %v2906, %v3020
        %v3203 = vmul.f32 %v2907, %v3020
        %v3204 = vmul.f32 %v2909, %v2971
        %v3205 = vmul.f32 %v2910, %v2971
        %v3206 = vmul.f32 %v2912, %v3021
        %v3207 = vmul.f32 %v2913, %v3021
        %v3208 = vmul.f32 %v2915, %v3022
        %v3209 = vmul.f32 %v2916, %v3022
        %v3210 = vmul.f32 %v2918, %v3023
        %v3211 = vmul.f32 %v2919, %v3023
        %v3212 = vmul.f32 %v2921, %v3024
        %v3213 = vmul.f32 %v2922, %v3024
        %v3214 = vmul.f32 %v2924, %v3025
        %v3215 = vmul.f32 %v2925, %v3025
        %v3216 = vmul.f32 %v2927, %v3026
        %v3217 = vmul.f32 %v2928, %v3026
        %v3218 = vmul.f32 %v2930, %v3027
        %v3219 = vmul.f32 %v2931, %v3027
        %3220 = vset.pattern.permute.xlu0 1
        %3221 = vperm.xlu0 %3220, %v2932
        %v3222 = vpop.permute.xlu0 %3221
        %3223 = vset.pattern.permute.xlu0 1
        %3224 = vperm.xlu0 %3223, %v2933
        %v3225 = vpop.permute.xlu0 %3224
        %3226 = vset.pattern.permute.xlu0 1
        %3227 = vperm.xlu0 %3226, %v2934
        %v3228 = vpop.permute.xlu0 %3227
        %3229 = vset.pattern.permute.xlu0 1
        %3230 = vperm.xlu0 %3229, %v2935
        %v3231 = vpop.permute.xlu0 %3230
        %3232 = vset.pattern.permute.xlu0 1
        %3233 = vperm.xlu0 %3232, %v2936
        %v3234 = vpop.permute.xlu0 %3233
        %3235 = vset.pattern.permute.xlu0 1
        %3236 = vperm.xlu0 %3235, %v2937
        %v3237 = vpop.permute.xlu0 %3236
        %3238 = vset.pattern.permute.xlu0 1
        %3239 = vperm.xlu0 %3238, %v2938
        %v3240 = vpop.permute.xlu0 %3239
        %3241 = vset.pattern.permute.xlu0 1
        %3242 = vperm.xlu0 %3241, %v2939
        %v3243 = vpop.permute.xlu0 %3242
        %v3244 = vrot.slane %v3222, 1
        %v3245 = vrot.slane %v3222, 2
        %v3246 = vrot.slane %v3222, 3
        %v3247 = vrot.slane %v3222, 4
        %v3248 = vrot.slane %v3222, 5
        %v3249 = vrot.slane %v3222, 6
        %v3250 = vrot.slane %v3222, 7
        %v3251 = vrot.slane %v3225, 1
        %v3252 = vrot.slane %v3225, 2
        %v3253 = vrot.slane %v3225, 3
        %v3254 = vrot.slane %v3225, 4
        %v3255 = vrot.slane %v3225, 5
        %v3256 = vrot.slane %v3225, 6
        %v3257 = vrot.slane %v3225, 7
        %v3258 = vrot.slane %v3228, 1
        %v3259 = vrot.slane %v3228, 2
        %v3260 = vrot.slane %v3228, 3
        %v3261 = vrot.slane %v3228, 4
        %v3262 = vrot.slane %v3228, 5
        %v3263 = vrot.slane %v3228, 6
        %v3264 = vrot.slane %v3228, 7
        %v3265 = vrot.slane %v3231, 1
        %v3266 = vrot.slane %v3231, 2
        %v3267 = vrot.slane %v3231, 3
        %v3268 = vrot.slane %v3231, 4
        %v3269 = vrot.slane %v3231, 5
        %v3270 = vrot.slane %v3231, 6
        %v3271 = vrot.slane %v3231, 7
        %v3272 = vrot.slane %v3234, 1
        %v3273 = vrot.slane %v3234, 2
        %v3274 = vrot.slane %v3234, 3
        %v3275 = vrot.slane %v3234, 4
        %v3276 = vrot.slane %v3234, 5
        %v3277 = vrot.slane %v3234, 6
        %v3278 = vrot.slane %v3234, 7
        %v3279 = vrot.slane %v3237, 1
        %v3280 = vrot.slane %v3237, 2
        %v3281 = vrot.slane %v3237, 3
        %v3282 = vrot.slane %v3237, 4
        %v3283 = vrot.slane %v3237, 5
        %v3284 = vrot.slane %v3237, 6
        %v3285 = vrot.slane %v3237, 7
        %v3286 = vrot.slane %v3240, 1
        %v3287 = vrot.slane %v3240, 2
        %v3288 = vrot.slane %v3240, 3
        %v3289 = vrot.slane %v3240, 4
        %v3290 = vrot.slane %v3240, 5
        %v3291 = vrot.slane %v3240, 6
        %v3292 = vrot.slane %v3240, 7
        %v3293 = vrot.slane %v3243, 1
        %v3294 = vrot.slane %v3243, 2
        %v3295 = vrot.slane %v3243, 3
        %v3296 = vrot.slane %v3243, 4
        %v3297 = vrot.slane %v3243, 5
        %v3298 = vrot.slane %v3243, 6
        %v3299 = vrot.slane %v3243, 7
        %v3364 = vadd.f32 %v3092, %v3222
        %v3365 = vadd.f32 %v3093, %v3222
        %v3366 = vadd.f32 %v3094, %v3244
        %v3367 = vadd.f32 %v3095, %v3244
        %v3368 = vadd.f32 %v3096, %v3245
        %v3369 = vadd.f32 %v3097, %v3245
        %v3370 = vadd.f32 %v3098, %v3246
        %v3371 = vadd.f32 %v3099, %v3246
        %v3372 = vadd.f32 %v3100, %v3247
        %v3373 = vadd.f32 %v3101, %v3247
        %v3374 = vadd.f32 %v3102, %v3248
        %v3375 = vadd.f32 %v3103, %v3248
        %v3376 = vadd.f32 %v3104, %v3249
        %v3377 = vadd.f32 %v3105, %v3249
        %v3378 = vadd.f32 %v3106, %v3250
        %v3379 = vadd.f32 %v3107, %v3250
        %v3380 = vadd.f32 %v3108, %v3225
        %v3381 = vadd.f32 %v3109, %v3225
        %v3382 = vadd.f32 %v3110, %v3251
        %v3383 = vadd.f32 %v3111, %v3251
        %v3384 = vadd.f32 %v3112, %v3252
        %v3385 = vadd.f32 %v3113, %v3252
        %v3386 = vadd.f32 %v3114, %v3253
        %v3387 = vadd.f32 %v3115, %v3253
        %v3388 = vadd.f32 %v3116, %v3254
        %v3389 = vadd.f32 %v3117, %v3254
        %v3390 = vadd.f32 %v3118, %v3255
        %v3391 = vadd.f32 %v3119, %v3255
        %v3392 = vadd.f32 %v3120, %v3256
        %v3393 = vadd.f32 %v3121, %v3256
        %v3394 = vadd.f32 %v3122, %v3257
        %v3395 = vadd.f32 %v3123, %v3257
        %v3396 = vadd.f32 %v3124, %v3228
        %v3397 = vadd.f32 %v3125, %v3228
        %v3398 = vadd.f32 %v3126, %v3258
        %v3399 = vadd.f32 %v3127, %v3258
        %v3400 = vadd.f32 %v3128, %v3259
        %v3401 = vadd.f32 %v3129, %v3259
        %v3402 = vadd.f32 %v3130, %v3260
        %v3403 = vadd.f32 %v3131, %v3260
        %v3404 = vadd.f32 %v3132, %v3261
        %v3405 = vadd.f32 %v3133, %v3261
        %v3406 = vadd.f32 %v3134, %v3262
        %v3407 = vadd.f32 %v3135, %v3262
        %v3408 = vadd.f32 %v3136, %v3263
        %v3409 = vadd.f32 %v3137, %v3263
        %v3410 = vadd.f32 %v3138, %v3264
        %v3411 = vadd.f32 %v3139, %v3264
        %v3412 = vadd.f32 %v3140, %v3231
        %v3413 = vadd.f32 %v3141, %v3231
        %v3414 = vadd.f32 %v3142, %v3265
        %v3415 = vadd.f32 %v3143, %v3265
        %v3416 = vadd.f32 %v3144, %v3266
        %v3417 = vadd.f32 %v3145, %v3266
        %v3418 = vadd.f32 %v3146, %v3267
        %v3419 = vadd.f32 %v3147, %v3267
        %v3420 = vadd.f32 %v3148, %v3268
        %v3421 = vadd.f32 %v3149, %v3268
        %v3422 = vadd.f32 %v3150, %v3269
        %v3423 = vadd.f32 %v3151, %v3269
        %v3424 = vadd.f32 %v3152, %v3270
        %v3425 = vadd.f32 %v3153, %v3270
        %v3426 = vadd.f32 %v3154, %v3271
        %v3427 = vadd.f32 %v3155, %v3271
        %v3428 = vadd.f32 %v3156, %v3234
        %v3429 = vadd.f32 %v3157, %v3234
        %v3430 = vadd.f32 %v3158, %v3272
        %v3431 = vadd.f32 %v3159, %v3272
        %v3432 = vadd.f32 %v3160, %v3273
        %v3433 = vadd.f32 %v3161, %v3273
        %v3434 = vadd.f32 %v3162, %v3274
        %v3435 = vadd.f32 %v3163, %v3274
        %v3436 = vadd.f32 %v3164, %v3275
        %v3437 = vadd.f32 %v3165, %v3275
        %v3438 = vadd.f32 %v3166, %v3276
        %v3439 = vadd.f32 %v3167, %v3276
        %v3440 = vadd.f32 %v3168, %v3277
        %v3441 = vadd.f32 %v3169, %v3277
        %v3442 = vadd.f32 %v3170, %v3278
        %v3443 = vadd.f32 %v3171, %v3278
        %v3444 = vadd.f32 %v3172, %v3237
        %v3445 = vadd.f32 %v3173, %v3237
        %v3446 = vadd.f32 %v3174, %v3279
        %v3447 = vadd.f32 %v3175, %v3279
        %v3448 = vadd.f32 %v3176, %v3280
        %v3449 = vadd.f32 %v3177, %v3280
        %v3450 = vadd.f32 %v3178, %v3281
        %v3451 = vadd.f32 %v3179, %v3281
        %v3452 = vadd.f32 %v3180, %v3282
        %v3453 = vadd.f32 %v3181, %v3282
        %v3454 = vadd.f32 %v3182, %v3283
        %v3455 = vadd.f32 %v3183, %v3283
        %v3456 = vadd.f32 %v3184, %v3284
        %v3457 = vadd.f32 %v3185, %v3284
        %v3458 = vadd.f32 %v3186, %v3285
        %v3459 = vadd.f32 %v3187, %v3285
        %v3460 = vadd.f32 %v3188, %v3240
        %v3461 = vadd.f32 %v3189, %v3240
        %v3462 = vadd.f32 %v3190, %v3286
        %v3463 = vadd.f32 %v3191, %v3286
        %v3464 = vadd.f32 %v3192, %v3287
        %v3465 = vadd.f32 %v3193, %v3287
        %v3466 = vadd.f32 %v3194, %v3288
        %v3467 = vadd.f32 %v3195, %v3288
        %v3468 = vadd.f32 %v3196, %v3289
        %v3469 = vadd.f32 %v3197, %v3289
        %v3470 = vadd.f32 %v3198, %v3290
        %v3471 = vadd.f32 %v3199, %v3290
        %v3472 = vadd.f32 %v3200, %v3291
        %v3473 = vadd.f32 %v3201, %v3291
        %v3474 = vadd.f32 %v3202, %v3292
        %v3475 = vadd.f32 %v3203, %v3292
        %v3476 = vadd.f32 %v3204, %v3243
        %v3477 = vadd.f32 %v3205, %v3243
        %v3478 = vadd.f32 %v3206, %v3293
        %v3479 = vadd.f32 %v3207, %v3293
        %v3480 = vadd.f32 %v3208, %v3294
        %v3481 = vadd.f32 %v3209, %v3294
        %v3482 = vadd.f32 %v3210, %v3295
        %v3483 = vadd.f32 %v3211, %v3295
        %v3484 = vadd.f32 %v3212, %v3296
        %v3485 = vadd.f32 %v3213, %v3296
        %v3486 = vadd.f32 %v3214, %v3297
        %v3487 = vadd.f32 %v3215, %v3297
        %v3488 = vadd.f32 %v3216, %v3298
        %v3489 = vadd.f32 %v3217, %v3298
        %v3490 = vadd.f32 %v3218, %v3299
        %v3491 = vadd.f32 %v3219, %v3299
        %v3492 = vxor.u32 %v3364, 2147483648
        %v3493 = vxor.u32 %v3365, 2147483648
        %v3494 = vxor.u32 %v3366, 2147483648
        %v3495 = vxor.u32 %v3367, 2147483648
        %v3496 = vxor.u32 %v3368, 2147483648
        %v3497 = vxor.u32 %v3369, 2147483648
        %v3498 = vxor.u32 %v3370, 2147483648
        %v3499 = vxor.u32 %v3371, 2147483648
        %v3500 = vxor.u32 %v3372, 2147483648
        %v3501 = vxor.u32 %v3373, 2147483648
        %v3502 = vxor.u32 %v3374, 2147483648
        %v3503 = vxor.u32 %v3375, 2147483648
        %v3504 = vxor.u32 %v3376, 2147483648
        %v3505 = vxor.u32 %v3377, 2147483648
        %v3506 = vxor.u32 %v3378, 2147483648
        %v3507 = vxor.u32 %v3379, 2147483648
        %v3508 = vxor.u32 %v3380, 2147483648
        %v3509 = vxor.u32 %v3381, 2147483648
        %v3510 = vxor.u32 %v3382, 2147483648
        %v3511 = vxor.u32 %v3383, 2147483648
        %v3512 = vxor.u32 %v3384, 2147483648
        %v3513 = vxor.u32 %v3385, 2147483648
        %v3514 = vxor.u32 %v3386, 2147483648
        %v3515 = vxor.u32 %v3387, 2147483648
        %v3516 = vxor.u32 %v3388, 2147483648
        %v3517 = vxor.u32 %v3389, 2147483648
        %v3518 = vxor.u32 %v3390, 2147483648
        %v3519 = vxor.u32 %v3391, 2147483648
        %v3520 = vxor.u32 %v3392, 2147483648
        %v3521 = vxor.u32 %v3393, 2147483648
        %v3522 = vxor.u32 %v3394, 2147483648
        %v3523 = vxor.u32 %v3395, 2147483648
        %v3524 = vxor.u32 %v3396, 2147483648
        %v3525 = vxor.u32 %v3397, 2147483648
        %v3526 = vxor.u32 %v3398, 2147483648
        %v3527 = vxor.u32 %v3399, 2147483648
        %v3528 = vxor.u32 %v3400, 2147483648
        %v3529 = vxor.u32 %v3401, 2147483648
        %v3530 = vxor.u32 %v3402, 2147483648
        %v3531 = vxor.u32 %v3403, 2147483648
        %v3532 = vxor.u32 %v3404, 2147483648
        %v3533 = vxor.u32 %v3405, 2147483648
        %v3534 = vxor.u32 %v3406, 2147483648
        %v3535 = vxor.u32 %v3407, 2147483648
        %v3536 = vxor.u32 %v3408, 2147483648
        %v3537 = vxor.u32 %v3409, 2147483648
        %v3538 = vxor.u32 %v3410, 2147483648
        %v3539 = vxor.u32 %v3411, 2147483648
        %v3540 = vxor.u32 %v3412, 2147483648
        %v3541 = vxor.u32 %v3413, 2147483648
        %v3542 = vxor.u32 %v3414, 2147483648
        %v3543 = vxor.u32 %v3415, 2147483648
        %v3544 = vxor.u32 %v3416, 2147483648
        %v3545 = vxor.u32 %v3417, 2147483648
        %v3546 = vxor.u32 %v3418, 2147483648
        %v3547 = vxor.u32 %v3419, 2147483648
        %v3548 = vxor.u32 %v3420, 2147483648
        %v3549 = vxor.u32 %v3421, 2147483648
        %v3550 = vxor.u32 %v3422, 2147483648
        %v3551 = vxor.u32 %v3423, 2147483648
        %v3552 = vxor.u32 %v3424, 2147483648
        %v3553 = vxor.u32 %v3425, 2147483648
        %v3554 = vxor.u32 %v3426, 2147483648
        %v3555 = vxor.u32 %v3427, 2147483648
        %v3556 = vxor.u32 %v3428, 2147483648
        %v3557 = vxor.u32 %v3429, 2147483648
        %v3558 = vxor.u32 %v3430, 2147483648
        %v3559 = vxor.u32 %v3431, 2147483648
        %v3560 = vxor.u32 %v3432, 2147483648
        %v3561 = vxor.u32 %v3433, 2147483648
        %v3562 = vxor.u32 %v3434, 2147483648
        %v3563 = vxor.u32 %v3435, 2147483648
        %v3564 = vxor.u32 %v3436, 2147483648
        %v3565 = vxor.u32 %v3437, 2147483648
        %v3566 = vxor.u32 %v3438, 2147483648
        %v3567 = vxor.u32 %v3439, 2147483648
        %v3568 = vxor.u32 %v3440, 2147483648
        %v3569 = vxor.u32 %v3441, 2147483648
        %v3570 = vxor.u32 %v3442, 2147483648
        %v3571 = vxor.u32 %v3443, 2147483648
        %v3572 = vxor.u32 %v3444, 2147483648
        %v3573 = vxor.u32 %v3445, 2147483648
        %v3574 = vxor.u32 %v3446, 2147483648
        %v3575 = vxor.u32 %v3447, 2147483648
        %v3576 = vxor.u32 %v3448, 2147483648
        %v3577 = vxor.u32 %v3449, 2147483648
        %v3578 = vxor.u32 %v3450, 2147483648
        %v3579 = vxor.u32 %v3451, 2147483648
        %v3580 = vxor.u32 %v3452, 2147483648
        %v3581 = vxor.u32 %v3453, 2147483648
        %v3582 = vxor.u32 %v3454, 2147483648
        %v3583 = vxor.u32 %v3455, 2147483648
        %v3584 = vxor.u32 %v3456, 2147483648
        %v3585 = vxor.u32 %v3457, 2147483648
        %v3586 = vxor.u32 %v3458, 2147483648
        %v3587 = vxor.u32 %v3459, 2147483648
        %v3588 = vxor.u32 %v3460, 2147483648
        %v3589 = vxor.u32 %v3461, 2147483648
        %v3590 = vxor.u32 %v3462, 2147483648
        %v3591 = vxor.u32 %v3463, 2147483648
        %v3592 = vxor.u32 %v3464, 2147483648
        %v3593 = vxor.u32 %v3465, 2147483648
        %v3594 = vxor.u32 %v3466, 2147483648
        %v3595 = vxor.u32 %v3467, 2147483648
        %v3596 = vxor.u32 %v3468, 2147483648
        %v3597 = vxor.u32 %v3469, 2147483648
        %v3598 = vxor.u32 %v3470, 2147483648
        %v3599 = vxor.u32 %v3471, 2147483648
        %v3600 = vxor.u32 %v3472, 2147483648
        %v3601 = vxor.u32 %v3473, 2147483648
        %v3602 = vxor.u32 %v3474, 2147483648
        %v3603 = vxor.u32 %v3475, 2147483648
        %v3604 = vxor.u32 %v3476, 2147483648
        %v3605 = vxor.u32 %v3477, 2147483648
        %v3606 = vxor.u32 %v3478, 2147483648
        %v3607 = vxor.u32 %v3479, 2147483648
        %v3608 = vxor.u32 %v3480, 2147483648
        %v3609 = vxor.u32 %v3481, 2147483648
        %v3610 = vxor.u32 %v3482, 2147483648
        %v3611 = vxor.u32 %v3483, 2147483648
        %v3612 = vxor.u32 %v3484, 2147483648
        %v3613 = vxor.u32 %v3485, 2147483648
        %v3614 = vxor.u32 %v3486, 2147483648
        %v3615 = vxor.u32 %v3487, 2147483648
        %v3616 = vxor.u32 %v3488, 2147483648
        %v3617 = vxor.u32 %v3489, 2147483648
        %v3618 = vxor.u32 %v3490, 2147483648
        %v3619 = vxor.u32 %v3491, 2147483648
        %v3620 = vmul.f32 %v3492, 1.442695
        %v3621 = vpow.pop %v3620
        %v3622 = vmul.f32 %v3493, 1.442695
        %v3623 = vpow.pop %v3622
        %v3624 = vmul.f32 %v3494, 1.442695
        %v3625 = vpow.pop %v3624
        %v3626 = vmul.f32 %v3495, 1.442695
        %v3627 = vpow.pop %v3626
        %v3628 = vmul.f32 %v3496, 1.442695
        %v3629 = vpow.pop %v3628
        %v3630 = vmul.f32 %v3497, 1.442695
        %v3631 = vpow.pop %v3630
        %v3632 = vmul.f32 %v3498, 1.442695
        %v3633 = vpow.pop %v3632
        %v3634 = vmul.f32 %v3499, 1.442695
        %v3635 = vpow.pop %v3634
        %v3636 = vmul.f32 %v3500, 1.442695
        %v3637 = vpow.pop %v3636
        %v3638 = vmul.f32 %v3501, 1.442695
        %v3639 = vpow.pop %v3638
        %v3640 = vmul.f32 %v3502, 1.442695
        %v3641 = vpow.pop %v3640
        %v3642 = vmul.f32 %v3503, 1.442695
        %v3643 = vpow.pop %v3642
        %v3644 = vmul.f32 %v3504, 1.442695
        %v3645 = vpow.pop %v3644
        %v3646 = vmul.f32 %v3505, 1.442695
        %v3647 = vpow.pop %v3646
        %v3648 = vmul.f32 %v3506, 1.442695
        %v3649 = vpow.pop %v3648
        %v3650 = vmul.f32 %v3507, 1.442695
        %v3651 = vpow.pop %v3650
        %v3652 = vmul.f32 %v3508, 1.442695
        %v3653 = vpow.pop %v3652
        %v3654 = vmul.f32 %v3509, 1.442695
        %v3655 = vpow.pop %v3654
        %v3656 = vmul.f32 %v3510, 1.442695
        %v3657 = vpow.pop %v3656
        %v3658 = vmul.f32 %v3511, 1.442695
        %v3659 = vpow.pop %v3658
        %v3660 = vmul.f32 %v3512, 1.442695
        %v3661 = vpow.pop %v3660
        %v3662 = vmul.f32 %v3513, 1.442695
        %v3663 = vpow.pop %v3662
        %v3664 = vmul.f32 %v3514, 1.442695
        %v3665 = vpow.pop %v3664
        %v3666 = vmul.f32 %v3515, 1.442695
        %v3667 = vpow.pop %v3666
        %v3668 = vmul.f32 %v3516, 1.442695
        %v3669 = vpow.pop %v3668
        %v3670 = vmul.f32 %v3517, 1.442695
        %v3671 = vpow.pop %v3670
        %v3672 = vmul.f32 %v3518, 1.442695
        %v3673 = vpow.pop %v3672
        %v3674 = vmul.f32 %v3519, 1.442695
        %v3675 = vpow.pop %v3674
        %v3676 = vmul.f32 %v3520, 1.442695
        %v3677 = vpow.pop %v3676
        %v3678 = vmul.f32 %v3521, 1.442695
        %v3679 = vpow.pop %v3678
        %v3680 = vmul.f32 %v3522, 1.442695
        %v3681 = vpow.pop %v3680
        %v3682 = vmul.f32 %v3523, 1.442695
        %v3683 = vpow.pop %v3682
        %v3684 = vmul.f32 %v3524, 1.442695
        %v3685 = vpow.pop %v3684
        %v3686 = vmul.f32 %v3525, 1.442695
        %v3687 = vpow.pop %v3686
        %v3688 = vmul.f32 %v3526, 1.442695
        %v3689 = vpow.pop %v3688
        %v3690 = vmul.f32 %v3527, 1.442695
        %v3691 = vpow.pop %v3690
        %v3692 = vmul.f32 %v3528, 1.442695
        %v3693 = vpow.pop %v3692
        %v3694 = vmul.f32 %v3529, 1.442695
        %v3695 = vpow.pop %v3694
        %v3696 = vmul.f32 %v3530, 1.442695
        %v3697 = vpow.pop %v3696
        %v3698 = vmul.f32 %v3531, 1.442695
        %v3699 = vpow.pop %v3698
        %v3700 = vmul.f32 %v3532, 1.442695
        %v3701 = vpow.pop %v3700
        %v3702 = vmul.f32 %v3533, 1.442695
        %v3703 = vpow.pop %v3702
        %v3704 = vmul.f32 %v3534, 1.442695
        %v3705 = vpow.pop %v3704
        %v3706 = vmul.f32 %v3535, 1.442695
        %v3707 = vpow.pop %v3706
        %v3708 = vmul.f32 %v3536, 1.442695
        %v3709 = vpow.pop %v3708
        %v3710 = vmul.f32 %v3537, 1.442695
        %v3711 = vpow.pop %v3710
        %v3712 = vmul.f32 %v3538, 1.442695
        %v3713 = vpow.pop %v3712
        %v3714 = vmul.f32 %v3539, 1.442695
        %v3715 = vpow.pop %v3714
        %v3716 = vmul.f32 %v3540, 1.442695
        %v3717 = vpow.pop %v3716
        %v3718 = vmul.f32 %v3541, 1.442695
        %v3719 = vpow.pop %v3718
        %v3720 = vmul.f32 %v3542, 1.442695
        %v3721 = vpow.pop %v3720
        %v3722 = vmul.f32 %v3543, 1.442695
        %v3723 = vpow.pop %v3722
        %v3724 = vmul.f32 %v3544, 1.442695
        %v3725 = vpow.pop %v3724
        %v3726 = vmul.f32 %v3545, 1.442695
        %v3727 = vpow.pop %v3726
        %v3728 = vmul.f32 %v3546, 1.442695
        %v3729 = vpow.pop %v3728
        %v3730 = vmul.f32 %v3547, 1.442695
        %v3731 = vpow.pop %v3730
        %v3732 = vmul.f32 %v3548, 1.442695
        %v3733 = vpow.pop %v3732
        %v3734 = vmul.f32 %v3549, 1.442695
        %v3735 = vpow.pop %v3734
        %v3736 = vmul.f32 %v3550, 1.442695
        %v3737 = vpow.pop %v3736
        %v3738 = vmul.f32 %v3551, 1.442695
        %v3739 = vpow.pop %v3738
        %v3740 = vmul.f32 %v3552, 1.442695
        %v3741 = vpow.pop %v3740
        %v3742 = vmul.f32 %v3553, 1.442695
        %v3743 = vpow.pop %v3742
        %v3744 = vmul.f32 %v3554, 1.442695
        %v3745 = vpow.pop %v3744
        %v3746 = vmul.f32 %v3555, 1.442695
        %v3747 = vpow.pop %v3746
        %v3748 = vmul.f32 %v3556, 1.442695
        %v3749 = vpow.pop %v3748
        %v3750 = vmul.f32 %v3557, 1.442695
        %v3751 = vpow.pop %v3750
        %v3752 = vmul.f32 %v3558, 1.442695
        %v3753 = vpow.pop %v3752
        %v3754 = vmul.f32 %v3559, 1.442695
        %v3755 = vpow.pop %v3754
        %v3756 = vmul.f32 %v3560, 1.442695
        %v3757 = vpow.pop %v3756
        %v3758 = vmul.f32 %v3561, 1.442695
        %v3759 = vpow.pop %v3758
        %v3760 = vmul.f32 %v3562, 1.442695
        %v3761 = vpow.pop %v3760
        %v3762 = vmul.f32 %v3563, 1.442695
        %v3763 = vpow.pop %v3762
        %v3764 = vmul.f32 %v3564, 1.442695
        %v3765 = vpow.pop %v3764
        %v3766 = vmul.f32 %v3565, 1.442695
        %v3767 = vpow.pop %v3766
        %v3768 = vmul.f32 %v3566, 1.442695
        %v3769 = vpow.pop %v3768
        %v3770 = vmul.f32 %v3567, 1.442695
        %v3771 = vpow.pop %v3770
        %v3772 = vmul.f32 %v3568, 1.442695
        %v3773 = vpow.pop %v3772
        %v3774 = vmul.f32 %v3569, 1.442695
        %v3775 = vpow.pop %v3774
        %v3776 = vmul.f32 %v3570, 1.442695
        %v3777 = vpow.pop %v3776
        %v3778 = vmul.f32 %v3571, 1.442695
        %v3779 = vpow.pop %v3778
        %v3780 = vmul.f32 %v3572, 1.442695
        %v3781 = vpow.pop %v3780
        %v3782 = vmul.f32 %v3573, 1.442695
        %v3783 = vpow.pop %v3782
        %v3784 = vmul.f32 %v3574, 1.442695
        %v3785 = vpow.pop %v3784
        %v3786 = vmul.f32 %v3575, 1.442695
        %v3787 = vpow.pop %v3786
        %v3788 = vmul.f32 %v3576, 1.442695
        %v3789 = vpow.pop %v3788
        %v3790 = vmul.f32 %v3577, 1.442695
        %v3791 = vpow.pop %v3790
        %v3792 = vmul.f32 %v3578, 1.442695
        %v3793 = vpow.pop %v3792
        %v3794 = vmul.f32 %v3579, 1.442695
        %v3795 = vpow.pop %v3794
        %v3796 = vmul.f32 %v3580, 1.442695
        %v3797 = vpow.pop %v3796
        %v3798 = vmul.f32 %v3581, 1.442695
        %v3799 = vpow.pop %v3798
        %v3800 = vmul.f32 %v3582, 1.442695
        %v3801 = vpow.pop %v3800
        %v3802 = vmul.f32 %v3583, 1.442695
        %v3803 = vpow.pop %v3802
        %v3804 = vmul.f32 %v3584, 1.442695
        %v3805 = vpow.pop %v3804
        %v3806 = vmul.f32 %v3585, 1.442695
        %v3807 = vpow.pop %v3806
        %v3808 = vmul.f32 %v3586, 1.442695
        %v3809 = vpow.pop %v3808
        %v3810 = vmul.f32 %v3587, 1.442695
        %v3811 = vpow.pop %v3810
        %v3812 = vmul.f32 %v3588, 1.442695
        %v3813 = vpow.pop %v3812
        %v3814 = vmul.f32 %v3589, 1.442695
        %v3815 = vpow.pop %v3814
        %v3816 = vmul.f32 %v3590, 1.442695
        %v3817 = vpow.pop %v3816
        %v3818 = vmul.f32 %v3591, 1.442695
        %v3819 = vpow.pop %v3818
        %v3820 = vmul.f32 %v3592, 1.442695
        %v3821 = vpow.pop %v3820
        %v3822 = vmul.f32 %v3593, 1.442695
        %v3823 = vpow.pop %v3822
        %v3824 = vmul.f32 %v3594, 1.442695
        %v3825 = vpow.pop %v3824
        %v3826 = vmul.f32 %v3595, 1.442695
        %v3827 = vpow.pop %v3826
        %v3828 = vmul.f32 %v3596, 1.442695
        %v3829 = vpow.pop %v3828
        %v3830 = vmul.f32 %v3597, 1.442695
        %v3831 = vpow.pop %v3830
        %v3832 = vmul.f32 %v3598, 1.442695
        %v3833 = vpow.pop %v3832
        %v3834 = vmul.f32 %v3599, 1.442695
        %v3835 = vpow.pop %v3834
        %v3836 = vmul.f32 %v3600, 1.442695
        %v3837 = vpow.pop %v3836
        %v3838 = vmul.f32 %v3601, 1.442695
        %v3839 = vpow.pop %v3838
        %v3840 = vmul.f32 %v3602, 1.442695
        %v3841 = vpow.pop %v3840
        %v3842 = vmul.f32 %v3603, 1.442695
        %v3843 = vpow.pop %v3842
        %v3844 = vmul.f32 %v3604, 1.442695
        %v3845 = vpow.pop %v3844
        %v3846 = vmul.f32 %v3605, 1.442695
        %v3847 = vpow.pop %v3846
        %v3848 = vmul.f32 %v3606, 1.442695
        %v3849 = vpow.pop %v3848
        %v3850 = vmul.f32 %v3607, 1.442695
        %v3851 = vpow.pop %v3850
        %v3852 = vmul.f32 %v3608, 1.442695
        %v3853 = vpow.pop %v3852
        %v3854 = vmul.f32 %v3609, 1.442695
        %v3855 = vpow.pop %v3854
        %v3856 = vmul.f32 %v3610, 1.442695
        %v3857 = vpow.pop %v3856
        %v3858 = vmul.f32 %v3611, 1.442695
        %v3859 = vpow.pop %v3858
        %v3860 = vmul.f32 %v3612, 1.442695
        %v3861 = vpow.pop %v3860
        %v3862 = vmul.f32 %v3613, 1.442695
        %v3863 = vpow.pop %v3862
        %v3864 = vmul.f32 %v3614, 1.442695
        %v3865 = vpow.pop %v3864
        %v3866 = vmul.f32 %v3615, 1.442695
        %v3867 = vpow.pop %v3866
        %v3868 = vmul.f32 %v3616, 1.442695
        %v3869 = vpow.pop %v3868
        %v3870 = vmul.f32 %v3617, 1.442695
        %v3871 = vpow.pop %v3870
        %v3872 = vmul.f32 %v3618, 1.442695
        %v3873 = vpow.pop %v3872
        %v3874 = vmul.f32 %v3619, 1.442695
        %v3875 = vpow.pop %v3874
        %v3876 = vadd.f32 %v3621, 1.0
        %v3877 = vadd.f32 %v3623, 1.0
        %v3878 = vadd.f32 %v3625, 1.0
        %v3879 = vadd.f32 %v3627, 1.0
        %v3880 = vadd.f32 %v3629, 1.0
        %v3881 = vadd.f32 %v3631, 1.0
        %v3882 = vadd.f32 %v3633, 1.0
        %v3883 = vadd.f32 %v3635, 1.0
        %v3884 = vadd.f32 %v3637, 1.0
        %v3885 = vadd.f32 %v3639, 1.0
        %v3886 = vadd.f32 %v3641, 1.0
        %v3887 = vadd.f32 %v3643, 1.0
        %v3888 = vadd.f32 %v3645, 1.0
        %v3889 = vadd.f32 %v3647, 1.0
        %v3890 = vadd.f32 %v3649, 1.0
        %v3891 = vadd.f32 %v3651, 1.0
        %v3892 = vadd.f32 %v3653, 1.0
        %v3893 = vadd.f32 %v3655, 1.0
        %v3894 = vadd.f32 %v3657, 1.0
        %v3895 = vadd.f32 %v3659, 1.0
        %v3896 = vadd.f32 %v3661, 1.0
        %v3897 = vadd.f32 %v3663, 1.0
        %v3898 = vadd.f32 %v3665, 1.0
        %v3899 = vadd.f32 %v3667, 1.0
        %v3900 = vadd.f32 %v3669, 1.0
        %v3901 = vadd.f32 %v3671, 1.0
        %v3902 = vadd.f32 %v3673, 1.0
        %v3903 = vadd.f32 %v3675, 1.0
        %v3904 = vadd.f32 %v3677, 1.0
        %v3905 = vadd.f32 %v3679, 1.0
        %v3906 = vadd.f32 %v3681, 1.0
        %v3907 = vadd.f32 %v3683, 1.0
        %v3908 = vadd.f32 %v3685, 1.0
        %v3909 = vadd.f32 %v3687, 1.0
        %v3910 = vadd.f32 %v3689, 1.0
        %v3911 = vadd.f32 %v3691, 1.0
        %v3912 = vadd.f32 %v3693, 1.0
        %v3913 = vadd.f32 %v3695, 1.0
        %v3914 = vadd.f32 %v3697, 1.0
        %v3915 = vadd.f32 %v3699, 1.0
        %v3916 = vadd.f32 %v3701, 1.0
        %v3917 = vadd.f32 %v3703, 1.0
        %v3918 = vadd.f32 %v3705, 1.0
        %v3919 = vadd.f32 %v3707, 1.0
        %v3920 = vadd.f32 %v3709, 1.0
        %v3921 = vadd.f32 %v3711, 1.0
        %v3922 = vadd.f32 %v3713, 1.0
        %v3923 = vadd.f32 %v3715, 1.0
        %v3924 = vadd.f32 %v3717, 1.0
        %v3925 = vadd.f32 %v3719, 1.0
        %v3926 = vadd.f32 %v3721, 1.0
        %v3927 = vadd.f32 %v3723, 1.0
        %v3928 = vadd.f32 %v3725, 1.0
        %v3929 = vadd.f32 %v3727, 1.0
        %v3930 = vadd.f32 %v3729, 1.0
        %v3931 = vadd.f32 %v3731, 1.0
        %v3932 = vadd.f32 %v3733, 1.0
        %v3933 = vadd.f32 %v3735, 1.0
        %v3934 = vadd.f32 %v3737, 1.0
        %v3935 = vadd.f32 %v3739, 1.0
        %v3936 = vadd.f32 %v3741, 1.0
        %v3937 = vadd.f32 %v3743, 1.0
        %v3938 = vadd.f32 %v3745, 1.0
        %v3939 = vadd.f32 %v3747, 1.0
        %v3940 = vadd.f32 %v3749, 1.0
        %v3941 = vadd.f32 %v3751, 1.0
        %v3942 = vadd.f32 %v3753, 1.0
        %v3943 = vadd.f32 %v3755, 1.0
        %v3944 = vadd.f32 %v3757, 1.0
        %v3945 = vadd.f32 %v3759, 1.0
        %v3946 = vadd.f32 %v3761, 1.0
        %v3947 = vadd.f32 %v3763, 1.0
        %v3948 = vadd.f32 %v3765, 1.0
        %v3949 = vadd.f32 %v3767, 1.0
        %v3950 = vadd.f32 %v3769, 1.0
        %v3951 = vadd.f32 %v3771, 1.0
        %v3952 = vadd.f32 %v3773, 1.0
        %v3953 = vadd.f32 %v3775, 1.0
        %v3954 = vadd.f32 %v3777, 1.0
        %v3955 = vadd.f32 %v3779, 1.0
        %v3956 = vadd.f32 %v3781, 1.0
        %v3957 = vadd.f32 %v3783, 1.0
        %v3958 = vadd.f32 %v3785, 1.0
        %v3959 = vadd.f32 %v3787, 1.0
        %v3960 = vadd.f32 %v3789, 1.0
        %v3961 = vadd.f32 %v3791, 1.0
        %v3962 = vadd.f32 %v3793, 1.0
        %v3963 = vadd.f32 %v3795, 1.0
        %v3964 = vadd.f32 %v3797, 1.0
        %v3965 = vadd.f32 %v3799, 1.0
        %v3966 = vadd.f32 %v3801, 1.0
        %v3967 = vadd.f32 %v3803, 1.0
        %v3968 = vadd.f32 %v3805, 1.0
        %v3969 = vadd.f32 %v3807, 1.0
        %v3970 = vadd.f32 %v3809, 1.0
        %v3971 = vadd.f32 %v3811, 1.0
        %v3972 = vadd.f32 %v3813, 1.0
        %v3973 = vadd.f32 %v3815, 1.0
        %v3974 = vadd.f32 %v3817, 1.0
        %v3975 = vadd.f32 %v3819, 1.0
        %v3976 = vadd.f32 %v3821, 1.0
        %v3977 = vadd.f32 %v3823, 1.0
        %v3978 = vadd.f32 %v3825, 1.0
        %v3979 = vadd.f32 %v3827, 1.0
        %v3980 = vadd.f32 %v3829, 1.0
        %v3981 = vadd.f32 %v3831, 1.0
        %v3982 = vadd.f32 %v3833, 1.0
        %v3983 = vadd.f32 %v3835, 1.0
        %v3984 = vadd.f32 %v3837, 1.0
        %v3985 = vadd.f32 %v3839, 1.0
        %v3986 = vadd.f32 %v3841, 1.0
        %v3987 = vadd.f32 %v3843, 1.0
        %v3988 = vadd.f32 %v3845, 1.0
        %v3989 = vadd.f32 %v3847, 1.0
        %v3990 = vadd.f32 %v3849, 1.0
        %v3991 = vadd.f32 %v3851, 1.0
        %v3992 = vadd.f32 %v3853, 1.0
        %v3993 = vadd.f32 %v3855, 1.0
        %v3994 = vadd.f32 %v3857, 1.0
        %v3995 = vadd.f32 %v3859, 1.0
        %v3996 = vadd.f32 %v3861, 1.0
        %v3997 = vadd.f32 %v3863, 1.0
        %v3998 = vadd.f32 %v3865, 1.0
        %v3999 = vadd.f32 %v3867, 1.0
        %v4000 = vadd.f32 %v3869, 1.0
        %v4001 = vadd.f32 %v3871, 1.0
        %v4002 = vadd.f32 %v3873, 1.0
        %v4003 = vadd.f32 %v3875, 1.0
        %v4004 = vrcp.pop %v3876
        %v4005 = vmul.f32 1.0, %v4004
        %v4006 = vrcp.pop %v3877
        %v4007 = vmul.f32 1.0, %v4006
        %v4008 = vrcp.pop %v3878
        %v4009 = vmul.f32 1.0, %v4008
        %v4010 = vrcp.pop %v3879
        %v4011 = vmul.f32 1.0, %v4010
        %v4012 = vrcp.pop %v3880
        %v4013 = vmul.f32 1.0, %v4012
        %v4014 = vrcp.pop %v3881
        %v4015 = vmul.f32 1.0, %v4014
        %v4016 = vrcp.pop %v3882
        %v4017 = vmul.f32 1.0, %v4016
        %v4018 = vrcp.pop %v3883
        %v4019 = vmul.f32 1.0, %v4018
        %v4020 = vrcp.pop %v3884
        %v4021 = vmul.f32 1.0, %v4020
        %v4022 = vrcp.pop %v3885
        %v4023 = vmul.f32 1.0, %v4022
        %v4024 = vrcp.pop %v3886
        %v4025 = vmul.f32 1.0, %v4024
        %v4026 = vrcp.pop %v3887
        %v4027 = vmul.f32 1.0, %v4026
        %v4028 = vrcp.pop %v3888
        %v4029 = vmul.f32 1.0, %v4028
        %v4030 = vrcp.pop %v3889
        %v4031 = vmul.f32 1.0, %v4030
        %v4032 = vrcp.pop %v3890
        %v4033 = vmul.f32 1.0, %v4032
        %v4034 = vrcp.pop %v3891
        %v4035 = vmul.f32 1.0, %v4034
        %v4036 = vrcp.pop %v3892
        %v4037 = vmul.f32 1.0, %v4036
        %v4038 = vrcp.pop %v3893
        %v4039 = vmul.f32 1.0, %v4038
        %v4040 = vrcp.pop %v3894
        %v4041 = vmul.f32 1.0, %v4040
        %v4042 = vrcp.pop %v3895
        %v4043 = vmul.f32 1.0, %v4042
        %v4044 = vrcp.pop %v3896
        %v4045 = vmul.f32 1.0, %v4044
        %v4046 = vrcp.pop %v3897
        %v4047 = vmul.f32 1.0, %v4046
        %v4048 = vrcp.pop %v3898
        %v4049 = vmul.f32 1.0, %v4048
        %v4050 = vrcp.pop %v3899
        %v4051 = vmul.f32 1.0, %v4050
        %v4052 = vrcp.pop %v3900
        %v4053 = vmul.f32 1.0, %v4052
        %v4054 = vrcp.pop %v3901
        %v4055 = vmul.f32 1.0, %v4054
        %v4056 = vrcp.pop %v3902
        %v4057 = vmul.f32 1.0, %v4056
        %v4058 = vrcp.pop %v3903
        %v4059 = vmul.f32 1.0, %v4058
        %v4060 = vrcp.pop %v3904
        %v4061 = vmul.f32 1.0, %v4060
        %v4062 = vrcp.pop %v3905
        %v4063 = vmul.f32 1.0, %v4062
        %v4064 = vrcp.pop %v3906
        %v4065 = vmul.f32 1.0, %v4064
        %v4066 = vrcp.pop %v3907
        %v4067 = vmul.f32 1.0, %v4066
        %v4068 = vrcp.pop %v3908
        %v4069 = vmul.f32 1.0, %v4068
        %v4070 = vrcp.pop %v3909
        %v4071 = vmul.f32 1.0, %v4070
        %v4072 = vrcp.pop %v3910
        %v4073 = vmul.f32 1.0, %v4072
        %v4074 = vrcp.pop %v3911
        %v4075 = vmul.f32 1.0, %v4074
        %v4076 = vrcp.pop %v3912
        %v4077 = vmul.f32 1.0, %v4076
        %v4078 = vrcp.pop %v3913
        %v4079 = vmul.f32 1.0, %v4078
        %v4080 = vrcp.pop %v3914
        %v4081 = vmul.f32 1.0, %v4080
        %v4082 = vrcp.pop %v3915
        %v4083 = vmul.f32 1.0, %v4082
        %v4084 = vrcp.pop %v3916
        %v4085 = vmul.f32 1.0, %v4084
        %v4086 = vrcp.pop %v3917
        %v4087 = vmul.f32 1.0, %v4086
        %v4088 = vrcp.pop %v3918
        %v4089 = vmul.f32 1.0, %v4088
        %v4090 = vrcp.pop %v3919
        %v4091 = vmul.f32 1.0, %v4090
        %v4092 = vrcp.pop %v3920
        %v4093 = vmul.f32 1.0, %v4092
        %v4094 = vrcp.pop %v3921
        %v4095 = vmul.f32 1.0, %v4094
        %v4096 = vrcp.pop %v3922
        %v4097 = vmul.f32 1.0, %v4096
        %v4098 = vrcp.pop %v3923
        %v4099 = vmul.f32 1.0, %v4098
        %v4100 = vrcp.pop %v3924
        %v4101 = vmul.f32 1.0, %v4100
        %v4102 = vrcp.pop %v3925
        %v4103 = vmul.f32 1.0, %v4102
        %v4104 = vrcp.pop %v3926
        %v4105 = vmul.f32 1.0, %v4104
        %v4106 = vrcp.pop %v3927
        %v4107 = vmul.f32 1.0, %v4106
        %v4108 = vrcp.pop %v3928
        %v4109 = vmul.f32 1.0, %v4108
        %v4110 = vrcp.pop %v3929
        %v4111 = vmul.f32 1.0, %v4110
        %v4112 = vrcp.pop %v3930
        %v4113 = vmul.f32 1.0, %v4112
        %v4114 = vrcp.pop %v3931
        %v4115 = vmul.f32 1.0, %v4114
        %v4116 = vrcp.pop %v3932
        %v4117 = vmul.f32 1.0, %v4116
        %v4118 = vrcp.pop %v3933
        %v4119 = vmul.f32 1.0, %v4118
        %v4120 = vrcp.pop %v3934
        %v4121 = vmul.f32 1.0, %v4120
        %v4122 = vrcp.pop %v3935
        %v4123 = vmul.f32 1.0, %v4122
        %v4124 = vrcp.pop %v3936
        %v4125 = vmul.f32 1.0, %v4124
        %v4126 = vrcp.pop %v3937
        %v4127 = vmul.f32 1.0, %v4126
        %v4128 = vrcp.pop %v3938
        %v4129 = vmul.f32 1.0, %v4128
        %v4130 = vrcp.pop %v3939
        %v4131 = vmul.f32 1.0, %v4130
        %v4132 = vrcp.pop %v3940
        %v4133 = vmul.f32 1.0, %v4132
        %v4134 = vrcp.pop %v3941
        %v4135 = vmul.f32 1.0, %v4134
        %v4136 = vrcp.pop %v3942
        %v4137 = vmul.f32 1.0, %v4136
        %v4138 = vrcp.pop %v3943
        %v4139 = vmul.f32 1.0, %v4138
        %v4140 = vrcp.pop %v3944
        %v4141 = vmul.f32 1.0, %v4140
        %v4142 = vrcp.pop %v3945
        %v4143 = vmul.f32 1.0, %v4142
        %v4144 = vrcp.pop %v3946
        %v4145 = vmul.f32 1.0, %v4144
        %v4146 = vrcp.pop %v3947
        %v4147 = vmul.f32 1.0, %v4146
        %v4148 = vrcp.pop %v3948
        %v4149 = vmul.f32 1.0, %v4148
        %v4150 = vrcp.pop %v3949
        %v4151 = vmul.f32 1.0, %v4150
        %v4152 = vrcp.pop %v3950
        %v4153 = vmul.f32 1.0, %v4152
        %v4154 = vrcp.pop %v3951
        %v4155 = vmul.f32 1.0, %v4154
        %v4156 = vrcp.pop %v3952
        %v4157 = vmul.f32 1.0, %v4156
        %v4158 = vrcp.pop %v3953
        %v4159 = vmul.f32 1.0, %v4158
        %v4160 = vrcp.pop %v3954
        %v4161 = vmul.f32 1.0, %v4160
        %v4162 = vrcp.pop %v3955
        %v4163 = vmul.f32 1.0, %v4162
        %v4164 = vrcp.pop %v3956
        %v4165 = vmul.f32 1.0, %v4164
        %v4166 = vrcp.pop %v3957
        %v4167 = vmul.f32 1.0, %v4166
        %v4168 = vrcp.pop %v3958
        %v4169 = vmul.f32 1.0, %v4168
        %v4170 = vrcp.pop %v3959
        %v4171 = vmul.f32 1.0, %v4170
        %v4172 = vrcp.pop %v3960
        %v4173 = vmul.f32 1.0, %v4172
        %v4174 = vrcp.pop %v3961
        %v4175 = vmul.f32 1.0, %v4174
        %v4176 = vrcp.pop %v3962
        %v4177 = vmul.f32 1.0, %v4176
        %v4178 = vrcp.pop %v3963
        %v4179 = vmul.f32 1.0, %v4178
        %v4180 = vrcp.pop %v3964
        %v4181 = vmul.f32 1.0, %v4180
        %v4182 = vrcp.pop %v3965
        %v4183 = vmul.f32 1.0, %v4182
        %v4184 = vrcp.pop %v3966
        %v4185 = vmul.f32 1.0, %v4184
        %v4186 = vrcp.pop %v3967
        %v4187 = vmul.f32 1.0, %v4186
        %v4188 = vrcp.pop %v3968
        %v4189 = vmul.f32 1.0, %v4188
        %v4190 = vrcp.pop %v3969
        %v4191 = vmul.f32 1.0, %v4190
        %v4192 = vrcp.pop %v3970
        %v4193 = vmul.f32 1.0, %v4192
        %v4194 = vrcp.pop %v3971
        %v4195 = vmul.f32 1.0, %v4194
        %v4196 = vrcp.pop %v3972
        %v4197 = vmul.f32 1.0, %v4196
        %v4198 = vrcp.pop %v3973
        %v4199 = vmul.f32 1.0, %v4198
        %v4200 = vrcp.pop %v3974
        %v4201 = vmul.f32 1.0, %v4200
        %v4202 = vrcp.pop %v3975
        %v4203 = vmul.f32 1.0, %v4202
        %v4204 = vrcp.pop %v3976
        %v4205 = vmul.f32 1.0, %v4204
        %v4206 = vrcp.pop %v3977
        %v4207 = vmul.f32 1.0, %v4206
        %v4208 = vrcp.pop %v3978
        %v4209 = vmul.f32 1.0, %v4208
        %v4210 = vrcp.pop %v3979
        %v4211 = vmul.f32 1.0, %v4210
        %v4212 = vrcp.pop %v3980
        %v4213 = vmul.f32 1.0, %v4212
        %v4214 = vrcp.pop %v3981
        %v4215 = vmul.f32 1.0, %v4214
        %v4216 = vrcp.pop %v3982
        %v4217 = vmul.f32 1.0, %v4216
        %v4218 = vrcp.pop %v3983
        %v4219 = vmul.f32 1.0, %v4218
        %v4220 = vrcp.pop %v3984
        %v4221 = vmul.f32 1.0, %v4220
        %v4222 = vrcp.pop %v3985
        %v4223 = vmul.f32 1.0, %v4222
        %v4224 = vrcp.pop %v3986
        %v4225 = vmul.f32 1.0, %v4224
        %v4226 = vrcp.pop %v3987
        %v4227 = vmul.f32 1.0, %v4226
        %v4228 = vrcp.pop %v3988
        %v4229 = vmul.f32 1.0, %v4228
        %v4230 = vrcp.pop %v3989
        %v4231 = vmul.f32 1.0, %v4230
        %v4232 = vrcp.pop %v3990
        %v4233 = vmul.f32 1.0, %v4232
        %v4234 = vrcp.pop %v3991
        %v4235 = vmul.f32 1.0, %v4234
        %v4236 = vrcp.pop %v3992
        %v4237 = vmul.f32 1.0, %v4236
        %v4238 = vrcp.pop %v3993
        %v4239 = vmul.f32 1.0, %v4238
        %v4240 = vrcp.pop %v3994
        %v4241 = vmul.f32 1.0, %v4240
        %v4242 = vrcp.pop %v3995
        %v4243 = vmul.f32 1.0, %v4242
        %v4244 = vrcp.pop %v3996
        %v4245 = vmul.f32 1.0, %v4244
        %v4246 = vrcp.pop %v3997
        %v4247 = vmul.f32 1.0, %v4246
        %v4248 = vrcp.pop %v3998
        %v4249 = vmul.f32 1.0, %v4248
        %v4250 = vrcp.pop %v3999
        %v4251 = vmul.f32 1.0, %v4250
        %v4252 = vrcp.pop %v4000
        %v4253 = vmul.f32 1.0, %v4252
        %v4254 = vrcp.pop %v4001
        %v4255 = vmul.f32 1.0, %v4254
        %v4256 = vrcp.pop %v4002
        %v4257 = vmul.f32 1.0, %v4256
        %v4258 = vrcp.pop %v4003
        %v4259 = vmul.f32 1.0, %v4258
        %v4260 = vlaneseq
        %v4261 = vshrl.u32 %v4260, 7
        %v4262 = vsub.s32 0, %v4261
        %v4263 = vrot.slane %v4005, %v4262
        %v4264 = vlaneseq
        %v4265 = vshrl.u32 %v4264, 7
        %v4266 = vsub.s32 0, %v4265
        %v4267 = vrot.slane %v4007, %v4266
        %v4268 = vlaneseq
        %v4269 = vshrl.u32 %v4268, 7
        %v4270 = vsub.s32 0, %v4269
        %v4271 = vrot.slane %v4009, %v4270
        %v4272 = vlaneseq
        %v4273 = vshrl.u32 %v4272, 7
        %v4274 = vsub.s32 0, %v4273
        %v4275 = vrot.slane %v4011, %v4274
        %v4276 = vlaneseq
        %v4277 = vshrl.u32 %v4276, 7
        %v4278 = vsub.s32 0, %v4277
        %v4279 = vrot.slane %v4013, %v4278
        %v4280 = vlaneseq
        %v4281 = vshrl.u32 %v4280, 7
        %v4282 = vsub.s32 0, %v4281
        %v4283 = vrot.slane %v4015, %v4282
        %v4284 = vlaneseq
        %v4285 = vshrl.u32 %v4284, 7
        %v4286 = vsub.s32 0, %v4285
        %v4287 = vrot.slane %v4017, %v4286
        %v4288 = vlaneseq
        %v4289 = vshrl.u32 %v4288, 7
        %v4290 = vsub.s32 0, %v4289
        %v4291 = vrot.slane %v4019, %v4290
        %v4292 = vlaneseq
        %v4293 = vshrl.u32 %v4292, 7
        %v4294 = vsub.s32 0, %v4293
        %v4295 = vrot.slane %v4021, %v4294
        %v4296 = vlaneseq
        %v4297 = vshrl.u32 %v4296, 7
        %v4298 = vsub.s32 0, %v4297
        %v4299 = vrot.slane %v4023, %v4298
        %v4300 = vlaneseq
        %v4301 = vshrl.u32 %v4300, 7
        %v4302 = vsub.s32 0, %v4301
        %v4303 = vrot.slane %v4025, %v4302
        %v4304 = vlaneseq
        %v4305 = vshrl.u32 %v4304, 7
        %v4306 = vsub.s32 0, %v4305
        %v4307 = vrot.slane %v4027, %v4306
        %v4308 = vlaneseq
        %v4309 = vshrl.u32 %v4308, 7
        %v4310 = vsub.s32 0, %v4309
        %v4311 = vrot.slane %v4029, %v4310
        %v4312 = vlaneseq
        %v4313 = vshrl.u32 %v4312, 7
        %v4314 = vsub.s32 0, %v4313
        %v4315 = vrot.slane %v4031, %v4314
        %v4316 = vlaneseq
        %v4317 = vshrl.u32 %v4316, 7
        %v4318 = vsub.s32 0, %v4317
        %v4319 = vrot.slane %v4033, %v4318
        %v4320 = vlaneseq
        %v4321 = vshrl.u32 %v4320, 7
        %v4322 = vsub.s32 0, %v4321
        %v4323 = vrot.slane %v4035, %v4322
        %v4324 = vlaneseq
        %v4325 = vshrl.u32 %v4324, 7
        %v4326 = vsub.s32 0, %v4325
        %v4327 = vrot.slane %v4037, %v4326
        %v4328 = vlaneseq
        %v4329 = vshrl.u32 %v4328, 7
        %v4330 = vsub.s32 0, %v4329
        %v4331 = vrot.slane %v4039, %v4330
        %v4332 = vlaneseq
        %v4333 = vshrl.u32 %v4332, 7
        %v4334 = vsub.s32 0, %v4333
        %v4335 = vrot.slane %v4041, %v4334
        %v4336 = vlaneseq
        %v4337 = vshrl.u32 %v4336, 7
        %v4338 = vsub.s32 0, %v4337
        %v4339 = vrot.slane %v4043, %v4338
        %v4340 = vlaneseq
        %v4341 = vshrl.u32 %v4340, 7
        %v4342 = vsub.s32 0, %v4341
        %v4343 = vrot.slane %v4045, %v4342
        %v4344 = vlaneseq
        %v4345 = vshrl.u32 %v4344, 7
        %v4346 = vsub.s32 0, %v4345
        %v4347 = vrot.slane %v4047, %v4346
        %v4348 = vlaneseq
        %v4349 = vshrl.u32 %v4348, 7
        %v4350 = vsub.s32 0, %v4349
        %v4351 = vrot.slane %v4049, %v4350
        %v4352 = vlaneseq
        %v4353 = vshrl.u32 %v4352, 7
        %v4354 = vsub.s32 0, %v4353
        %v4355 = vrot.slane %v4051, %v4354
        %v4356 = vlaneseq
        %v4357 = vshrl.u32 %v4356, 7
        %v4358 = vsub.s32 0, %v4357
        %v4359 = vrot.slane %v4053, %v4358
        %v4360 = vlaneseq
        %v4361 = vshrl.u32 %v4360, 7
        %v4362 = vsub.s32 0, %v4361
        %v4363 = vrot.slane %v4055, %v4362
        %v4364 = vlaneseq
        %v4365 = vshrl.u32 %v4364, 7
        %v4366 = vsub.s32 0, %v4365
        %v4367 = vrot.slane %v4057, %v4366
        %v4368 = vlaneseq
        %v4369 = vshrl.u32 %v4368, 7
        %v4370 = vsub.s32 0, %v4369
        %v4371 = vrot.slane %v4059, %v4370
        %v4372 = vlaneseq
        %v4373 = vshrl.u32 %v4372, 7
        %v4374 = vsub.s32 0, %v4373
        %v4375 = vrot.slane %v4061, %v4374
        %v4376 = vlaneseq
        %v4377 = vshrl.u32 %v4376, 7
        %v4378 = vsub.s32 0, %v4377
        %v4379 = vrot.slane %v4063, %v4378
        %v4380 = vlaneseq
        %v4381 = vshrl.u32 %v4380, 7
        %v4382 = vsub.s32 0, %v4381
        %v4383 = vrot.slane %v4065, %v4382
        %v4384 = vlaneseq
        %v4385 = vshrl.u32 %v4384, 7
        %v4386 = vsub.s32 0, %v4385
        %v4387 = vrot.slane %v4067, %v4386
        %v4388 = vlaneseq
        %v4389 = vshrl.u32 %v4388, 7
        %v4390 = vsub.s32 0, %v4389
        %v4391 = vrot.slane %v4069, %v4390
        %v4392 = vlaneseq
        %v4393 = vshrl.u32 %v4392, 7
        %v4394 = vsub.s32 0, %v4393
        %v4395 = vrot.slane %v4071, %v4394
        %v4396 = vlaneseq
        %v4397 = vshrl.u32 %v4396, 7
        %v4398 = vsub.s32 0, %v4397
        %v4399 = vrot.slane %v4073, %v4398
        %v4400 = vlaneseq
        %v4401 = vshrl.u32 %v4400, 7
        %v4402 = vsub.s32 0, %v4401
        %v4403 = vrot.slane %v4075, %v4402
        %v4404 = vlaneseq
        %v4405 = vshrl.u32 %v4404, 7
        %v4406 = vsub.s32 0, %v4405
        %v4407 = vrot.slane %v4077, %v4406
        %v4408 = vlaneseq
        %v4409 = vshrl.u32 %v4408, 7
        %v4410 = vsub.s32 0, %v4409
        %v4411 = vrot.slane %v4079, %v4410
        %v4412 = vlaneseq
        %v4413 = vshrl.u32 %v4412, 7
        %v4414 = vsub.s32 0, %v4413
        %v4415 = vrot.slane %v4081, %v4414
        %v4416 = vlaneseq
        %v4417 = vshrl.u32 %v4416, 7
        %v4418 = vsub.s32 0, %v4417
        %v4419 = vrot.slane %v4083, %v4418
        %v4420 = vlaneseq
        %v4421 = vshrl.u32 %v4420, 7
        %v4422 = vsub.s32 0, %v4421
        %v4423 = vrot.slane %v4085, %v4422
        %v4424 = vlaneseq
        %v4425 = vshrl.u32 %v4424, 7
        %v4426 = vsub.s32 0, %v4425
        %v4427 = vrot.slane %v4087, %v4426
        %v4428 = vlaneseq
        %v4429 = vshrl.u32 %v4428, 7
        %v4430 = vsub.s32 0, %v4429
        %v4431 = vrot.slane %v4089, %v4430
        %v4432 = vlaneseq
        %v4433 = vshrl.u32 %v4432, 7
        %v4434 = vsub.s32 0, %v4433
        %v4435 = vrot.slane %v4091, %v4434
        %v4436 = vlaneseq
        %v4437 = vshrl.u32 %v4436, 7
        %v4438 = vsub.s32 0, %v4437
        %v4439 = vrot.slane %v4093, %v4438
        %v4440 = vlaneseq
        %v4441 = vshrl.u32 %v4440, 7
        %v4442 = vsub.s32 0, %v4441
        %v4443 = vrot.slane %v4095, %v4442
        %v4444 = vlaneseq
        %v4445 = vshrl.u32 %v4444, 7
        %v4446 = vsub.s32 0, %v4445
        %v4447 = vrot.slane %v4097, %v4446
        %v4448 = vlaneseq
        %v4449 = vshrl.u32 %v4448, 7
        %v4450 = vsub.s32 0, %v4449
        %v4451 = vrot.slane %v4099, %v4450
        %v4452 = vlaneseq
        %v4453 = vshrl.u32 %v4452, 7
        %v4454 = vsub.s32 0, %v4453
        %v4455 = vrot.slane %v4101, %v4454
        %v4456 = vlaneseq
        %v4457 = vshrl.u32 %v4456, 7
        %v4458 = vsub.s32 0, %v4457
        %v4459 = vrot.slane %v4103, %v4458
        %v4460 = vlaneseq
        %v4461 = vshrl.u32 %v4460, 7
        %v4462 = vsub.s32 0, %v4461
        %v4463 = vrot.slane %v4105, %v4462
        %v4464 = vlaneseq
        %v4465 = vshrl.u32 %v4464, 7
        %v4466 = vsub.s32 0, %v4465
        %v4467 = vrot.slane %v4107, %v4466
        %v4468 = vlaneseq
        %v4469 = vshrl.u32 %v4468, 7
        %v4470 = vsub.s32 0, %v4469
        %v4471 = vrot.slane %v4109, %v4470
        %v4472 = vlaneseq
        %v4473 = vshrl.u32 %v4472, 7
        %v4474 = vsub.s32 0, %v4473
        %v4475 = vrot.slane %v4111, %v4474
        %v4476 = vlaneseq
        %v4477 = vshrl.u32 %v4476, 7
        %v4478 = vsub.s32 0, %v4477
        %v4479 = vrot.slane %v4113, %v4478
        %v4480 = vlaneseq
        %v4481 = vshrl.u32 %v4480, 7
        %v4482 = vsub.s32 0, %v4481
        %v4483 = vrot.slane %v4115, %v4482
        %v4484 = vlaneseq
        %v4485 = vshrl.u32 %v4484, 7
        %v4486 = vsub.s32 0, %v4485
        %v4487 = vrot.slane %v4117, %v4486
        %v4488 = vlaneseq
        %v4489 = vshrl.u32 %v4488, 7
        %v4490 = vsub.s32 0, %v4489
        %v4491 = vrot.slane %v4119, %v4490
        %v4492 = vlaneseq
        %v4493 = vshrl.u32 %v4492, 7
        %v4494 = vsub.s32 0, %v4493
        %v4495 = vrot.slane %v4121, %v4494
        %v4496 = vlaneseq
        %v4497 = vshrl.u32 %v4496, 7
        %v4498 = vsub.s32 0, %v4497
        %v4499 = vrot.slane %v4123, %v4498
        %v4500 = vlaneseq
        %v4501 = vshrl.u32 %v4500, 7
        %v4502 = vsub.s32 0, %v4501
        %v4503 = vrot.slane %v4125, %v4502
        %v4504 = vlaneseq
        %v4505 = vshrl.u32 %v4504, 7
        %v4506 = vsub.s32 0, %v4505
        %v4507 = vrot.slane %v4127, %v4506
        %v4508 = vlaneseq
        %v4509 = vshrl.u32 %v4508, 7
        %v4510 = vsub.s32 0, %v4509
        %v4511 = vrot.slane %v4129, %v4510
        %v4512 = vlaneseq
        %v4513 = vshrl.u32 %v4512, 7
        %v4514 = vsub.s32 0, %v4513
        %v4515 = vrot.slane %v4131, %v4514
        %v4516 = vlaneseq
        %v4517 = vshrl.u32 %v4516, 7
        %v4518 = vsub.s32 0, %v4517
        %v4519 = vrot.slane %v4133, %v4518
        %v4520 = vlaneseq
        %v4521 = vshrl.u32 %v4520, 7
        %v4522 = vsub.s32 0, %v4521
        %v4523 = vrot.slane %v4135, %v4522
        %v4524 = vlaneseq
        %v4525 = vshrl.u32 %v4524, 7
        %v4526 = vsub.s32 0, %v4525
        %v4527 = vrot.slane %v4137, %v4526
        %v4528 = vlaneseq
        %v4529 = vshrl.u32 %v4528, 7
        %v4530 = vsub.s32 0, %v4529
        %v4531 = vrot.slane %v4139, %v4530
        %v4532 = vlaneseq
        %v4533 = vshrl.u32 %v4532, 7
        %v4534 = vsub.s32 0, %v4533
        %v4535 = vrot.slane %v4141, %v4534
        %v4536 = vlaneseq
        %v4537 = vshrl.u32 %v4536, 7
        %v4538 = vsub.s32 0, %v4537
        %v4539 = vrot.slane %v4143, %v4538
        %v4540 = vlaneseq
        %v4541 = vshrl.u32 %v4540, 7
        %v4542 = vsub.s32 0, %v4541
        %v4543 = vrot.slane %v4145, %v4542
        %v4544 = vlaneseq
        %v4545 = vshrl.u32 %v4544, 7
        %v4546 = vsub.s32 0, %v4545
        %v4547 = vrot.slane %v4147, %v4546
        %v4548 = vlaneseq
        %v4549 = vshrl.u32 %v4548, 7
        %v4550 = vsub.s32 0, %v4549
        %v4551 = vrot.slane %v4149, %v4550
        %v4552 = vlaneseq
        %v4553 = vshrl.u32 %v4552, 7
        %v4554 = vsub.s32 0, %v4553
        %v4555 = vrot.slane %v4151, %v4554
        %v4556 = vlaneseq
        %v4557 = vshrl.u32 %v4556, 7
        %v4558 = vsub.s32 0, %v4557
        %v4559 = vrot.slane %v4153, %v4558
        %v4560 = vlaneseq
        %v4561 = vshrl.u32 %v4560, 7
        %v4562 = vsub.s32 0, %v4561
        %v4563 = vrot.slane %v4155, %v4562
        %v4564 = vlaneseq
        %v4565 = vshrl.u32 %v4564, 7
        %v4566 = vsub.s32 0, %v4565
        %v4567 = vrot.slane %v4157, %v4566
        %v4568 = vlaneseq
        %v4569 = vshrl.u32 %v4568, 7
        %v4570 = vsub.s32 0, %v4569
        %v4571 = vrot.slane %v4159, %v4570
        %v4572 = vlaneseq
        %v4573 = vshrl.u32 %v4572, 7
        %v4574 = vsub.s32 0, %v4573
        %v4575 = vrot.slane %v4161, %v4574
        %v4576 = vlaneseq
        %v4577 = vshrl.u32 %v4576, 7
        %v4578 = vsub.s32 0, %v4577
        %v4579 = vrot.slane %v4163, %v4578
        %v4580 = vlaneseq
        %v4581 = vshrl.u32 %v4580, 7
        %v4582 = vsub.s32 0, %v4581
        %v4583 = vrot.slane %v4165, %v4582
        %v4584 = vlaneseq
        %v4585 = vshrl.u32 %v4584, 7
        %v4586 = vsub.s32 0, %v4585
        %v4587 = vrot.slane %v4167, %v4586
        %v4588 = vlaneseq
        %v4589 = vshrl.u32 %v4588, 7
        %v4590 = vsub.s32 0, %v4589
        %v4591 = vrot.slane %v4169, %v4590
        %v4592 = vlaneseq
        %v4593 = vshrl.u32 %v4592, 7
        %v4594 = vsub.s32 0, %v4593
        %v4595 = vrot.slane %v4171, %v4594
        %v4596 = vlaneseq
        %v4597 = vshrl.u32 %v4596, 7
        %v4598 = vsub.s32 0, %v4597
        %v4599 = vrot.slane %v4173, %v4598
        %v4600 = vlaneseq
        %v4601 = vshrl.u32 %v4600, 7
        %v4602 = vsub.s32 0, %v4601
        %v4603 = vrot.slane %v4175, %v4602
        %v4604 = vlaneseq
        %v4605 = vshrl.u32 %v4604, 7
        %v4606 = vsub.s32 0, %v4605
        %v4607 = vrot.slane %v4177, %v4606
        %v4608 = vlaneseq
        %v4609 = vshrl.u32 %v4608, 7
        %v4610 = vsub.s32 0, %v4609
        %v4611 = vrot.slane %v4179, %v4610
        %v4612 = vlaneseq
        %v4613 = vshrl.u32 %v4612, 7
        %v4614 = vsub.s32 0, %v4613
        %v4615 = vrot.slane %v4181, %v4614
        %v4616 = vlaneseq
        %v4617 = vshrl.u32 %v4616, 7
        %v4618 = vsub.s32 0, %v4617
        %v4619 = vrot.slane %v4183, %v4618
        %v4620 = vlaneseq
        %v4621 = vshrl.u32 %v4620, 7
        %v4622 = vsub.s32 0, %v4621
        %v4623 = vrot.slane %v4185, %v4622
        %v4624 = vlaneseq
        %v4625 = vshrl.u32 %v4624, 7
        %v4626 = vsub.s32 0, %v4625
        %v4627 = vrot.slane %v4187, %v4626
        %v4628 = vlaneseq
        %v4629 = vshrl.u32 %v4628, 7
        %v4630 = vsub.s32 0, %v4629
        %v4631 = vrot.slane %v4189, %v4630
        %v4632 = vlaneseq
        %v4633 = vshrl.u32 %v4632, 7
        %v4634 = vsub.s32 0, %v4633
        %v4635 = vrot.slane %v4191, %v4634
        %v4636 = vlaneseq
        %v4637 = vshrl.u32 %v4636, 7
        %v4638 = vsub.s32 0, %v4637
        %v4639 = vrot.slane %v4193, %v4638
        %v4640 = vlaneseq
        %v4641 = vshrl.u32 %v4640, 7
        %v4642 = vsub.s32 0, %v4641
        %v4643 = vrot.slane %v4195, %v4642
        %v4644 = vlaneseq
        %v4645 = vshrl.u32 %v4644, 7
        %v4646 = vsub.s32 0, %v4645
        %v4647 = vrot.slane %v4197, %v4646
        %v4648 = vlaneseq
        %v4649 = vshrl.u32 %v4648, 7
        %v4650 = vsub.s32 0, %v4649
        %v4651 = vrot.slane %v4199, %v4650
        %v4652 = vlaneseq
        %v4653 = vshrl.u32 %v4652, 7
        %v4654 = vsub.s32 0, %v4653
        %v4655 = vrot.slane %v4201, %v4654
        %v4656 = vlaneseq
        %v4657 = vshrl.u32 %v4656, 7
        %v4658 = vsub.s32 0, %v4657
        %v4659 = vrot.slane %v4203, %v4658
        %v4660 = vlaneseq
        %v4661 = vshrl.u32 %v4660, 7
        %v4662 = vsub.s32 0, %v4661
        %v4663 = vrot.slane %v4205, %v4662
        %v4664 = vlaneseq
        %v4665 = vshrl.u32 %v4664, 7
        %v4666 = vsub.s32 0, %v4665
        %v4667 = vrot.slane %v4207, %v4666
        %v4668 = vlaneseq
        %v4669 = vshrl.u32 %v4668, 7
        %v4670 = vsub.s32 0, %v4669
        %v4671 = vrot.slane %v4209, %v4670
        %v4672 = vlaneseq
        %v4673 = vshrl.u32 %v4672, 7
        %v4674 = vsub.s32 0, %v4673
        %v4675 = vrot.slane %v4211, %v4674
        %v4676 = vlaneseq
        %v4677 = vshrl.u32 %v4676, 7
        %v4678 = vsub.s32 0, %v4677
        %v4679 = vrot.slane %v4213, %v4678
        %v4680 = vlaneseq
        %v4681 = vshrl.u32 %v4680, 7
        %v4682 = vsub.s32 0, %v4681
        %v4683 = vrot.slane %v4215, %v4682
        %v4684 = vlaneseq
        %v4685 = vshrl.u32 %v4684, 7
        %v4686 = vsub.s32 0, %v4685
        %v4687 = vrot.slane %v4217, %v4686
        %v4688 = vlaneseq
        %v4689 = vshrl.u32 %v4688, 7
        %v4690 = vsub.s32 0, %v4689
        %v4691 = vrot.slane %v4219, %v4690
        %v4692 = vlaneseq
        %v4693 = vshrl.u32 %v4692, 7
        %v4694 = vsub.s32 0, %v4693
        %v4695 = vrot.slane %v4221, %v4694
        %v4696 = vlaneseq
        %v4697 = vshrl.u32 %v4696, 7
        %v4698 = vsub.s32 0, %v4697
        %v4699 = vrot.slane %v4223, %v4698
        %v4700 = vlaneseq
        %v4701 = vshrl.u32 %v4700, 7
        %v4702 = vsub.s32 0, %v4701
        %v4703 = vrot.slane %v4225, %v4702
        %v4704 = vlaneseq
        %v4705 = vshrl.u32 %v4704, 7
        %v4706 = vsub.s32 0, %v4705
        %v4707 = vrot.slane %v4227, %v4706
        %v4708 = vlaneseq
        %v4709 = vshrl.u32 %v4708, 7
        %v4710 = vsub.s32 0, %v4709
        %v4711 = vrot.slane %v4229, %v4710
        %v4712 = vlaneseq
        %v4713 = vshrl.u32 %v4712, 7
        %v4714 = vsub.s32 0, %v4713
        %v4715 = vrot.slane %v4231, %v4714
        %v4716 = vlaneseq
        %v4717 = vshrl.u32 %v4716, 7
        %v4718 = vsub.s32 0, %v4717
        %v4719 = vrot.slane %v4233, %v4718
        %v4720 = vlaneseq
        %v4721 = vshrl.u32 %v4720, 7
        %v4722 = vsub.s32 0, %v4721
        %v4723 = vrot.slane %v4235, %v4722
        %v4724 = vlaneseq
        %v4725 = vshrl.u32 %v4724, 7
        %v4726 = vsub.s32 0, %v4725
        %v4727 = vrot.slane %v4237, %v4726
        %v4728 = vlaneseq
        %v4729 = vshrl.u32 %v4728, 7
        %v4730 = vsub.s32 0, %v4729
        %v4731 = vrot.slane %v4239, %v4730
        %v4732 = vlaneseq
        %v4733 = vshrl.u32 %v4732, 7
        %v4734 = vsub.s32 0, %v4733
        %v4735 = vrot.slane %v4241, %v4734
        %v4736 = vlaneseq
        %v4737 = vshrl.u32 %v4736, 7
        %v4738 = vsub.s32 0, %v4737
        %v4739 = vrot.slane %v4243, %v4738
        %v4740 = vlaneseq
        %v4741 = vshrl.u32 %v4740, 7
        %v4742 = vsub.s32 0, %v4741
        %v4743 = vrot.slane %v4245, %v4742
        %v4744 = vlaneseq
        %v4745 = vshrl.u32 %v4744, 7
        %v4746 = vsub.s32 0, %v4745
        %v4747 = vrot.slane %v4247, %v4746
        %v4748 = vlaneseq
        %v4749 = vshrl.u32 %v4748, 7
        %v4750 = vsub.s32 0, %v4749
        %v4751 = vrot.slane %v4249, %v4750
        %v4752 = vlaneseq
        %v4753 = vshrl.u32 %v4752, 7
        %v4754 = vsub.s32 0, %v4753
        %v4755 = vrot.slane %v4251, %v4754
        %v4756 = vlaneseq
        %v4757 = vshrl.u32 %v4756, 7
        %v4758 = vsub.s32 0, %v4757
        %v4759 = vrot.slane %v4253, %v4758
        %v4760 = vlaneseq
        %v4761 = vshrl.u32 %v4760, 7
        %v4762 = vsub.s32 0, %v4761
        %v4763 = vrot.slane %v4255, %v4762
        %v4764 = vlaneseq
        %v4765 = vshrl.u32 %v4764, 7
        %v4766 = vsub.s32 0, %v4765
        %v4767 = vrot.slane %v4257, %v4766
        %v4768 = vlaneseq
        %v4769 = vshrl.u32 %v4768, 7
        %v4770 = vsub.s32 0, %v4769
        %v4771 = vrot.slane %v4259, %v4770
        %v4772 = vmul.f32 %v187, %v4263
        %v4773 = vmul.f32 %v188, %v4267
        %v4774 = vmul.f32 %v189, %v4271
        %v4775 = vmul.f32 %v190, %v4275
        %v4776 = vmul.f32 %v191, %v4279
        %v4777 = vmul.f32 %v192, %v4283
        %v4778 = vmul.f32 %v193, %v4287
        %v4779 = vmul.f32 %v194, %v4291
        %v4780 = vmul.f32 %v195, %v4295
        %v4781 = vmul.f32 %v196, %v4299
        %v4782 = vmul.f32 %v197, %v4303
        %v4783 = vmul.f32 %v198, %v4307
        %v4784 = vmul.f32 %v199, %v4311
        %v4785 = vmul.f32 %v200, %v4315
        %v4786 = vmul.f32 %v201, %v4319
        %v4787 = vmul.f32 %v202, %v4323
        %v4788 = vmul.f32 %v203, %v4327
        %v4789 = vmul.f32 %v204, %v4331
        %v4790 = vmul.f32 %v205, %v4335
        %v4791 = vmul.f32 %v206, %v4339
        %v4792 = vmul.f32 %v207, %v4343
        %v4793 = vmul.f32 %v208, %v4347
        %v4794 = vmul.f32 %v209, %v4351
        %v4795 = vmul.f32 %v210, %v4355
        %v4796 = vmul.f32 %v211, %v4359
        %v4797 = vmul.f32 %v212, %v4363
        %v4798 = vmul.f32 %v213, %v4367
        %v4799 = vmul.f32 %v214, %v4371
        %v4800 = vmul.f32 %v215, %v4375
        %v4801 = vmul.f32 %v216, %v4379
        %v4802 = vmul.f32 %v217, %v4383
        %v4803 = vmul.f32 %v218, %v4387
        %v4804 = vmul.f32 %v219, %v4391
        %v4805 = vmul.f32 %v220, %v4395
        %v4806 = vmul.f32 %v221, %v4399
        %v4807 = vmul.f32 %v222, %v4403
        %v4808 = vmul.f32 %v223, %v4407
        %v4809 = vmul.f32 %v224, %v4411
        %v4810 = vmul.f32 %v225, %v4415
        %v4811 = vmul.f32 %v226, %v4419
        %v4812 = vmul.f32 %v227, %v4423
        %v4813 = vmul.f32 %v228, %v4427
        %v4814 = vmul.f32 %v229, %v4431
        %v4815 = vmul.f32 %v230, %v4435
        %v4816 = vmul.f32 %v231, %v4439
        %v4817 = vmul.f32 %v232, %v4443
        %v4818 = vmul.f32 %v233, %v4447
        %v4819 = vmul.f32 %v234, %v4451
        %v4820 = vmul.f32 %v235, %v4455
        %v4821 = vmul.f32 %v236, %v4459
        %v4822 = vmul.f32 %v237, %v4463
        %v4823 = vmul.f32 %v238, %v4467
        %v4824 = vmul.f32 %v239, %v4471
        %v4825 = vmul.f32 %v240, %v4475
        %v4826 = vmul.f32 %v241, %v4479
        %v4827 = vmul.f32 %v242, %v4483
        %v4828 = vmul.f32 %v243, %v4487
        %v4829 = vmul.f32 %v244, %v4491
        %v4830 = vmul.f32 %v245, %v4495
        %v4831 = vmul.f32 %v246, %v4499
        %v4832 = vmul.f32 %v247, %v4503
        %v4833 = vmul.f32 %v248, %v4507
        %v4834 = vmul.f32 %v249, %v4511
        %v4835 = vmul.f32 %v250, %v4515
        %v4836 = vmul.f32 %v251, %v4519
        %v4837 = vmul.f32 %v252, %v4523
        %v4838 = vmul.f32 %v253, %v4527
        %v4839 = vmul.f32 %v254, %v4531
        %v4840 = vmul.f32 %v255, %v4535
        %v4841 = vmul.f32 %v256, %v4539
        %v4842 = vmul.f32 %v257, %v4543
        %v4843 = vmul.f32 %v258, %v4547
        %v4844 = vmul.f32 %v259, %v4551
        %v4845 = vmul.f32 %v260, %v4555
        %v4846 = vmul.f32 %v261, %v4559
        %v4847 = vmul.f32 %v262, %v4563
        %v4848 = vmul.f32 %v263, %v4567
        %v4849 = vmul.f32 %v264, %v4571
        %v4850 = vmul.f32 %v265, %v4575
        %v4851 = vmul.f32 %v266, %v4579
        %v4852 = vmul.f32 %v267, %v4583
        %v4853 = vmul.f32 %v268, %v4587
        %v4854 = vmul.f32 %v269, %v4591
        %v4855 = vmul.f32 %v270, %v4595
        %v4856 = vmul.f32 %v271, %v4599
        %v4857 = vmul.f32 %v272, %v4603
        %v4858 = vmul.f32 %v273, %v4607
        %v4859 = vmul.f32 %v274, %v4611
        %v4860 = vmul.f32 %v275, %v4615
        %v4861 = vmul.f32 %v276, %v4619
        %v4862 = vmul.f32 %v277, %v4623
        %v4863 = vmul.f32 %v278, %v4627
        %v4864 = vmul.f32 %v279, %v4631
        %v4865 = vmul.f32 %v280, %v4635
        %v4866 = vmul.f32 %v281, %v4639
        %v4867 = vmul.f32 %v282, %v4643
        %v4868 = vmul.f32 %v283, %v4647
        %v4869 = vmul.f32 %v284, %v4651
        %v4870 = vmul.f32 %v285, %v4655
        %v4871 = vmul.f32 %v286, %v4659
        %v4872 = vmul.f32 %v287, %v4663
        %v4873 = vmul.f32 %v288, %v4667
        %v4874 = vmul.f32 %v289, %v4671
        %v4875 = vmul.f32 %v290, %v4675
        %v4876 = vmul.f32 %v291, %v4679
        %v4877 = vmul.f32 %v292, %v4683
        %v4878 = vmul.f32 %v293, %v4687
        %v4879 = vmul.f32 %v294, %v4691
        %v4880 = vmul.f32 %v295, %v4695
        %v4881 = vmul.f32 %v296, %v4699
        %v4882 = vmul.f32 %v297, %v4703
        %v4883 = vmul.f32 %v298, %v4707
        %v4884 = vmul.f32 %v299, %v4711
        %v4885 = vmul.f32 %v300, %v4715
        %v4886 = vmul.f32 %v301, %v4719
        %v4887 = vmul.f32 %v302, %v4723
        %v4888 = vmul.f32 %v303, %v4727
        %v4889 = vmul.f32 %v304, %v4731
        %v4890 = vmul.f32 %v305, %v4735
        %v4891 = vmul.f32 %v306, %v4739
        %v4892 = vmul.f32 %v307, %v4743
        %v4893 = vmul.f32 %v308, %v4747
        %v4894 = vmul.f32 %v309, %v4751
        %v4895 = vmul.f32 %v310, %v4755
        %v4896 = vmul.f32 %v311, %v4759
        %v4897 = vmul.f32 %v312, %v4763
        %v4898 = vmul.f32 %v313, %v4767
        %v4899 = vmul.f32 %v314, %v4771
        %4900 = vst [vmem:[%s178] sm:$0xff] %v4772
        %4901 = vst [vmem:[%s178 + $0x8] sm:$0xff] %v4773
        %4902 = vst [vmem:[%s178 + $0x10] sm:$0xff] %v4774
        %4903 = vst [vmem:[%s178 + $0x18] sm:$0xff] %v4775
        %4904 = vst [vmem:[%s178 + $0x20] sm:$0xff] %v4776
        %4905 = vst [vmem:[%s178 + $0x28] sm:$0xff] %v4777
        %4906 = vst [vmem:[%s178 + $0x30] sm:$0xff] %v4778
        %4907 = vst [vmem:[%s178 + $0x38] sm:$0xff] %v4779
        %4908 = vst [vmem:[%s178 + $0x40] sm:$0xff] %v4780
        %4909 = vst [vmem:[%s178 + $0x48] sm:$0xff] %v4781
        %4910 = vst [vmem:[%s178 + $0x50] sm:$0xff] %v4782
        %4911 = vst [vmem:[%s178 + $0x58] sm:$0xff] %v4783
        %4912 = vst [vmem:[%s178 + $0x60] sm:$0xff] %v4784
        %4913 = vst [vmem:[%s178 + $0x68] sm:$0xff] %v4785
        %4914 = vst [vmem:[%s178 + $0x70] sm:$0xff] %v4786
        %4915 = vst [vmem:[%s178 + $0x78] sm:$0xff] %v4787
        %4916 = vst [vmem:[%s178 + $0x80] sm:$0xff] %v4788
        %4917 = vst [vmem:[%s178 + $0x88] sm:$0xff] %v4789
        %4918 = vst [vmem:[%s178 + $0x90] sm:$0xff] %v4790
        %4919 = vst [vmem:[%s178 + $0x98] sm:$0xff] %v4791
        %4920 = vst [vmem:[%s178 + $0xa0] sm:$0xff] %v4792
        %4921 = vst [vmem:[%s178 + $0xa8] sm:$0xff] %v4793
        %4922 = vst [vmem:[%s178 + $0xb0] sm:$0xff] %v4794
        %4923 = vst [vmem:[%s178 + $0xb8] sm:$0xff] %v4795
        %4924 = vst [vmem:[%s178 + $0xc0] sm:$0xff] %v4796
        %4925 = vst [vmem:[%s178 + $0xc8] sm:$0xff] %v4797
        %4926 = vst [vmem:[%s178 + $0xd0] sm:$0xff] %v4798
        %4927 = vst [vmem:[%s178 + $0xd8] sm:$0xff] %v4799
        %4928 = vst [vmem:[%s178 + $0xe0] sm:$0xff] %v4800
        %4929 = vst [vmem:[%s178 + $0xe8] sm:$0xff] %v4801
        %4930 = vst [vmem:[%s178 + $0xf0] sm:$0xff] %v4802
        %4931 = vst [vmem:[%s178 + $0xf8] sm:$0xff] %v4803
        %4932 = vst [vmem:[%s178 + $0x100] sm:$0xff] %v4804
        %4933 = vst [vmem:[%s178 + $0x108] sm:$0xff] %v4805
        %4934 = vst [vmem:[%s178 + $0x110] sm:$0xff] %v4806
        %4935 = vst [vmem:[%s178 + $0x118] sm:$0xff] %v4807
        %4936 = vst [vmem:[%s178 + $0x120] sm:$0xff] %v4808
        %4937 = vst [vmem:[%s178 + $0x128] sm:$0xff] %v4809
        %4938 = vst [vmem:[%s178 + $0x130] sm:$0xff] %v4810
        %4939 = vst [vmem:[%s178 + $0x138] sm:$0xff] %v4811
        %4940 = vst [vmem:[%s178 + $0x140] sm:$0xff] %v4812
        %4941 = vst [vmem:[%s178 + $0x148] sm:$0xff] %v4813
        %4942 = vst [vmem:[%s178 + $0x150] sm:$0xff] %v4814
        %4943 = vst [vmem:[%s178 + $0x158] sm:$0xff] %v4815
        %4944 = vst [vmem:[%s178 + $0x160] sm:$0xff] %v4816
        %4945 = vst [vmem:[%s178 + $0x168] sm:$0xff] %v4817
        %4946 = vst [vmem:[%s178 + $0x170] sm:$0xff] %v4818
        %4947 = vst [vmem:[%s178 + $0x178] sm:$0xff] %v4819
        %4948 = vst [vmem:[%s178 + $0x180] sm:$0xff] %v4820
        %4949 = vst [vmem:[%s178 + $0x188] sm:$0xff] %v4821
        %4950 = vst [vmem:[%s178 + $0x190] sm:$0xff] %v4822
        %4951 = vst [vmem:[%s178 + $0x198] sm:$0xff] %v4823
        %4952 = vst [vmem:[%s178 + $0x1a0] sm:$0xff] %v4824
        %4953 = vst [vmem:[%s178 + $0x1a8] sm:$0xff] %v4825
        %4954 = vst [vmem:[%s178 + $0x1b0] sm:$0xff] %v4826
        %4955 = vst [vmem:[%s178 + $0x1b8] sm:$0xff] %v4827
        %4956 = vst [vmem:[%s178 + $0x1c0] sm:$0xff] %v4828
        %4957 = vst [vmem:[%s178 + $0x1c8] sm:$0xff] %v4829
        %4958 = vst [vmem:[%s178 + $0x1d0] sm:$0xff] %v4830
        %4959 = vst [vmem:[%s178 + $0x1d8] sm:$0xff] %v4831
        %4960 = vst [vmem:[%s178 + $0x1e0] sm:$0xff] %v4832
        %4961 = vst [vmem:[%s178 + $0x1e8] sm:$0xff] %v4833
        %4962 = vst [vmem:[%s178 + $0x1f0] sm:$0xff] %v4834
        %4963 = vst [vmem:[%s178 + $0x1f8] sm:$0xff] %v4835
        %4964 = vst [vmem:[%s178 + $0x200] sm:$0xff] %v4836
        %4965 = vst [vmem:[%s178 + $0x208] sm:$0xff] %v4837
        %4966 = vst [vmem:[%s178 + $0x210] sm:$0xff] %v4838
        %4967 = vst [vmem:[%s178 + $0x218] sm:$0xff] %v4839
        %4968 = vst [vmem:[%s178 + $0x220] sm:$0xff] %v4840
        %4969 = vst [vmem:[%s178 + $0x228] sm:$0xff] %v4841
        %4970 = vst [vmem:[%s178 + $0x230] sm:$0xff] %v4842
        %4971 = vst [vmem:[%s178 + $0x238] sm:$0xff] %v4843
        %4972 = vst [vmem:[%s178 + $0x240] sm:$0xff] %v4844
        %4973 = vst [vmem:[%s178 + $0x248] sm:$0xff] %v4845
        %4974 = vst [vmem:[%s178 + $0x250] sm:$0xff] %v4846
        %4975 = vst [vmem:[%s178 + $0x258] sm:$0xff] %v4847
        %4976 = vst [vmem:[%s178 + $0x260] sm:$0xff] %v4848
        %4977 = vst [vmem:[%s178 + $0x268] sm:$0xff] %v4849
        %4978 = vst [vmem:[%s178 + $0x270] sm:$0xff] %v4850
        %4979 = vst [vmem:[%s178 + $0x278] sm:$0xff] %v4851
        %4980 = vst [vmem:[%s178 + $0x280] sm:$0xff] %v4852
        %4981 = vst [vmem:[%s178 + $0x288] sm:$0xff] %v4853
        %4982 = vst [vmem:[%s178 + $0x290] sm:$0xff] %v4854
        %4983 = vst [vmem:[%s178 + $0x298] sm:$0xff] %v4855
        %4984 = vst [vmem:[%s178 + $0x2a0] sm:$0xff] %v4856
        %4985 = vst [vmem:[%s178 + $0x2a8] sm:$0xff] %v4857
        %4986 = vst [vmem:[%s178 + $0x2b0] sm:$0xff] %v4858
        %4987 = vst [vmem:[%s178 + $0x2b8] sm:$0xff] %v4859
        %4988 = vst [vmem:[%s178 + $0x2c0] sm:$0xff] %v4860
        %4989 = vst [vmem:[%s178 + $0x2c8] sm:$0xff] %v4861
        %4990 = vst [vmem:[%s178 + $0x2d0] sm:$0xff] %v4862
        %4991 = vst [vmem:[%s178 + $0x2d8] sm:$0xff] %v4863
        %4992 = vst [vmem:[%s178 + $0x2e0] sm:$0xff] %v4864
        %4993 = vst [vmem:[%s178 + $0x2e8] sm:$0xff] %v4865
        %4994 = vst [vmem:[%s178 + $0x2f0] sm:$0xff] %v4866
        %4995 = vst [vmem:[%s178 + $0x2f8] sm:$0xff] %v4867
        %4996 = vst [vmem:[%s178 + $0x300] sm:$0xff] %v4868
        %4997 = vst [vmem:[%s178 + $0x308] sm:$0xff] %v4869
        %4998 = vst [vmem:[%s178 + $0x310] sm:$0xff] %v4870
        %4999 = vst [vmem:[%s178 + $0x318] sm:$0xff] %v4871
        %5000 = vst [vmem:[%s178 + $0x320] sm:$0xff] %v4872
        %5001 = vst [vmem:[%s178 + $0x328] sm:$0xff] %v4873
        %5002 = vst [vmem:[%s178 + $0x330] sm:$0xff] %v4874
        %5003 = vst [vmem:[%s178 + $0x338] sm:$0xff] %v4875
        %5004 = vst [vmem:[%s178 + $0x340] sm:$0xff] %v4876
        %5005 = vst [vmem:[%s178 + $0x348] sm:$0xff] %v4877
        %5006 = vst [vmem:[%s178 + $0x350] sm:$0xff] %v4878
        %5007 = vst [vmem:[%s178 + $0x358] sm:$0xff] %v4879
        %5008 = vst [vmem:[%s178 + $0x360] sm:$0xff] %v4880
        %5009 = vst [vmem:[%s178 + $0x368] sm:$0xff] %v4881
        %5010 = vst [vmem:[%s178 + $0x370] sm:$0xff] %v4882
        %5011 = vst [vmem:[%s178 + $0x378] sm:$0xff] %v4883
        %5012 = vst [vmem:[%s178 + $0x380] sm:$0xff] %v4884
        %5013 = vst [vmem:[%s178 + $0x388] sm:$0xff] %v4885
        %5014 = vst [vmem:[%s178 + $0x390] sm:$0xff] %v4886
        %5015 = vst [vmem:[%s178 + $0x398] sm:$0xff] %v4887
        %5016 = vst [vmem:[%s178 + $0x3a0] sm:$0xff] %v4888
        %5017 = vst [vmem:[%s178 + $0x3a8] sm:$0xff] %v4889
        %5018 = vst [vmem:[%s178 + $0x3b0] sm:$0xff] %v4890
        %5019 = vst [vmem:[%s178 + $0x3b8] sm:$0xff] %v4891
        %5020 = vst [vmem:[%s178 + $0x3c0] sm:$0xff] %v4892
        %5021 = vst [vmem:[%s178 + $0x3c8] sm:$0xff] %v4893
        %5022 = vst [vmem:[%s178 + $0x3d0] sm:$0xff] %v4894
        %5023 = vst [vmem:[%s178 + $0x3d8] sm:$0xff] %v4895
        %5024 = vst [vmem:[%s178 + $0x3e0] sm:$0xff] %v4896
        %5025 = vst [vmem:[%s178 + $0x3e8] sm:$0xff] %v4897
        %5026 = vst [vmem:[%s178 + $0x3f0] sm:$0xff] %v4898
        %5027 = vst [vmem:[%s178 + $0x3f8] sm:$0xff] %v4899
        %s5028 = sand.u32 %s79, 1
        %s5029 = scalar_lea.sflag [#allocation4], %s5028
        %s5030 = sand.u32 %s79, 1
        %s5031 = smul.addr %s5030, 1024
        %s5032 = scalar_lea.vmem [#allocation5], %s5031
        // Predicated region
        $region33: #{tpu_custom_call.1} parent=27 // pred_check
          %p5033 = pneg %p89
        $region34: #{tpu_custom_call.1} parent=27 // pred_check_branch
          %5035 = sbr.rel (%p5033) target = $region36
        $region35: #{tpu_custom_call.1} parent=27 // pred_region
          %s5036 = smul.u32 64, %s19
          %s5038 = ssub.s32 16384, 16384
          %5039 = vsyncadd %s5029, %s5038
          %s5040 = smul.addr %s5036, 2
          %s5041 = smul.addr %s5040, 128
          %s5042 = scalar_lea.hbm %s2, %s5041
          %s5043 = sshll.u32 %s5032, 4
          %s5044 = int_to_ptr.vmem [resolvable:$true] %s5043
          %5049 = dma.vmem_to_hbm [thread:$0]  %s5044, 16384, %s5042, %s5029, 256, 256, 16
        $region36: #{tpu_custom_call.1} parent=27 // pred_fallthru
          _
      $region28: #{tpu_custom_call.1} parent=5 // pred_fallthru
        _
      %p5050 = scmp.le.s32.totalorder 2, %s14
      // Predicated region
      $region37: #{tpu_custom_call.1} parent=5 // pred_check
        %p5051 = pneg %p5050
      $region38: #{tpu_custom_call.1} parent=5 // pred_check_branch
        %5053 = sbr.rel (%p5051) target = $region40
      $region39: #{tpu_custom_call.1} parent=5 // pred_region
        %s5054 = ssub.s32 %s14, 2
        // Predicated region
        $region41: #{tpu_custom_call.1} parent=39 // pred_check
          %p5055 = pneg %p95
        $region42: #{tpu_custom_call.1} parent=39 // pred_check_branch
          %5057 = sbr.rel (%p5055) target = $region44
        $region43: #{tpu_custom_call.1} parent=39 // pred_region
          %s5058 = sand.u32 %s80, 1
          %s5059 = scalar_lea.sflag [#allocation4], %s5058
          %s5060 = sand.u32 %s80, 1
          %s5061 = smul.addr %s5060, 1024
          %s5062 = scalar_lea.vmem [#allocation5], %s5061
          %5063 = dma.done %s5059, 16384
        $region44: #{tpu_custom_call.1} parent=39 // pred_fallthru
          _
      $region40: #{tpu_custom_call.1} parent=5 // pred_fallthru
        _
    $region6: #{tpu_custom_call.1} parent=1 // loop_footer
      %s18 = sadd.s32 1, %s14
    $region7: #{tpu_custom_call.1} parent=1 // loop_footer_branch
      %13 = sbr.rel target = $region3
    $region8: #{tpu_custom_call.1} parent=1 // loop_exit
      _
    %5064 = vsyncpa [#allocation3], 1
    %s5065 = scalar_lea.sflag [#allocation3], 1
    %5066 = vsyncpa %s5065, 1
    %5067 = vsyncpa [#allocation4], 1
    %s5068 = scalar_lea.sflag [#allocation4], 1
    %5069 = vsyncpa %s5068, 1

</llo_original>
